<compile_context>
chip_gen: v7x
topology: tpu7x:2x2x1
jax: 0.10.0
libtpu: 0.0.40
codegen_flags: <defaults>
</compile_context>

<pallas_src>
import functools

import jax
import jax.numpy as jnp
from jax.experimental import pallas as pl
from jax.experimental.pallas import tpu as pltpu


def _round_up(x, m):
    return (x + m - 1) // m * m


# ---------------------------------------------------------------------------
# Pallas kernel: (patches @ weight) + bias, then activation.  K is a reduction
# grid axis accumulated in an f32 VMEM scratch (extent 1 at the small sizes in
# this script, engages at production channel counts, e.g. v7x / 64 MiB VMEM).
# ---------------------------------------------------------------------------
def _mm_bias_act_kernel(a_ref, w_ref, b_ref, o_ref, acc_ref, *, act):
    @pl.when(pl.program_id(1) == 0)
    def _init():
        acc_ref[...] = jnp.zeros_like(acc_ref)

    acc_ref[...] += jnp.dot(a_ref[...], w_ref[...],
                            preferred_element_type=jnp.float32)

    @pl.when(pl.program_id(1) == pl.num_programs(1) - 1)
    def _finalize():
        acc = acc_ref[...] + b_ref[...]          # per-output-channel shift
        if act == "leaky":
            acc = jnp.where(acc > 0, acc, 0.2 * acc)
        elif act == "relu":
            acc = jnp.maximum(acc, 0.0)
        elif act == "tanh":
            acc = jnp.tanh(acc)
        # act == "none": identity
        o_ref[...] = acc.astype(o_ref.dtype)


def _tile_m(M):
    """(padded M, tile): tile is a multiple of 16 (bf16 sublane granule) and,
    when the problem is large enough, gives >=2 M-blocks so both v7x
    TensorCores get work; capped at 512 rows per block."""
    if M < 32:
        Mp = _round_up(M, 16)
        return Mp, Mp
    tm = min(512, _round_up(-(-M // 2), 16))
    return _round_up(M, tm), tm


def fused_matmul_bias_act(a, w, shift, act):
    """a: (M, K) f32 patches, w: (K, N) f32 (scale already folded in),
    shift: (N,).  Returns (M, N) f32.

    The matmul runs on the MXU with bf16 operands + f32 accumulate; the output
    channel dim is padded to a multiple of 128 for lane-dense stores.
    """
    M, K = a.shape
    Nc = w.shape[1]

    # Lane-dense output: pad output channels to a multiple of 128.
    Np = _round_up(Nc, 128)
    if Np != Nc:
        w = jnp.pad(w, ((0, 0), (0, Np - Nc)))
        shift = jnp.pad(shift, (0, Np - Nc))

    # K tiling (zero-padded, so padded K contributes nothing).
    tk = K if K <= 1024 else 512
    Kp = _round_up(K, tk)
    if Kp != K:
        a = jnp.pad(a, ((0, 0), (0, Kp - K)))
        w = jnp.pad(w, ((0, Kp - K), (0, 0)))

    Mp, tm = _tile_m(M)
    if Mp != M:
        a = jnp.pad(a, ((0, Mp - M), (0, 0)))

    a_bf = a.astype(jnp.bfloat16)
    w_bf = w.astype(jnp.bfloat16)
    b2 = shift.reshape(1, Np).astype(jnp.float32)

    out = pl.pallas_call(
        functools.partial(_mm_bias_act_kernel, act=act),
        out_shape=jax.ShapeDtypeStruct((Mp, Np), jnp.float32),
        grid=(Mp // tm, Kp // tk),
        in_specs=[
            pl.BlockSpec((tm, tk), lambda i, j: (i, j)),
            pl.BlockSpec((tk, Np), lambda i, j: (j, 0)),
            pl.BlockSpec((1, Np), lambda i, j: (0, 0)),
        ],
        out_specs=pl.BlockSpec((tm, Np), lambda i, j: (i, 0)),
        scratch_shapes=[pltpu.VMEM((tm, Np), jnp.float32)],
        compiler_params=pltpu.CompilerParams(
            dimension_semantics=("parallel", "arbitrary")),
    )(a_bf, w_bf, b2)
    return out[:M, :Nc]


# ---------------------------------------------------------------------------
# Layer lowering (JAX glue is only reshapes / 2x2 patch extraction; all the
# math runs in the fused Pallas matmul above).
# ---------------------------------------------------------------------------
def _im2col_2x2(z):
    """2x2 stride-1 patches of an NHWC tensor.  K axis ordered (dy, dx, c)."""
    N, H, W, C = z.shape
    Ho, Wo = H - 1, W - 1
    taps = [z[:, dy:dy + Ho, dx:dx + Wo, :] for dy in (0, 1) for dx in (0, 1)]
    a = jnp.stack(taps, axis=3).reshape(N * Ho * Wo, 4 * C)
    return a, (N, Ho, Wo)


def conv2d_down(x, w, scale, shift, act, pad_mode):
    """4x4 / stride-2 / pad-1 Conv2d (weight layout (Cout, Cin, 4, 4)),
    computed as space-to-depth + a 2x2 stride-1 conv in one fused matmul."""
    N, H, W, C = x.shape
    Cout = w.shape[0]
    mode = "reflect" if pad_mode == "reflect" else "constant"
    xp = jnp.pad(x, ((0, 0), (1, 1), (1, 1), (0, 0)), mode=mode)
    Hp, Wp = H + 2, W + 2
    # space-to-depth(2): (N, Hp/2, Wp/2, 4C) with channel order (py, px, c)
    z = xp.reshape(N, Hp // 2, 2, Wp // 2, 2, C)
    z = jnp.transpose(z, (0, 1, 3, 2, 4, 5)).reshape(N, Hp // 2, Wp // 2, 4 * C)
    a, (n, ho, wo) = _im2col_2x2(z)
    # weight (co, ci, ky, kx) -> rows (dy, dx, py, px, ci), cols co
    w6 = w.reshape(Cout, C, 2, 2, 2, 2)                  # (co, ci, dy, py, dx, px)
    wm = jnp.transpose(w6, (2, 4, 3, 5, 1, 0)).reshape(16 * C, Cout)
    out = fused_matmul_bias_act(a, wm * scale[None, :], shift, act)
    return out.reshape(n, ho, wo, Cout)


def conv_transpose2d_up(x, w_t, scale, shift, act):
    """4x4 / stride-2 / pad-1 ConvTranspose2d (weight layout (Cin, Cout, 4, 4))
    via sub-pixel decomposition: each output phase (ry, rx) is a 2x2 stride-1
    conv of the zero-padded input with a 2x2 sub-kernel; all four phases are
    fused into one matmul with 4*Cout output columns, then interleaved."""
    N, H, W, C = x.shape
    Cout = w_t.shape[1]
    xp = jnp.pad(x, ((0, 0), (1, 1), (1, 1), (0, 0)))
    a, (n, ho, wo) = _im2col_2x2(xp)                     # ho = H+1, wo = W+1
    # Phase r / tap d uses kernel index 3 - r - 2*d.
    idx = jnp.array([[3, 1], [2, 0]], dtype=jnp.int32)   # [r, d] -> k index
    wg = w_t[:, :, idx, :][:, :, :, :, idx]              # (ci, co, ry, dy, rx, dx)
    wm = jnp.transpose(wg, (3, 5, 0, 2, 4, 1)).reshape(4 * C, 4 * Cout)
    scale4 = jnp.tile(scale, 4)
    shift4 = jnp.tile(shift, 4)
    out = fused_matmul_bias_act(a, wm * scale4[None, :], shift4, act)
    out = out.reshape(n, ho, wo, 2, 2, Cout)
    # y[:, 2q+ry, 2p+rx, :] = out[:, q+ry, p+rx, ry, rx, :]
    phases = [out[:, ry:ry + H, rx:rx + W, ry, rx, :]
              for ry in (0, 1) for rx in (0, 1)]
    ph = jnp.stack(phases, axis=0).reshape(2, 2, N, H, W, Cout)
    y = jnp.transpose(ph, (2, 3, 0, 4, 1, 5)).reshape(N, 2 * H, 2 * W, Cout)
    return y


# ---------------------------------------------------------------------------
# Parameter init (deterministic, matches the PyTorch module's shapes).
# ---------------------------------------------------------------------------
def init_params(key, im_channel=3, features=(8, 16, 32)):
    keys = iter(jax.random.split(key, 64))
    eps = 1e-5

    def conv_w(cout, cin, k=4):
        return jax.random.normal(next(keys), (cout, cin, k, k), jnp.float32) * 0.1

    def convT_w(cin, cout, k=4):
        return jax.random.normal(next(keys), (cin, cout, k, k), jnp.float32) * 0.1

    def bias(c):
        return jax.random.normal(next(keys), (c,), jnp.float32) * 0.1

    def bn_fold(c):
        gamma = jnp.ones((c,), jnp.float32)
        beta = jnp.zeros((c,), jnp.float32)
        mean = jnp.zeros((c,), jnp.float32)
        var = jnp.ones((c,), jnp.float32)
        s = gamma / jnp.sqrt(var + eps)
        return s, beta - mean * s

    params = {}
    f0 = features[0]
    params["initial"] = {"w": conv_w(f0, im_channel),
                         "scale": jnp.ones((f0,), jnp.float32),
                         "shift": bias(f0)}

    enc, in_f = [], f0
    for f in features[1:]:
        s, sh = bn_fold(f)
        enc.append({"w": conv_w(f, in_f), "scale": s, "shift": sh})
        in_f = f
    params["encoder"] = enc

    params["bottleneck"] = {"w": conv_w(in_f, in_f),
                            "scale": jnp.ones((in_f,), jnp.float32),
                            "shift": bias(in_f)}

    dec = []
    for i, f in enumerate(reversed(features)):
        in_ch = in_f * 2 if i != 0 else in_f
        s, sh = bn_fold(f)
        dec.append({"w": convT_w(in_ch, f), "scale": s, "shift": sh})
        in_f = f
    params["decoder"] = dec

    params["final"] = {"w": convT_w(in_f * 2, im_channel),
                       "scale": jnp.ones((im_channel,), jnp.float32),
                       "shift": bias(im_channel)}
    return params


# ---------------------------------------------------------------------------
# Generator forward (mirrors the PyTorch module's forward()).
# ---------------------------------------------------------------------------
def generator_forward(params, x_nchw):
    # TODO(synk): at these tiny shapes all activations fit in VMEM; fusing the
    # whole network into a single pallas_call would also remove per-call
    # dispatch overhead and the HBM round-trips of the patch matrices.
    x = jnp.transpose(x_nchw, (0, 2, 3, 1))  # NCHW -> NHWC

    p = params["initial"]
    x_init = x = conv2d_down(x, p["w"], p["scale"], p["shift"], "leaky",
                             pad_mode="reflect")

    skips = []
    for p in params["encoder"]:
        x = conv2d_down(x, p["w"], p["scale"], p["shift"], "leaky",
                        pad_mode="reflect")
        skips.append(x)
    skips = skips[::-1]

    p = params["bottleneck"]
    x = conv2d_down(x, p["w"], p["scale"], p["shift"], "relu", pad_mode="zeros")

    for i, p in enumerate(params["decoder"]):
        if i > 0:
            x = jnp.concatenate([x, skips[i - 1]], axis=-1)
        x = conv_transpose2d_up(x, p["w"], p["scale"], p["shift"], "relu")
        # TODO(synk): nn.Dropout(0.5) train-mode RNG is not reproducible here;
        # eval-mode identity is used.

    p = params["final"]
    x = jnp.concatenate([x, x_init], axis=-1)
    x = conv_transpose2d_up(x, p["w"], p["scale"], p["shift"], "tanh")

    return jnp.transpose(x, (0, 3, 1, 2))  # NHWC -> NCHW


# ---------------------------------------------------------------------------
# Pure-JAX (XLA conv) reference, used to cross-check the space-to-depth and
# sub-pixel lowerings.
# ---------------------------------------------------------------------------
def _affine_act(y, scale, shift, act):
    y = y * scale + shift
    if act == "leaky":
        return jnp.where(y > 0, y, 0.2 * y)
    if act == "relu":
        return jnp.maximum(y, 0.0)
    if act == "tanh":
        return jnp.tanh(y)
    return y


def _conv_ref(x, w, scale, shift, act, pad_mode):
    mode = "reflect" if pad_mode == "reflect" else "constant"
    xp = jnp.pad(x, ((0, 0), (1, 1), (1, 1), (0, 0)), mode=mode)
    rhs = jnp.transpose(w, (2, 3, 1, 0))                 # (kH, kW, Cin, Cout)
    y = jax.lax.conv_general_dilated(
        xp, rhs, window_strides=(2, 2), padding="VALID",
        dimension_numbers=("NHWC", "HWIO", "NHWC"))
    return _affine_act(y, scale, shift, act)


def _convT_ref(x, w_t, scale, shift, act):
    rhs = jnp.transpose(w_t[:, :, ::-1, ::-1], (2, 3, 0, 1))  # (kH, kW, Cin, Cout)
    y = jax.lax.conv_general_dilated(
        x, rhs, window_strides=(1, 1), padding=((2, 2), (2, 2)),
        lhs_dilation=(2, 2), dimension_numbers=("NHWC", "HWIO", "NHWC"))
    return _affine_act(y, scale, shift, act)


def generator_reference(params, x_nchw):
    x = jnp.transpose(x_nchw, (0, 2, 3, 1))
    p = params["initial"]
    x_init = x = _conv_ref(x, p["w"], p["scale"], p["shift"], "leaky", "reflect")
    skips = []
    for p in params["encoder"]:
        x = _conv_ref(x, p["w"], p["scale"], p["shift"], "leaky", "reflect")
        skips.append(x)
    skips = skips[::-1]
    p = params["bottleneck"]
    x = _conv_ref(x, p["w"], p["scale"], p["shift"], "relu", "zeros")
    for i, p in enumerate(params["decoder"]):
        if i > 0:
            x = jnp.concatenate([x, skips[i - 1]], axis=-1)
        x = _convT_ref(x, p["w"], p["scale"], p["shift"], "relu")
    p = params["final"]
    x = jnp.concatenate([x, x_init], axis=-1)
    x = _convT_ref(x, p["w"], p["scale"], p["shift"], "tanh")
    return jnp.transpose(x, (0, 3, 1, 2))


if __name__ == "__main__":
    key = jax.random.PRNGKey(0)
    pkey, xkey = jax.random.split(key)

    # Small config consistent with the module: im_shape=(3,16,16),
    # features=(8,16,32) -> 1x1 bottleneck, exactly like the default
    # (3,256,256) / 7-feature configuration.
    features = (8, 16, 32)
    params = init_params(pkey, im_channel=3, features=features)
    x = jax.random.normal(xkey, (2, 3, 16, 16), jnp.float32)

    fwd = jax.jit(generator_forward)
    y = fwd(params, x)
    jax.block_until_ready(y)

    assert y.shape == (2, 3, 16, 16), y.shape
    assert bool(jnp.all(jnp.isfinite(y)))
    assert bool(jnp.all(jnp.abs(y) <= 1.0))  # tanh output range

    # Cross-check the space-to-depth / sub-pixel lowering against XLA convs
    # (loose tolerance covers the bf16 MXU operand rounding).
    y_ref = jax.jit(generator_reference)(params, x)
    jax.block_until_ready(y_ref)
    err = float(jnp.max(jnp.abs(y - y_ref)))
    assert err < 5e-2, f"max abs error vs reference: {err}"

    print("KERNEL_OK")
</pallas_src>

<mosaic_0001>
module attributes {stable_mosaic.version = 11 : i64} {
  func.func @_mm_bias_act_kernel(%arg0: i32, %arg1: i32, %arg2: memref<64x48xbf16, #tpu.memory_space<vmem>>, %arg3: memref<48x128xbf16, #tpu.memory_space<vmem>>, %arg4: memref<1x128xf32, #tpu.memory_space<vmem>>, %arg5: memref<64x128xf32, #tpu.memory_space<vmem>>, %arg6: memref<64x128xf32, #tpu.memory_space<vmem>>) attributes {dimension_semantics = [#tpu.dimension_semantics<parallel>, #tpu.dimension_semantics<arbitrary>], iteration_bounds = array<i64: 2, 1>, scalar_prefetch = 0 : i64, scratch_operands = 1 : i64, tpu.core_type = #tpu.core_type<tc>, window_params = [{transform_indices = @transform_0, window_bounds = array<i64: 64, 48>}, {transform_indices = @transform_1, window_bounds = array<i64: 48, 128>}, {pipeline_mode = #tpu.pipeline_mode<synchronous>, transform_indices = @transform_2, window_bounds = array<i64: 1, 128>}, {transform_indices = @transform_3, window_bounds = array<i64: 64, 128>}]} {
    %c0_i32 = arith.constant 0 : i32
    %0 = arith.cmpi eq, %arg1, %c0_i32 : i32
    %1 = arith.extui %0 : i1 to i32
    %c0_i32_0 = arith.constant 0 : i32
    %2 = arith.cmpi ne, %1, %c0_i32_0 : i32
    scf.if %2 {
      %cst_10 = arith.constant 0.000000e+00 : f32
      %12 = vector.broadcast %cst_10 : f32 to vector<64x128xf32>
      %c0_11 = arith.constant 0 : index
      %c0_12 = arith.constant 0 : index
      %13 = vector.load %arg6[%c0_11, %c0_12] : memref<64x128xf32, #tpu.memory_space<vmem>>, vector<64x128xf32>
      tpu.vector_store %arg6[%c0_11, %c0_12], %12 {strides = array<i32>} : memref<64x128xf32, #tpu.memory_space<vmem>>, vector<64x128xf32>,
    } else {
    }
    %c0 = arith.constant 0 : index
    %c0_1 = arith.constant 0 : index
    %3 = vector.load %arg6[%c0, %c0_1] : memref<64x128xf32, #tpu.memory_space<vmem>>, vector<64x128xf32>
    %c0_2 = arith.constant 0 : index
    %c0_3 = arith.constant 0 : index
    %4 = vector.load %arg2[%c0_2, %c0_3] : memref<64x48xbf16, #tpu.memory_space<vmem>>, vector<64x48xbf16>
    %c0_4 = arith.constant 0 : index
    %c0_5 = arith.constant 0 : index
    %5 = vector.load %arg3[%c0_4, %c0_5] : memref<48x128xbf16, #tpu.memory_space<vmem>>, vector<48x128xbf16>
    %cst = arith.constant dense<0.000000e+00> : vector<64x128xf32>
    %6 = tpu.matmul %4, %5, %cst {dimension_numbers = #tpu.dot_dimension_numbers<[1], [0], [0], [1], [0, 0, 1, 1], [], []>} : vector<64x48xbf16>, vector<48x128xbf16>, vector<64x128xf32> -> vector<64x128xf32>
    %7 = arith.addf %3, %6 : vector<64x128xf32>
    %c0_6 = arith.constant 0 : index
    %c0_7 = arith.constant 0 : index
    %8 = vector.load %arg6[%c0_6, %c0_7] : memref<64x128xf32, #tpu.memory_space<vmem>>, vector<64x128xf32>
    tpu.vector_store %arg6[%c0_6, %c0_7], %7 {strides = array<i32>} : memref<64x128xf32, #tpu.memory_space<vmem>>, vector<64x128xf32>,
    %c0_i32_8 = arith.constant 0 : i32
    %9 = arith.cmpi eq, %arg1, %c0_i32_8 : i32
    %10 = arith.extui %9 : i1 to i32
    %c0_i32_9 = arith.constant 0 : i32
    %11 = arith.cmpi ne, %10, %c0_i32_9 : i32
    scf.if %11 {
      %c0_10 = arith.constant 0 : index
      %c0_11 = arith.constant 0 : index
      %12 = vector.load %arg6[%c0_10, %c0_11] : memref<64x128xf32, #tpu.memory_space<vmem>>, vector<64x128xf32>
      %c0_12 = arith.constant 0 : index
      %c0_13 = arith.constant 0 : index
      %13 = vector.load %arg4[%c0_12, %c0_13] : memref<1x128xf32, #tpu.memory_space<vmem>>, vector<1x128xf32>
      %14 = vector.broadcast %13 : vector<1x128xf32> to vector<64x128xf32>
      %15 = arith.addf %12, %14 : vector<64x128xf32>
      %cst_14 = arith.constant 0.000000e+00 : f32
      %16 = vector.broadcast %cst_14 : f32 to vector<64x128xf32>
      %17 = arith.cmpf ogt, %15, %16 : vector<64x128xf32>
      %cst_15 = arith.constant 2.000000e-01 : f32
      %18 = vector.broadcast %cst_15 : f32 to vector<64x128xf32>
      %19 = arith.mulf %18, %15 : vector<64x128xf32>
      %20 = arith.select %17, %15, %19 : vector<64x128xi1>, vector<64x128xf32>
      %c0_16 = arith.constant 0 : index
      %c0_17 = arith.constant 0 : index
      %21 = vector.load %arg5[%c0_16, %c0_17] : memref<64x128xf32, #tpu.memory_space<vmem>>, vector<64x128xf32>
      tpu.vector_store %arg5[%c0_16, %c0_17], %20 {strides = array<i32>} : memref<64x128xf32, #tpu.memory_space<vmem>>, vector<64x128xf32>,
    } else {
    }
    return
  }
  func.func @transform_0(%arg0: i32, %arg1: i32) -> (i32, i32) {
    %c0_i32 = arith.constant 0 : i32
    return %arg0, %arg1 : i32, i32
  }
  func.func @transform_1(%arg0: i32, %arg1: i32) -> (i32, i32) {
    %c0_i32 = arith.constant 0 : i32
    %c0_i32_0 = arith.constant 0 : i32
    return %arg1, %c0_i32 : i32, i32
  }
  func.func @transform_2(%arg0: i32, %arg1: i32) -> (i32, i32) {
    %c0_i32 = arith.constant 0 : i32
    %c0_i32_0 = arith.constant 0 : i32
    %c0_i32_1 = arith.constant 0 : i32
    return %c0_i32, %c0_i32_0 : i32, i32
  }
  func.func @transform_3(%arg0: i32, %arg1: i32) -> (i32, i32) {
    %c0_i32 = arith.constant 0 : i32
    %c0_i32_0 = arith.constant 0 : i32
    return %arg0, %c0_i32 : i32, i32
  }
}

module attributes {stable_mosaic.version = 11 : i64} {
  func.func @_mm_bias_act_kernel(%arg0: i32, %arg1: i32, %arg2: memref<16x128xbf16, #tpu.memory_space<vmem>>, %arg3: memref<128x128xbf16, #tpu.memory_space<vmem>>, %arg4: memref<1x128xf32, #tpu.memory_space<vmem>>, %arg5: memref<16x128xf32, #tpu.memory_space<vmem>>, %arg6: memref<16x128xf32, #tpu.memory_space<vmem>>) attributes {dimension_semantics = [#tpu.dimension_semantics<parallel>, #tpu.dimension_semantics<arbitrary>], iteration_bounds = array<i64: 2, 1>, scalar_prefetch = 0 : i64, scratch_operands = 1 : i64, tpu.core_type = #tpu.core_type<tc>, window_params = [{transform_indices = @transform_0, window_bounds = array<i64: 16, 128>}, {transform_indices = @transform_1, window_bounds = array<i64: 128, 128>}, {pipeline_mode = #tpu.pipeline_mode<synchronous>, transform_indices = @transform_2, window_bounds = array<i64: 1, 128>}, {transform_indices = @transform_3, window_bounds = array<i64: 16, 128>}]} {
    %c0_i32 = arith.constant 0 : i32
    %0 = arith.cmpi eq, %arg1, %c0_i32 : i32
    %1 = arith.extui %0 : i1 to i32
    %c0_i32_0 = arith.constant 0 : i32
    %2 = arith.cmpi ne, %1, %c0_i32_0 : i32
    scf.if %2 {
      %cst_10 = arith.constant 0.000000e+00 : f32
      %12 = vector.broadcast %cst_10 : f32 to vector<16x128xf32>
      %c0_11 = arith.constant 0 : index
      %c0_12 = arith.constant 0 : index
      %13 = vector.load %arg6[%c0_11, %c0_12] : memref<16x128xf32, #tpu.memory_space<vmem>>, vector<16x128xf32>
      tpu.vector_store %arg6[%c0_11, %c0_12], %12 {strides = array<i32>} : memref<16x128xf32, #tpu.memory_space<vmem>>, vector<16x128xf32>,
    } else {
    }
    %c0 = arith.constant 0 : index
    %c0_1 = arith.constant 0 : index
    %3 = vector.load %arg6[%c0, %c0_1] : memref<16x128xf32, #tpu.memory_space<vmem>>, vector<16x128xf32>
    %c0_2 = arith.constant 0 : index
    %c0_3 = arith.constant 0 : index
    %4 = vector.load %arg2[%c0_2, %c0_3] : memref<16x128xbf16, #tpu.memory_space<vmem>>, vector<16x128xbf16>
    %c0_4 = arith.constant 0 : index
    %c0_5 = arith.constant 0 : index
    %5 = vector.load %arg3[%c0_4, %c0_5] : memref<128x128xbf16, #tpu.memory_space<vmem>>, vector<128x128xbf16>
    %cst = arith.constant dense<0.000000e+00> : vector<16x128xf32>
    %6 = tpu.matmul %4, %5, %cst {dimension_numbers = #tpu.dot_dimension_numbers<[1], [0], [0], [1], [0, 0, 1, 1], [], []>} : vector<16x128xbf16>, vector<128x128xbf16>, vector<16x128xf32> -> vector<16x128xf32>
    %7 = arith.addf %3, %6 : vector<16x128xf32>
    %c0_6 = arith.constant 0 : index
    %c0_7 = arith.constant 0 : index
    %8 = vector.load %arg6[%c0_6, %c0_7] : memref<16x128xf32, #tpu.memory_space<vmem>>, vector<16x128xf32>
    tpu.vector_store %arg6[%c0_6, %c0_7], %7 {strides = array<i32>} : memref<16x128xf32, #tpu.memory_space<vmem>>, vector<16x128xf32>,
    %c0_i32_8 = arith.constant 0 : i32
    %9 = arith.cmpi eq, %arg1, %c0_i32_8 : i32
    %10 = arith.extui %9 : i1 to i32
    %c0_i32_9 = arith.constant 0 : i32
    %11 = arith.cmpi ne, %10, %c0_i32_9 : i32
    scf.if %11 {
      %c0_10 = arith.constant 0 : index
      %c0_11 = arith.constant 0 : index
      %12 = vector.load %arg6[%c0_10, %c0_11] : memref<16x128xf32, #tpu.memory_space<vmem>>, vector<16x128xf32>
      %c0_12 = arith.constant 0 : index
      %c0_13 = arith.constant 0 : index
      %13 = vector.load %arg4[%c0_12, %c0_13] : memref<1x128xf32, #tpu.memory_space<vmem>>, vector<1x128xf32>
      %14 = vector.broadcast %13 : vector<1x128xf32> to vector<16x128xf32>
      %15 = arith.addf %12, %14 : vector<16x128xf32>
      %cst_14 = arith.constant 0.000000e+00 : f32
      %16 = vector.broadcast %cst_14 : f32 to vector<16x128xf32>
      %17 = arith.cmpf ogt, %15, %16 : vector<16x128xf32>
      %cst_15 = arith.constant 2.000000e-01 : f32
      %18 = vector.broadcast %cst_15 : f32 to vector<16x128xf32>
      %19 = arith.mulf %18, %15 : vector<16x128xf32>
      %20 = arith.select %17, %15, %19 : vector<16x128xi1>, vector<16x128xf32>
      %c0_16 = arith.constant 0 : index
      %c0_17 = arith.constant 0 : index
      %21 = vector.load %arg5[%c0_16, %c0_17] : memref<16x128xf32, #tpu.memory_space<vmem>>, vector<16x128xf32>
      tpu.vector_store %arg5[%c0_16, %c0_17], %20 {strides = array<i32>} : memref<16x128xf32, #tpu.memory_space<vmem>>, vector<16x128xf32>,
    } else {
    }
    return
  }
  func.func @transform_0(%arg0: i32, %arg1: i32) -> (i32, i32) {
    %c0_i32 = arith.constant 0 : i32
    return %arg0, %arg1 : i32, i32
  }
  func.func @transform_1(%arg0: i32, %arg1: i32) -> (i32, i32) {
    %c0_i32 = arith.constant 0 : i32
    %c0_i32_0 = arith.constant 0 : i32
    return %arg1, %c0_i32 : i32, i32
  }
  func.func @transform_2(%arg0: i32, %arg1: i32) -> (i32, i32) {
    %c0_i32 = arith.constant 0 : i32
    %c0_i32_0 = arith.constant 0 : i32
    %c0_i32_1 = arith.constant 0 : i32
    return %c0_i32, %c0_i32_0 : i32, i32
  }
  func.func @transform_3(%arg0: i32, %arg1: i32) -> (i32, i32) {
    %c0_i32 = arith.constant 0 : i32
    %c0_i32_0 = arith.constant 0 : i32
    return %arg0, %c0_i32 : i32, i32
  }
}

module attributes {stable_mosaic.version = 11 : i64} {
  func.func @_mm_bias_act_kernel(%arg0: i32, %arg1: i32, %arg2: memref<16x256xbf16, #tpu.memory_space<vmem>>, %arg3: memref<256x128xbf16, #tpu.memory_space<vmem>>, %arg4: memref<1x128xf32, #tpu.memory_space<vmem>>, %arg5: memref<16x128xf32, #tpu.memory_space<vmem>>, %arg6: memref<16x128xf32, #tpu.memory_space<vmem>>) attributes {dimension_semantics = [#tpu.dimension_semantics<parallel>, #tpu.dimension_semantics<arbitrary>], iteration_bounds = array<i64: 1, 1>, scalar_prefetch = 0 : i64, scratch_operands = 1 : i64, tpu.core_type = #tpu.core_type<tc>, window_params = [{transform_indices = @transform_0, window_bounds = array<i64: 16, 256>}, {transform_indices = @transform_1, window_bounds = array<i64: 256, 128>}, {pipeline_mode = #tpu.pipeline_mode<synchronous>, transform_indices = @transform_2, window_bounds = array<i64: 1, 128>}, {transform_indices = @transform_3, window_bounds = array<i64: 16, 128>}]} {
    %c0_i32 = arith.constant 0 : i32
    %0 = arith.cmpi eq, %arg1, %c0_i32 : i32
    %1 = arith.extui %0 : i1 to i32
    %c0_i32_0 = arith.constant 0 : i32
    %2 = arith.cmpi ne, %1, %c0_i32_0 : i32
    scf.if %2 {
      %cst_10 = arith.constant 0.000000e+00 : f32
      %12 = vector.broadcast %cst_10 : f32 to vector<16x128xf32>
      %c0_11 = arith.constant 0 : index
      %c0_12 = arith.constant 0 : index
      %13 = vector.load %arg6[%c0_11, %c0_12] : memref<16x128xf32, #tpu.memory_space<vmem>>, vector<16x128xf32>
      tpu.vector_store %arg6[%c0_11, %c0_12], %12 {strides = array<i32>} : memref<16x128xf32, #tpu.memory_space<vmem>>, vector<16x128xf32>,
    } else {
    }
    %c0 = arith.constant 0 : index
    %c0_1 = arith.constant 0 : index
    %3 = vector.load %arg6[%c0, %c0_1] : memref<16x128xf32, #tpu.memory_space<vmem>>, vector<16x128xf32>
    %c0_2 = arith.constant 0 : index
    %c0_3 = arith.constant 0 : index
    %4 = vector.load %arg2[%c0_2, %c0_3] : memref<16x256xbf16, #tpu.memory_space<vmem>>, vector<16x256xbf16>
    %c0_4 = arith.constant 0 : index
    %c0_5 = arith.constant 0 : index
    %5 = vector.load %arg3[%c0_4, %c0_5] : memref<256x128xbf16, #tpu.memory_space<vmem>>, vector<256x128xbf16>
    %cst = arith.constant dense<0.000000e+00> : vector<16x128xf32>
    %6 = tpu.matmul %4, %5, %cst {dimension_numbers = #tpu.dot_dimension_numbers<[1], [0], [0], [1], [0, 0, 1, 1], [], []>} : vector<16x256xbf16>, vector<256x128xbf16>, vector<16x128xf32> -> vector<16x128xf32>
    %7 = arith.addf %3, %6 : vector<16x128xf32>
    %c0_6 = arith.constant 0 : index
    %c0_7 = arith.constant 0 : index
    %8 = vector.load %arg6[%c0_6, %c0_7] : memref<16x128xf32, #tpu.memory_space<vmem>>, vector<16x128xf32>
    tpu.vector_store %arg6[%c0_6, %c0_7], %7 {strides = array<i32>} : memref<16x128xf32, #tpu.memory_space<vmem>>, vector<16x128xf32>,
    %c0_i32_8 = arith.constant 0 : i32
    %9 = arith.cmpi eq, %arg1, %c0_i32_8 : i32
    %10 = arith.extui %9 : i1 to i32
    %c0_i32_9 = arith.constant 0 : i32
    %11 = arith.cmpi ne, %10, %c0_i32_9 : i32
    scf.if %11 {
      %c0_10 = arith.constant 0 : index
      %c0_11 = arith.constant 0 : index
      %12 = vector.load %arg6[%c0_10, %c0_11] : memref<16x128xf32, #tpu.memory_space<vmem>>, vector<16x128xf32>
      %c0_12 = arith.constant 0 : index
      %c0_13 = arith.constant 0 : index
      %13 = vector.load %arg4[%c0_12, %c0_13] : memref<1x128xf32, #tpu.memory_space<vmem>>, vector<1x128xf32>
      %14 = vector.broadcast %13 : vector<1x128xf32> to vector<16x128xf32>
      %15 = arith.addf %12, %14 : vector<16x128xf32>
      %cst_14 = arith.constant 0.000000e+00 : f32
      %16 = vector.broadcast %cst_14 : f32 to vector<16x128xf32>
      %17 = arith.cmpf ogt, %15, %16 : vector<16x128xf32>
      %cst_15 = arith.constant 2.000000e-01 : f32
      %18 = vector.broadcast %cst_15 : f32 to vector<16x128xf32>
      %19 = arith.mulf %18, %15 : vector<16x128xf32>
      %20 = arith.select %17, %15, %19 : vector<16x128xi1>, vector<16x128xf32>
      %c0_16 = arith.constant 0 : index
      %c0_17 = arith.constant 0 : index
      %21 = vector.load %arg5[%c0_16, %c0_17] : memref<16x128xf32, #tpu.memory_space<vmem>>, vector<16x128xf32>
      tpu.vector_store %arg5[%c0_16, %c0_17], %20 {strides = array<i32>} : memref<16x128xf32, #tpu.memory_space<vmem>>, vector<16x128xf32>,
    } else {
    }
    return
  }
  func.func @transform_0(%arg0: i32, %arg1: i32) -> (i32, i32) {
    %c0_i32 = arith.constant 0 : i32
    return %arg0, %arg1 : i32, i32
  }
  func.func @transform_1(%arg0: i32, %arg1: i32) -> (i32, i32) {
    %c0_i32 = arith.constant 0 : i32
    %c0_i32_0 = arith.constant 0 : i32
    return %arg1, %c0_i32 : i32, i32
  }
  func.func @transform_2(%arg0: i32, %arg1: i32) -> (i32, i32) {
    %c0_i32 = arith.constant 0 : i32
    %c0_i32_0 = arith.constant 0 : i32
    %c0_i32_1 = arith.constant 0 : i32
    return %c0_i32, %c0_i32_0 : i32, i32
  }
  func.func @transform_3(%arg0: i32, %arg1: i32) -> (i32, i32) {
    %c0_i32 = arith.constant 0 : i32
    %c0_i32_0 = arith.constant 0 : i32
    return %arg0, %c0_i32 : i32, i32
  }
}

module attributes {stable_mosaic.version = 11 : i64} {
  func.func @_mm_bias_act_kernel(%arg0: i32, %arg1: i32, %arg2: memref<16x512xbf16, #tpu.memory_space<vmem>>, %arg3: memref<512x128xbf16, #tpu.memory_space<vmem>>, %arg4: memref<1x128xf32, #tpu.memory_space<vmem>>, %arg5: memref<16x128xf32, #tpu.memory_space<vmem>>, %arg6: memref<16x128xf32, #tpu.memory_space<vmem>>) attributes {dimension_semantics = [#tpu.dimension_semantics<parallel>, #tpu.dimension_semantics<arbitrary>], iteration_bounds = array<i64: 1, 1>, scalar_prefetch = 0 : i64, scratch_operands = 1 : i64, tpu.core_type = #tpu.core_type<tc>, window_params = [{transform_indices = @transform_0, window_bounds = array<i64: 16, 512>}, {transform_indices = @transform_1, window_bounds = array<i64: 512, 128>}, {pipeline_mode = #tpu.pipeline_mode<synchronous>, transform_indices = @transform_2, window_bounds = array<i64: 1, 128>}, {transform_indices = @transform_3, window_bounds = array<i64: 16, 128>}]} {
    %c0_i32 = arith.constant 0 : i32
    %0 = arith.cmpi eq, %arg1, %c0_i32 : i32
    %1 = arith.extui %0 : i1 to i32
    %c0_i32_0 = arith.constant 0 : i32
    %2 = arith.cmpi ne, %1, %c0_i32_0 : i32
    scf.if %2 {
      %cst_10 = arith.constant 0.000000e+00 : f32
      %12 = vector.broadcast %cst_10 : f32 to vector<16x128xf32>
      %c0_11 = arith.constant 0 : index
      %c0_12 = arith.constant 0 : index
      %13 = vector.load %arg6[%c0_11, %c0_12] : memref<16x128xf32, #tpu.memory_space<vmem>>, vector<16x128xf32>
      tpu.vector_store %arg6[%c0_11, %c0_12], %12 {strides = array<i32>} : memref<16x128xf32, #tpu.memory_space<vmem>>, vector<16x128xf32>,
    } else {
    }
    %c0 = arith.constant 0 : index
    %c0_1 = arith.constant 0 : index
    %3 = vector.load %arg6[%c0, %c0_1] : memref<16x128xf32, #tpu.memory_space<vmem>>, vector<16x128xf32>
    %c0_2 = arith.constant 0 : index
    %c0_3 = arith.constant 0 : index
    %4 = vector.load %arg2[%c0_2, %c0_3] : memref<16x512xbf16, #tpu.memory_space<vmem>>, vector<16x512xbf16>
    %c0_4 = arith.constant 0 : index
    %c0_5 = arith.constant 0 : index
    %5 = vector.load %arg3[%c0_4, %c0_5] : memref<512x128xbf16, #tpu.memory_space<vmem>>, vector<512x128xbf16>
    %cst = arith.constant dense<0.000000e+00> : vector<16x128xf32>
    %6 = tpu.matmul %4, %5, %cst {dimension_numbers = #tpu.dot_dimension_numbers<[1], [0], [0], [1], [0, 0, 1, 1], [], []>} : vector<16x512xbf16>, vector<512x128xbf16>, vector<16x128xf32> -> vector<16x128xf32>
    %7 = arith.addf %3, %6 : vector<16x128xf32>
    %c0_6 = arith.constant 0 : index
    %c0_7 = arith.constant 0 : index
    %8 = vector.load %arg6[%c0_6, %c0_7] : memref<16x128xf32, #tpu.memory_space<vmem>>, vector<16x128xf32>
    tpu.vector_store %arg6[%c0_6, %c0_7], %7 {strides = array<i32>} : memref<16x128xf32, #tpu.memory_space<vmem>>, vector<16x128xf32>,
    %c0_i32_8 = arith.constant 0 : i32
    %9 = arith.cmpi eq, %arg1, %c0_i32_8 : i32
    %10 = arith.extui %9 : i1 to i32
    %c0_i32_9 = arith.constant 0 : i32
    %11 = arith.cmpi ne, %10, %c0_i32_9 : i32
    scf.if %11 {
      %c0_10 = arith.constant 0 : index
      %c0_11 = arith.constant 0 : index
      %12 = vector.load %arg6[%c0_10, %c0_11] : memref<16x128xf32, #tpu.memory_space<vmem>>, vector<16x128xf32>
      %c0_12 = arith.constant 0 : index
      %c0_13 = arith.constant 0 : index
      %13 = vector.load %arg4[%c0_12, %c0_13] : memref<1x128xf32, #tpu.memory_space<vmem>>, vector<1x128xf32>
      %14 = vector.broadcast %13 : vector<1x128xf32> to vector<16x128xf32>
      %15 = arith.addf %12, %14 : vector<16x128xf32>
      %cst_14 = arith.constant 0.000000e+00 : f32
      %16 = vector.broadcast %cst_14 : f32 to vector<16x128xf32>
      %17 = arith.maximumf %15, %16 : vector<16x128xf32>
      %c0_15 = arith.constant 0 : index
      %c0_16 = arith.constant 0 : index
      %18 = vector.load %arg5[%c0_15, %c0_16] : memref<16x128xf32, #tpu.memory_space<vmem>>, vector<16x128xf32>
      tpu.vector_store %arg5[%c0_15, %c0_16], %17 {strides = array<i32>} : memref<16x128xf32, #tpu.memory_space<vmem>>, vector<16x128xf32>,
    } else {
    }
    return
  }
  func.func @transform_0(%arg0: i32, %arg1: i32) -> (i32, i32) {
    %c0_i32 = arith.constant 0 : i32
    return %arg0, %arg1 : i32, i32
  }
  func.func @transform_1(%arg0: i32, %arg1: i32) -> (i32, i32) {
    %c0_i32 = arith.constant 0 : i32
    %c0_i32_0 = arith.constant 0 : i32
    return %arg1, %c0_i32 : i32, i32
  }
  func.func @transform_2(%arg0: i32, %arg1: i32) -> (i32, i32) {
    %c0_i32 = arith.constant 0 : i32
    %c0_i32_0 = arith.constant 0 : i32
    %c0_i32_1 = arith.constant 0 : i32
    return %c0_i32, %c0_i32_0 : i32, i32
  }
  func.func @transform_3(%arg0: i32, %arg1: i32) -> (i32, i32) {
    %c0_i32 = arith.constant 0 : i32
    %c0_i32_0 = arith.constant 0 : i32
    return %arg0, %c0_i32 : i32, i32
  }
}

module attributes {stable_mosaic.version = 11 : i64} {
  func.func @_mm_bias_act_kernel(%arg0: i32, %arg1: i32, %arg2: memref<16x128xbf16, #tpu.memory_space<vmem>>, %arg3: memref<128x128xbf16, #tpu.memory_space<vmem>>, %arg4: memref<1x128xf32, #tpu.memory_space<vmem>>, %arg5: memref<16x128xf32, #tpu.memory_space<vmem>>, %arg6: memref<16x128xf32, #tpu.memory_space<vmem>>) attributes {dimension_semantics = [#tpu.dimension_semantics<parallel>, #tpu.dimension_semantics<arbitrary>], iteration_bounds = array<i64: 1, 1>, scalar_prefetch = 0 : i64, scratch_operands = 1 : i64, tpu.core_type = #tpu.core_type<tc>, window_params = [{transform_indices = @transform_0, window_bounds = array<i64: 16, 128>}, {transform_indices = @transform_1, window_bounds = array<i64: 128, 128>}, {pipeline_mode = #tpu.pipeline_mode<synchronous>, transform_indices = @transform_2, window_bounds = array<i64: 1, 128>}, {transform_indices = @transform_3, window_bounds = array<i64: 16, 128>}]} {
    %c0_i32 = arith.constant 0 : i32
    %0 = arith.cmpi eq, %arg1, %c0_i32 : i32
    %1 = arith.extui %0 : i1 to i32
    %c0_i32_0 = arith.constant 0 : i32
    %2 = arith.cmpi ne, %1, %c0_i32_0 : i32
    scf.if %2 {
      %cst_10 = arith.constant 0.000000e+00 : f32
      %12 = vector.broadcast %cst_10 : f32 to vector<16x128xf32>
      %c0_11 = arith.constant 0 : index
      %c0_12 = arith.constant 0 : index
      %13 = vector.load %arg6[%c0_11, %c0_12] : memref<16x128xf32, #tpu.memory_space<vmem>>, vector<16x128xf32>
      tpu.vector_store %arg6[%c0_11, %c0_12], %12 {strides = array<i32>} : memref<16x128xf32, #tpu.memory_space<vmem>>, vector<16x128xf32>,
    } else {
    }
    %c0 = arith.constant 0 : index
    %c0_1 = arith.constant 0 : index
    %3 = vector.load %arg6[%c0, %c0_1] : memref<16x128xf32, #tpu.memory_space<vmem>>, vector<16x128xf32>
    %c0_2 = arith.constant 0 : index
    %c0_3 = arith.constant 0 : index
    %4 = vector.load %arg2[%c0_2, %c0_3] : memref<16x128xbf16, #tpu.memory_space<vmem>>, vector<16x128xbf16>
    %c0_4 = arith.constant 0 : index
    %c0_5 = arith.constant 0 : index
    %5 = vector.load %arg3[%c0_4, %c0_5] : memref<128x128xbf16, #tpu.memory_space<vmem>>, vector<128x128xbf16>
    %cst = arith.constant dense<0.000000e+00> : vector<16x128xf32>
    %6 = tpu.matmul %4, %5, %cst {dimension_numbers = #tpu.dot_dimension_numbers<[1], [0], [0], [1], [0, 0, 1, 1], [], []>} : vector<16x128xbf16>, vector<128x128xbf16>, vector<16x128xf32> -> vector<16x128xf32>
    %7 = arith.addf %3, %6 : vector<16x128xf32>
    %c0_6 = arith.constant 0 : index
    %c0_7 = arith.constant 0 : index
    %8 = vector.load %arg6[%c0_6, %c0_7] : memref<16x128xf32, #tpu.memory_space<vmem>>, vector<16x128xf32>
    tpu.vector_store %arg6[%c0_6, %c0_7], %7 {strides = array<i32>} : memref<16x128xf32, #tpu.memory_space<vmem>>, vector<16x128xf32>,
    %c0_i32_8 = arith.constant 0 : i32
    %9 = arith.cmpi eq, %arg1, %c0_i32_8 : i32
    %10 = arith.extui %9 : i1 to i32
    %c0_i32_9 = arith.constant 0 : i32
    %11 = arith.cmpi ne, %10, %c0_i32_9 : i32
    scf.if %11 {
      %c0_10 = arith.constant 0 : index
      %c0_11 = arith.constant 0 : index
      %12 = vector.load %arg6[%c0_10, %c0_11] : memref<16x128xf32, #tpu.memory_space<vmem>>, vector<16x128xf32>
      %c0_12 = arith.constant 0 : index
      %c0_13 = arith.constant 0 : index
      %13 = vector.load %arg4[%c0_12, %c0_13] : memref<1x128xf32, #tpu.memory_space<vmem>>, vector<1x128xf32>
      %14 = vector.broadcast %13 : vector<1x128xf32> to vector<16x128xf32>
      %15 = arith.addf %12, %14 : vector<16x128xf32>
      %cst_14 = arith.constant 0.000000e+00 : f32
      %16 = vector.broadcast %cst_14 : f32 to vector<16x128xf32>
      %17 = arith.maximumf %15, %16 : vector<16x128xf32>
      %c0_15 = arith.constant 0 : index
      %c0_16 = arith.constant 0 : index
      %18 = vector.load %arg5[%c0_15, %c0_16] : memref<16x128xf32, #tpu.memory_space<vmem>>, vector<16x128xf32>
      tpu.vector_store %arg5[%c0_15, %c0_16], %17 {strides = array<i32>} : memref<16x128xf32, #tpu.memory_space<vmem>>, vector<16x128xf32>,
    } else {
    }
    return
  }
  func.func @transform_0(%arg0: i32, %arg1: i32) -> (i32, i32) {
    %c0_i32 = arith.constant 0 : i32
    return %arg0, %arg1 : i32, i32
  }
  func.func @transform_1(%arg0: i32, %arg1: i32) -> (i32, i32) {
    %c0_i32 = arith.constant 0 : i32
    %c0_i32_0 = arith.constant 0 : i32
    return %arg1, %c0_i32 : i32, i32
  }
  func.func @transform_2(%arg0: i32, %arg1: i32) -> (i32, i32) {
    %c0_i32 = arith.constant 0 : i32
    %c0_i32_0 = arith.constant 0 : i32
    %c0_i32_1 = arith.constant 0 : i32
    return %c0_i32, %c0_i32_0 : i32, i32
  }
  func.func @transform_3(%arg0: i32, %arg1: i32) -> (i32, i32) {
    %c0_i32 = arith.constant 0 : i32
    %c0_i32_0 = arith.constant 0 : i32
    return %arg0, %c0_i32 : i32, i32
  }
}

module attributes {stable_mosaic.version = 11 : i64} {
  func.func @_mm_bias_act_kernel(%arg0: i32, %arg1: i32, %arg2: memref<32x256xbf16, #tpu.memory_space<vmem>>, %arg3: memref<256x128xbf16, #tpu.memory_space<vmem>>, %arg4: memref<1x128xf32, #tpu.memory_space<vmem>>, %arg5: memref<32x128xf32, #tpu.memory_space<vmem>>, %arg6: memref<32x128xf32, #tpu.memory_space<vmem>>) attributes {dimension_semantics = [#tpu.dimension_semantics<parallel>, #tpu.dimension_semantics<arbitrary>], iteration_bounds = array<i64: 1, 1>, scalar_prefetch = 0 : i64, scratch_operands = 1 : i64, tpu.core_type = #tpu.core_type<tc>, window_params = [{transform_indices = @transform_0, window_bounds = array<i64: 32, 256>}, {transform_indices = @transform_1, window_bounds = array<i64: 256, 128>}, {pipeline_mode = #tpu.pipeline_mode<synchronous>, transform_indices = @transform_2, window_bounds = array<i64: 1, 128>}, {transform_indices = @transform_3, window_bounds = array<i64: 32, 128>}]} {
    %c0_i32 = arith.constant 0 : i32
    %0 = arith.cmpi eq, %arg1, %c0_i32 : i32
    %1 = arith.extui %0 : i1 to i32
    %c0_i32_0 = arith.constant 0 : i32
    %2 = arith.cmpi ne, %1, %c0_i32_0 : i32
    scf.if %2 {
      %cst_10 = arith.constant 0.000000e+00 : f32
      %12 = vector.broadcast %cst_10 : f32 to vector<32x128xf32>
      %c0_11 = arith.constant 0 : index
      %c0_12 = arith.constant 0 : index
      %13 = vector.load %arg6[%c0_11, %c0_12] : memref<32x128xf32, #tpu.memory_space<vmem>>, vector<32x128xf32>
      tpu.vector_store %arg6[%c0_11, %c0_12], %12 {strides = array<i32>} : memref<32x128xf32, #tpu.memory_space<vmem>>, vector<32x128xf32>,
    } else {
    }
    %c0 = arith.constant 0 : index
    %c0_1 = arith.constant 0 : index
    %3 = vector.load %arg6[%c0, %c0_1] : memref<32x128xf32, #tpu.memory_space<vmem>>, vector<32x128xf32>
    %c0_2 = arith.constant 0 : index
    %c0_3 = arith.constant 0 : index
    %4 = vector.load %arg2[%c0_2, %c0_3] : memref<32x256xbf16, #tpu.memory_space<vmem>>, vector<32x256xbf16>
    %c0_4 = arith.constant 0 : index
    %c0_5 = arith.constant 0 : index
    %5 = vector.load %arg3[%c0_4, %c0_5] : memref<256x128xbf16, #tpu.memory_space<vmem>>, vector<256x128xbf16>
    %cst = arith.constant dense<0.000000e+00> : vector<32x128xf32>
    %6 = tpu.matmul %4, %5, %cst {dimension_numbers = #tpu.dot_dimension_numbers<[1], [0], [0], [1], [0, 0, 1, 1], [], []>} : vector<32x256xbf16>, vector<256x128xbf16>, vector<32x128xf32> -> vector<32x128xf32>
    %7 = arith.addf %3, %6 : vector<32x128xf32>
    %c0_6 = arith.constant 0 : index
    %c0_7 = arith.constant 0 : index
    %8 = vector.load %arg6[%c0_6, %c0_7] : memref<32x128xf32, #tpu.memory_space<vmem>>, vector<32x128xf32>
    tpu.vector_store %arg6[%c0_6, %c0_7], %7 {strides = array<i32>} : memref<32x128xf32, #tpu.memory_space<vmem>>, vector<32x128xf32>,
    %c0_i32_8 = arith.constant 0 : i32
    %9 = arith.cmpi eq, %arg1, %c0_i32_8 : i32
    %10 = arith.extui %9 : i1 to i32
    %c0_i32_9 = arith.constant 0 : i32
    %11 = arith.cmpi ne, %10, %c0_i32_9 : i32
    scf.if %11 {
      %c0_10 = arith.constant 0 : index
      %c0_11 = arith.constant 0 : index
      %12 = vector.load %arg6[%c0_10, %c0_11] : memref<32x128xf32, #tpu.memory_space<vmem>>, vector<32x128xf32>
      %c0_12 = arith.constant 0 : index
      %c0_13 = arith.constant 0 : index
      %13 = vector.load %arg4[%c0_12, %c0_13] : memref<1x128xf32, #tpu.memory_space<vmem>>, vector<1x128xf32>
      %14 = vector.broadcast %13 : vector<1x128xf32> to vector<32x128xf32>
      %15 = arith.addf %12, %14 : vector<32x128xf32>
      %cst_14 = arith.constant 0.000000e+00 : f32
      %16 = vector.broadcast %cst_14 : f32 to vector<32x128xf32>
      %17 = arith.maximumf %15, %16 : vector<32x128xf32>
      %c0_15 = arith.constant 0 : index
      %c0_16 = arith.constant 0 : index
      %18 = vector.load %arg5[%c0_15, %c0_16] : memref<32x128xf32, #tpu.memory_space<vmem>>, vector<32x128xf32>
      tpu.vector_store %arg5[%c0_15, %c0_16], %17 {strides = array<i32>} : memref<32x128xf32, #tpu.memory_space<vmem>>, vector<32x128xf32>,
    } else {
    }
    return
  }
  func.func @transform_0(%arg0: i32, %arg1: i32) -> (i32, i32) {
    %c0_i32 = arith.constant 0 : i32
    return %arg0, %arg1 : i32, i32
  }
  func.func @transform_1(%arg0: i32, %arg1: i32) -> (i32, i32) {
    %c0_i32 = arith.constant 0 : i32
    %c0_i32_0 = arith.constant 0 : i32
    return %arg1, %c0_i32 : i32, i32
  }
  func.func @transform_2(%arg0: i32, %arg1: i32) -> (i32, i32) {
    %c0_i32 = arith.constant 0 : i32
    %c0_i32_0 = arith.constant 0 : i32
    %c0_i32_1 = arith.constant 0 : i32
    return %c0_i32, %c0_i32_0 : i32, i32
  }
  func.func @transform_3(%arg0: i32, %arg1: i32) -> (i32, i32) {
    %c0_i32 = arith.constant 0 : i32
    %c0_i32_0 = arith.constant 0 : i32
    return %arg0, %c0_i32 : i32, i32
  }
}

module attributes {stable_mosaic.version = 11 : i64} {
  func.func @_mm_bias_act_kernel(%arg0: i32, %arg1: i32, %arg2: memref<32x128xbf16, #tpu.memory_space<vmem>>, %arg3: memref<128x128xbf16, #tpu.memory_space<vmem>>, %arg4: memref<1x128xf32, #tpu.memory_space<vmem>>, %arg5: memref<32x128xf32, #tpu.memory_space<vmem>>, %arg6: memref<32x128xf32, #tpu.memory_space<vmem>>) attributes {dimension_semantics = [#tpu.dimension_semantics<parallel>, #tpu.dimension_semantics<arbitrary>], iteration_bounds = array<i64: 2, 1>, scalar_prefetch = 0 : i64, scratch_operands = 1 : i64, tpu.core_type = #tpu.core_type<tc>, window_params = [{transform_indices = @transform_0, window_bounds = array<i64: 32, 128>}, {transform_indices = @transform_1, window_bounds = array<i64: 128, 128>}, {pipeline_mode = #tpu.pipeline_mode<synchronous>, transform_indices = @transform_2, window_bounds = array<i64: 1, 128>}, {transform_indices = @transform_3, window_bounds = array<i64: 32, 128>}]} {
    %c0_i32 = arith.constant 0 : i32
    %0 = arith.cmpi eq, %arg1, %c0_i32 : i32
    %1 = arith.extui %0 : i1 to i32
    %c0_i32_0 = arith.constant 0 : i32
    %2 = arith.cmpi ne, %1, %c0_i32_0 : i32
    scf.if %2 {
      %cst_10 = arith.constant 0.000000e+00 : f32
      %12 = vector.broadcast %cst_10 : f32 to vector<32x128xf32>
      %c0_11 = arith.constant 0 : index
      %c0_12 = arith.constant 0 : index
      %13 = vector.load %arg6[%c0_11, %c0_12] : memref<32x128xf32, #tpu.memory_space<vmem>>, vector<32x128xf32>
      tpu.vector_store %arg6[%c0_11, %c0_12], %12 {strides = array<i32>} : memref<32x128xf32, #tpu.memory_space<vmem>>, vector<32x128xf32>,
    } else {
    }
    %c0 = arith.constant 0 : index
    %c0_1 = arith.constant 0 : index
    %3 = vector.load %arg6[%c0, %c0_1] : memref<32x128xf32, #tpu.memory_space<vmem>>, vector<32x128xf32>
    %c0_2 = arith.constant 0 : index
    %c0_3 = arith.constant 0 : index
    %4 = vector.load %arg2[%c0_2, %c0_3] : memref<32x128xbf16, #tpu.memory_space<vmem>>, vector<32x128xbf16>
    %c0_4 = arith.constant 0 : index
    %c0_5 = arith.constant 0 : index
    %5 = vector.load %arg3[%c0_4, %c0_5] : memref<128x128xbf16, #tpu.memory_space<vmem>>, vector<128x128xbf16>
    %cst = arith.constant dense<0.000000e+00> : vector<32x128xf32>
    %6 = tpu.matmul %4, %5, %cst {dimension_numbers = #tpu.dot_dimension_numbers<[1], [0], [0], [1], [0, 0, 1, 1], [], []>} : vector<32x128xbf16>, vector<128x128xbf16>, vector<32x128xf32> -> vector<32x128xf32>
    %7 = arith.addf %3, %6 : vector<32x128xf32>
    %c0_6 = arith.constant 0 : index
    %c0_7 = arith.constant 0 : index
    %8 = vector.load %arg6[%c0_6, %c0_7] : memref<32x128xf32, #tpu.memory_space<vmem>>, vector<32x128xf32>
    tpu.vector_store %arg6[%c0_6, %c0_7], %7 {strides = array<i32>} : memref<32x128xf32, #tpu.memory_space<vmem>>, vector<32x128xf32>,
    %c0_i32_8 = arith.constant 0 : i32
    %9 = arith.cmpi eq, %arg1, %c0_i32_8 : i32
    %10 = arith.extui %9 : i1 to i32
    %c0_i32_9 = arith.constant 0 : i32
    %11 = arith.cmpi ne, %10, %c0_i32_9 : i32
    scf.if %11 {
      %c0_10 = arith.constant 0 : index
      %c0_11 = arith.constant 0 : index
      %12 = vector.load %arg6[%c0_10, %c0_11] : memref<32x128xf32, #tpu.memory_space<vmem>>, vector<32x128xf32>
      %c0_12 = arith.constant 0 : index
      %c0_13 = arith.constant 0 : index
      %13 = vector.load %arg4[%c0_12, %c0_13] : memref<1x128xf32, #tpu.memory_space<vmem>>, vector<1x128xf32>
      %14 = vector.broadcast %13 : vector<1x128xf32> to vector<32x128xf32>
      %15 = arith.addf %12, %14 : vector<32x128xf32>
      %cst_14 = arith.constant 0.000000e+00 : f32
      %16 = vector.broadcast %cst_14 : f32 to vector<32x128xf32>
      %17 = arith.maximumf %15, %16 : vector<32x128xf32>
      %c0_15 = arith.constant 0 : index
      %c0_16 = arith.constant 0 : index
      %18 = vector.load %arg5[%c0_15, %c0_16] : memref<32x128xf32, #tpu.memory_space<vmem>>, vector<32x128xf32>
      tpu.vector_store %arg5[%c0_15, %c0_16], %17 {strides = array<i32>} : memref<32x128xf32, #tpu.memory_space<vmem>>, vector<32x128xf32>,
    } else {
    }
    return
  }
  func.func @transform_0(%arg0: i32, %arg1: i32) -> (i32, i32) {
    %c0_i32 = arith.constant 0 : i32
    return %arg0, %arg1 : i32, i32
  }
  func.func @transform_1(%arg0: i32, %arg1: i32) -> (i32, i32) {
    %c0_i32 = arith.constant 0 : i32
    %c0_i32_0 = arith.constant 0 : i32
    return %arg1, %c0_i32 : i32, i32
  }
  func.func @transform_2(%arg0: i32, %arg1: i32) -> (i32, i32) {
    %c0_i32 = arith.constant 0 : i32
    %c0_i32_0 = arith.constant 0 : i32
    %c0_i32_1 = arith.constant 0 : i32
    return %c0_i32, %c0_i32_0 : i32, i32
  }
  func.func @transform_3(%arg0: i32, %arg1: i32) -> (i32, i32) {
    %c0_i32 = arith.constant 0 : i32
    %c0_i32_0 = arith.constant 0 : i32
    return %arg0, %c0_i32 : i32, i32
  }
}

module attributes {stable_mosaic.version = 11 : i64} {
  func.func @_mm_bias_act_kernel(%arg0: i32, %arg1: i32, %arg2: memref<96x64xbf16, #tpu.memory_space<vmem>>, %arg3: memref<64x128xbf16, #tpu.memory_space<vmem>>, %arg4: memref<1x128xf32, #tpu.memory_space<vmem>>, %arg5: memref<96x128xf32, #tpu.memory_space<vmem>>, %arg6: memref<96x128xf32, #tpu.memory_space<vmem>>) attributes {dimension_semantics = [#tpu.dimension_semantics<parallel>, #tpu.dimension_semantics<arbitrary>], iteration_bounds = array<i64: 2, 1>, scalar_prefetch = 0 : i64, scratch_operands = 1 : i64, tpu.core_type = #tpu.core_type<tc>, window_params = [{transform_indices = @transform_0, window_bounds = array<i64: 96, 64>}, {transform_indices = @transform_1, window_bounds = array<i64: 64, 128>}, {pipeline_mode = #tpu.pipeline_mode<synchronous>, transform_indices = @transform_2, window_bounds = array<i64: 1, 128>}, {transform_indices = @transform_3, window_bounds = array<i64: 96, 128>}]} {
    %c0_i32 = arith.constant 0 : i32
    %0 = arith.cmpi eq, %arg1, %c0_i32 : i32
    %1 = arith.extui %0 : i1 to i32
    %c0_i32_0 = arith.constant 0 : i32
    %2 = arith.cmpi ne, %1, %c0_i32_0 : i32
    scf.if %2 {
      %cst_10 = arith.constant 0.000000e+00 : f32
      %12 = vector.broadcast %cst_10 : f32 to vector<96x128xf32>
      %c0_11 = arith.constant 0 : index
      %c0_12 = arith.constant 0 : index
      %13 = vector.load %arg6[%c0_11, %c0_12] : memref<96x128xf32, #tpu.memory_space<vmem>>, vector<96x128xf32>
      tpu.vector_store %arg6[%c0_11, %c0_12], %12 {strides = array<i32>} : memref<96x128xf32, #tpu.memory_space<vmem>>, vector<96x128xf32>,
    } else {
    }
    %c0 = arith.constant 0 : index
    %c0_1 = arith.constant 0 : index
    %3 = vector.load %arg6[%c0, %c0_1] : memref<96x128xf32, #tpu.memory_space<vmem>>, vector<96x128xf32>
    %c0_2 = arith.constant 0 : index
    %c0_3 = arith.constant 0 : index
    %4 = vector.load %arg2[%c0_2, %c0_3] : memref<96x64xbf16, #tpu.memory_space<vmem>>, vector<96x64xbf16>
    %c0_4 = arith.constant 0 : index
    %c0_5 = arith.constant 0 : index
    %5 = vector.load %arg3[%c0_4, %c0_5] : memref<64x128xbf16, #tpu.memory_space<vmem>>, vector<64x128xbf16>
    %cst = arith.constant dense<0.000000e+00> : vector<96x128xf32>
    %6 = tpu.matmul %4, %5, %cst {dimension_numbers = #tpu.dot_dimension_numbers<[1], [0], [0], [1], [0, 0, 1, 1], [], []>} : vector<96x64xbf16>, vector<64x128xbf16>, vector<96x128xf32> -> vector<96x128xf32>
    %7 = arith.addf %3, %6 : vector<96x128xf32>
    %c0_6 = arith.constant 0 : index
    %c0_7 = arith.constant 0 : index
    %8 = vector.load %arg6[%c0_6, %c0_7] : memref<96x128xf32, #tpu.memory_space<vmem>>, vector<96x128xf32>
    tpu.vector_store %arg6[%c0_6, %c0_7], %7 {strides = array<i32>} : memref<96x128xf32, #tpu.memory_space<vmem>>, vector<96x128xf32>,
    %c0_i32_8 = arith.constant 0 : i32
    %9 = arith.cmpi eq, %arg1, %c0_i32_8 : i32
    %10 = arith.extui %9 : i1 to i32
    %c0_i32_9 = arith.constant 0 : i32
    %11 = arith.cmpi ne, %10, %c0_i32_9 : i32
    scf.if %11 {
      %c0_10 = arith.constant 0 : index
      %c0_11 = arith.constant 0 : index
      %12 = vector.load %arg6[%c0_10, %c0_11] : memref<96x128xf32, #tpu.memory_space<vmem>>, vector<96x128xf32>
      %c0_12 = arith.constant 0 : index
      %c0_13 = arith.constant 0 : index
      %13 = vector.load %arg4[%c0_12, %c0_13] : memref<1x128xf32, #tpu.memory_space<vmem>>, vector<1x128xf32>
      %14 = vector.broadcast %13 : vector<1x128xf32> to vector<96x128xf32>
      %15 = arith.addf %12, %14 : vector<96x128xf32>
      %16 = math.tanh %15 : vector<96x128xf32>
      %c0_14 = arith.constant 0 : index
      %c0_15 = arith.constant 0 : index
      %17 = vector.load %arg5[%c0_14, %c0_15] : memref<96x128xf32, #tpu.memory_space<vmem>>, vector<96x128xf32>
      tpu.vector_store %arg5[%c0_14, %c0_15], %16 {strides = array<i32>} : memref<96x128xf32, #tpu.memory_space<vmem>>, vector<96x128xf32>,
    } else {
    }
    return
  }
  func.func @transform_0(%arg0: i32, %arg1: i32) -> (i32, i32) {
    %c0_i32 = arith.constant 0 : i32
    return %arg0, %arg1 : i32, i32
  }
  func.func @transform_1(%arg0: i32, %arg1: i32) -> (i32, i32) {
    %c0_i32 = arith.constant 0 : i32
    %c0_i32_0 = arith.constant 0 : i32
    return %arg1, %c0_i32 : i32, i32
  }
  func.func @transform_2(%arg0: i32, %arg1: i32) -> (i32, i32) {
    %c0_i32 = arith.constant 0 : i32
    %c0_i32_0 = arith.constant 0 : i32
    %c0_i32_1 = arith.constant 0 : i32
    return %c0_i32, %c0_i32_0 : i32, i32
  }
  func.func @transform_3(%arg0: i32, %arg1: i32) -> (i32, i32) {
    %c0_i32 = arith.constant 0 : i32
    %c0_i32_0 = arith.constant 0 : i32
    return %arg0, %c0_i32 : i32, i32
  }
}

</mosaic_0001>

<llo_original>
// kernel: generator_forward.8
$region0: #{generator_forward.8}
  #allocation0 [shape = 'u32[]', space=smem, size = 0x4, offset = 0x4, fixed_abs, tag = 'smem constant byte address 0x4 - core index']
  #allocation1 [shape = 'u32[144,128]{1,0:T(1,128)}', space=vmem, size = 0x12000, scoped, tag = 'internal scratch']
  #allocation2 [shape = 'f32[64,128]{1,0:T(8,128)}', space=vmem, size = 0x8000, scoped, tag = 'scratch operand']
  %s0 = inlined_call_operand.vmem [shape: bf16[128,48], index: 0, kind: input, shape index: {}]
  %s1 = inlined_call_operand.vmem [shape: bf16[48,128], index: 1, kind: input, shape index: {}]
  %s2 = inlined_call_operand.vmem [shape: f32[1,128], index: 2, kind: input, shape index: {}]
  %s3 = inlined_call_operand.vmem [shape: f32[128,128], index: 3, kind: output, shape index: {}]
  %s4 = sld [smem:[#allocation0]]
  $region53: #{generator_forward.8} parent=0
    _
  %s6 = ssub.s32 1, %s4
  %s7 = scalar_select 0, %s6, %s4
  loop: start=0, step=1, limit=4
  $region2: #{generator_forward.8} parent=0 // loop_pre_header
    _
  $region3: #{generator_forward.8} parent=0 // loop_header
    %s9 = sphi 0, %s13
    %p10 = scmp.ge.s32.totalorder %s9, 4
    %s16 = sphi 0, %s28
    %s17 = sphi 0, %s24
    %s18 = sphi 0, %s16
    %s19 = sphi 0, %s17
    %s20 = sphi 0, %s18
    %s21 = sphi 0, %s19
    %s33 = sphi 0, %s35
    %s36 = sphi 0, %s33
    %s37 = sphi 0, %s36
    %s53 = sphi 0, %s37
    %s59 = sphi 0, %s61
    %s62 = sphi 0, %s59
    %s63 = sphi 0, %s62
    %s79 = sphi 0, %s63
    %s83 = sphi 0, %s83
    %s85 = sphi 0, %s83
    %s86 = sphi 0, %s85
    %s100 = sphi 0, %s86
    %s106 = sphi 0, %s108
    %s109 = sphi 0, %s106
    %s110 = sphi 0, %s109
    %s126 = sphi 0, %s110
  $region4: #{generator_forward.8} parent=0 // loop_header_branch
    %12 = sbr.rel (%p10) target = $region8
  $region5: #{generator_forward.8} parent=0 // loop_body
    %s14 = ssub.s32 %s9, 1
    %s15 = ssub.s32 %s9, 2
    %s22 = sadd.s32 1, %s17
    %p23 = scmp.ge.s32.totalorder %s22, 1
    %s24 = scalar_select %p23, 0, %s22
    %s25 = sadd.s32 1, %s16
    %s26 = scalar_select %p23, %s25, %s16
    %p27 = scmp.ge.s32.totalorder %s26, 2
    %s28 = scalar_select %p27, 0, %s26
    %s29 = ssub.s32 %s16, %s28
    %s30 = ssub.s32 %s17, %s24
    %s31 = sor.u32 %s29, %s30
    %p32 = scmp.eq.s32.totalorder %s31, 0
    %s34 = sadd.s32 %s33, 1
    %s35 = scalar_select %p32, %s33, %s34
    %p38 = pneg %p32
    %p39 = scmp.eq.s32.totalorder %s9, 1
    %p40 = por %p38, %p39
    %p41 = scmp.ne.s32.totalorder %s33, %s36
    %p42 = scmp.eq.s32.totalorder %s9, 0
    %p43 = por %p41, %p42
    %p44 = scmp.ne.s32.totalorder %s33, %s36
    %p45 = scmp.eq.s32.totalorder %s14, 1
    %p46 = por %p44, %p45
    %p47 = scmp.ne.s32.totalorder %s36, %s37
    %p48 = scmp.eq.s32.totalorder %s14, 0
    %p49 = por %p47, %p48
    %p50 = scmp.ne.s32.totalorder %s36, %s37
    %p51 = scmp.eq.s32.totalorder %s15, 1
    %p52 = por %p50, %p51
    %p54 = scmp.ne.s32.totalorder %s37, %s53
    %p55 = scmp.eq.s32.totalorder %s15, 0
    %p56 = por %p54, %p55
    %s57 = ssub.s32 %s17, %s24
    %p58 = scmp.eq.s32.totalorder %s57, 0
    %s60 = sadd.s32 %s59, 1
    %s61 = scalar_select %p58, %s59, %s60
    %p64 = pneg %p58
    %p65 = scmp.eq.s32.totalorder %s9, 1
    %p66 = por %p64, %p65
    %p67 = scmp.ne.s32.totalorder %s59, %s62
    %p68 = scmp.eq.s32.totalorder %s9, 0
    %p69 = por %p67, %p68
    %p70 = scmp.ne.s32.totalorder %s59, %s62
    %p71 = scmp.eq.s32.totalorder %s14, 1
    %p72 = por %p70, %p71
    %p73 = scmp.ne.s32.totalorder %s62, %s63
    %p74 = scmp.eq.s32.totalorder %s14, 0
    %p75 = por %p73, %p74
    %p76 = scmp.ne.s32.totalorder %s62, %s63
    %p77 = scmp.eq.s32.totalorder %s15, 1
    %p78 = por %p76, %p77
    %p80 = scmp.ne.s32.totalorder %s63, %s79
    %p81 = scmp.eq.s32.totalorder %s15, 0
    %p82 = por %p80, %p81
    %s84 = sadd.s32 %s83, 1
    %p87 = scmp.eq.s32.totalorder %s9, 1
    %p88 = scmp.ne.s32.totalorder %s83, %s85
    %p89 = scmp.eq.s32.totalorder %s9, 0
    %p90 = por %p88, %p89
    %p91 = scmp.ne.s32.totalorder %s83, %s85
    %p92 = scmp.eq.s32.totalorder %s14, 1
    %p93 = por %p91, %p92
    %p94 = scmp.ne.s32.totalorder %s85, %s86
    %p95 = scmp.eq.s32.totalorder %s14, 0
    %p96 = por %p94, %p95
    %p97 = scmp.ne.s32.totalorder %s85, %s86
    %p98 = scmp.eq.s32.totalorder %s15, 1
    %p99 = por %p97, %p98
    %p101 = scmp.ne.s32.totalorder %s86, %s100
    %p102 = scmp.eq.s32.totalorder %s15, 0
    %p103 = por %p101, %p102
    %s104 = ssub.s32 %s16, %s28
    %p105 = scmp.eq.s32.totalorder %s104, 0
    %s107 = sadd.s32 %s106, 1
    %s108 = scalar_select %p105, %s106, %s107
    %p111 = pneg %p105
    %p112 = scmp.eq.s32.totalorder %s9, 1
    %p113 = por %p111, %p112
    %p114 = scmp.ne.s32.totalorder %s106, %s109
    %p115 = scmp.eq.s32.totalorder %s9, 0
    %p116 = por %p114, %p115
    %p117 = scmp.ne.s32.totalorder %s106, %s109
    %p118 = scmp.eq.s32.totalorder %s14, 1
    %p119 = por %p117, %p118
    %p120 = scmp.ne.s32.totalorder %s109, %s110
    %p121 = scmp.eq.s32.totalorder %s14, 0
    %p122 = por %p120, %p121
    %p123 = scmp.ne.s32.totalorder %s109, %s110
    %p124 = scmp.eq.s32.totalorder %s15, 1
    %p125 = por %p123, %p124
    %p127 = scmp.ne.s32.totalorder %s110, %s126
    %p128 = scmp.eq.s32.totalorder %s15, 0
    %p129 = por %p127, %p128
    %p130 = scmp.le.s32.totalorder 1, %s9
    %p131 = scmp.lt.s32.totalorder %s9, 3
    %p132 = pnand %p130, %p131
    %p133 = pneg %p132
    // Predicated region
    $region9: #{generator_forward.8} parent=5 // pred_check
      _
    $region10: #{generator_forward.8} parent=5 // pred_check_branch
      %135 = sbr.rel (%p132) target = $region12
    $region11: #{generator_forward.8} parent=5 // pred_region
      %s136 = ssub.s32 %s9, 1
      // Predicated region
      $region13: #{generator_forward.8} parent=11 // pred_check
        %p137 = pneg %p75
      $region14: #{generator_forward.8} parent=11 // pred_check_branch
        %139 = sbr.rel (%p137) target = $region16
      $region15: #{generator_forward.8} parent=11 // pred_region
        %s140 = smul.u32 6, %s19
        %p141 = scmp.lt.s32.totalorder %s140, 5
        %s142 = scalar_select %p141, %s140, 5
        %s143 = smul.addr %s142, 4
        %s144 = scalar_lea.vmem %s1, %s143
        %s145 = smul.u32 6, %s19
      $region16: #{generator_forward.8} parent=11 // pred_fallthru
        _
      // Predicated region
      $region17: #{generator_forward.8} parent=11 // pred_check
        %p146 = pneg %p96
      $region18: #{generator_forward.8} parent=11 // pred_check_branch
        %148 = sbr.rel (%p146) target = $region20
      $region19: #{generator_forward.8} parent=11 // pred_region
        _
      $region20: #{generator_forward.8} parent=11 // pred_fallthru
        _
    $region12: #{generator_forward.8} parent=5 // pred_fallthru
      _
    %p149 = scmp.lt.s32.totalorder %s9, 2
    // Predicated region
    $region21: #{generator_forward.8} parent=5 // pred_check
      %p150 = pneg %p149
    $region22: #{generator_forward.8} parent=5 // pred_check_branch
      %152 = sbr.rel (%p150) target = $region24
    $region23: #{generator_forward.8} parent=5 // pred_region
      // Predicated region
      $region25: #{generator_forward.8} parent=23 // pred_check
        %p153 = pneg %p43
      $region26: #{generator_forward.8} parent=23 // pred_check_branch
        %155 = sbr.rel (%p153) target = $region28
      $region27: #{generator_forward.8} parent=23 // pred_region
        %s156 = smul.u32 8, %s16
        %p157 = scmp.lt.s32.totalorder %s156, 15
        %s158 = scalar_select %p157, %s156, 15
        %p159 = scmp.lt.s32.totalorder %s17, 0
        %s160 = scalar_select %p159, %s17, 0
        %s161 = sadd.s32 %s160, %s158
        %s162 = smul.addr %s161, 4
        %s163 = scalar_lea.vmem %s0, %s162
        %s164 = smul.u32 8, %s16
      $region28: #{generator_forward.8} parent=23 // pred_fallthru
        _
    $region24: #{generator_forward.8} parent=5 // pred_fallthru
      _
    %p165 = scmp.le.s32.totalorder 1, %s9
    %p166 = scmp.lt.s32.totalorder %s9, 3
    %p167 = pnand %p165, %p166
    %p168 = pneg %p167
    // Predicated region
    $region29: #{generator_forward.8} parent=5 // pred_check
      _
    $region30: #{generator_forward.8} parent=5 // pred_check_branch
      %170 = sbr.rel (%p167) target = $region32
    $region31: #{generator_forward.8} parent=5 // pred_region
      %s171 = ssub.s32 %s9, 1
      %s172 = smul.u32 8, %s18
      %p173 = scmp.lt.s32.totalorder %s172, 15
      %s174 = scalar_select %p173, %s172, 15
      %p175 = scmp.lt.s32.totalorder %s19, 0
      %s176 = scalar_select %p175, %s19, 0
      %s177 = sadd.s32 %s176, %s174
      %s178 = smul.addr %s177, 4
      %s179 = scalar_lea.vmem %s0, %s178
      %p180 = pneg %p49
      %p181 = pneg %p46
      %s182 = smul.u32 6, %s19
      %p183 = scmp.lt.s32.totalorder %s182, 5
      %s184 = scalar_select %p183, %s182, 5
      %s185 = smul.addr %s184, 4
      %s186 = scalar_lea.vmem %s1, %s185
      %p187 = pneg %p75
      %p188 = pneg %p72
      %p189 = pneg %p96
      %p190 = pneg %p93
      %p191 = pneg %p122
      %p192 = pneg %p119
      %s193 = smul.u32 8, %s18
      %p194 = scmp.lt.s32.totalorder %s193, 15
      %s195 = scalar_select %p194, %s193, 15
      %s196 = smul.addr %s195, 8
      %s197 = scalar_lea.vmem %s3, %s196
      %s198 = smul.u32 8, %s18
      %p199 = scmp.lt.s32.totalorder %s198, 15
      %s200 = scalar_select %p199, %s198, 15
      %p201 = scmp.lt.s32.totalorder %s19, 0
      %s202 = scalar_select %p201, %s19, 0
      %s203 = sadd.s32 %s202, %s200
      %s204 = smul.addr %s203, 4
      %s205 = scalar_lea.vmem %s0, %s204
      %s206 = smul.u32 8, %s18
      %s207 = smul.u32 6, %s19
      %p208 = scmp.lt.s32.totalorder %s207, 5
      %s209 = scalar_select %p208, %s207, 5
      %s210 = smul.addr %s209, 4
      %s211 = scalar_lea.vmem %s1, %s210
      %s212 = smul.u32 6, %s19
      %s213 = smul.u32 8, %s18
      %p214 = scmp.lt.s32.totalorder %s213, 15
      %s215 = scalar_select %p214, %s213, 15
      %s216 = smul.addr %s215, 8
      %s217 = scalar_lea.vmem %s3, %s216
      %s218 = smul.u32 8, %s18
      %p220 = scmp.eq.s32.totalorder %s19, 0
      // Predicated region
      $region33: #{generator_forward.8} parent=31 // pred_check
        %p221 = pneg %p220
      $region34: #{generator_forward.8} parent=31 // pred_check_branch
        %223 = sbr.rel (%p221) target = $region36
      $region35: #{generator_forward.8} parent=31 // pred_region
        %224 = vst [vmem:[#allocation2] sm:$0xff] 0.0
        %225 = vst [vmem:[#allocation2 + $0x8] sm:$0xff] 0.0
        %226 = vst [vmem:[#allocation2 + $0x10] sm:$0xff] 0.0
        %227 = vst [vmem:[#allocation2 + $0x18] sm:$0xff] 0.0
        %228 = vst [vmem:[#allocation2 + $0x20] sm:$0xff] 0.0
        %229 = vst [vmem:[#allocation2 + $0x28] sm:$0xff] 0.0
        %230 = vst [vmem:[#allocation2 + $0x30] sm:$0xff] 0.0
        %231 = vst [vmem:[#allocation2 + $0x38] sm:$0xff] 0.0
      $region36: #{generator_forward.8} parent=31 // pred_fallthru
        _
      %v232 = vld [vmem:[#allocation2] sm:$0xff]
      %v233 = vld [vmem:[#allocation2 + $0x8] sm:$0xff]
      %v234 = vld [vmem:[#allocation2 + $0x10] sm:$0xff]
      %v235 = vld [vmem:[#allocation2 + $0x18] sm:$0xff]
      %v236 = vld [vmem:[#allocation2 + $0x20] sm:$0xff]
      %v237 = vld [vmem:[#allocation2 + $0x28] sm:$0xff]
      %v238 = vld [vmem:[#allocation2 + $0x30] sm:$0xff]
      %v239 = vld [vmem:[#allocation2 + $0x38] sm:$0xff]
      %v240 = vld [vmem:[%s205] sm:$0xf]
      %v241 = vld [vmem:[%s205 + $0x4] sm:$0xf]
      %v242 = vld [vmem:[%s205 + $0x8] sm:$0xf]
      %v243 = vld [vmem:[%s205 + $0xc] sm:$0xf]
      %v244 = vld [vmem:[%s205 + $0x10] sm:$0xf]
      %v245 = vld [vmem:[%s205 + $0x14] sm:$0xf]
      %v246 = vld [vmem:[%s205 + $0x18] sm:$0xf]
      %v247 = vld [vmem:[%s205 + $0x1c] sm:$0xf]
      %v248 = vld [vmem:[%s211] sm:$0xf]
      %v249 = vld [vmem:[%s211 + $0x4] sm:$0xf]
      %v250 = vld [vmem:[%s211 + $0x8] sm:$0xf]
      %v251 = vld [vmem:[%s211 + $0xc] sm:$0xf]
      %v252 = vld [vmem:[%s211 + $0x10] sm:$0xf]
      %v253 = vld [vmem:[%s211 + $0x14] sm:$0xf]
      %v262 = vunpack.c.l.b16 %v240
      %v263 = vunpack.c.l.b16 %v241
      %v264 = vunpack.c.l.b16 %v242
      %v265 = vunpack.c.l.b16 %v243
      %v266 = vunpack.c.l.b16 %v244
      %v267 = vunpack.c.l.b16 %v245
      %v268 = vunpack.c.l.b16 %v246
      %v269 = vunpack.c.l.b16 %v247
      %v270 = vpack.c.b16 %v263, %v262
      %v271 = vpack.c.b16 %v265, %v264
      %v272 = vpack.c.b16 %v267, %v266
      %v273 = vpack.c.b16 %v269, %v268
      %v280 = vunpack.c.l.b16 %v248
      %v281 = vunpack.c.l.b16 %v249
      %v282 = vunpack.c.l.b16 %v250
      %v283 = vunpack.c.l.b16 %v251
      %v284 = vunpack.c.l.b16 %v252
      %v285 = vunpack.c.l.b16 %v253
      %v286 = vpack.c.b16 %v281, %v280
      %v287 = vpack.c.b16 %v283, %v282
      %v288 = vpack.c.b16 %v285, %v284
      %vm292 = vcmask 392192
      %v294 = vsel %vm292, %v270, 0
      %v297 = vsel %vm292, %v271, 0
      %v300 = vsel %vm292, %v272, 0
      %v303 = vsel %vm292, %v273, 0
      %305 = vmatprep.subr.bf16.mxu0 0
      %306 = vmatpush1.bf16.msra.mxu0 %v286
      %307 = vmatprep.subr.bf16.mxu0 0
      %308 = vmatpush1.bf16.msra.mxu0 %v287
      %309 = vmatprep.subr.bf16.mxu0 0
      %310 = vmatpush1.bf16.msra.mxu0 %v288
      %311 = vmatprep.subr.bf16.mxu0 0
      %312 = vmatpush1.bf16.msra.mxu0 0
      %313 = vmatprep.subr.bf16.mxu0 0
      %314 = vmatpush1.bf16.msra.mxu0 0
      %315 = vmatprep.subr.bf16.mxu0 0
      %316 = vmatpush1.bf16.msra.mxu0 0
      %317 = vmatprep.subr.bf16.mxu0 0
      %318 = vmatpush1.bf16.msra.mxu0 0
      %319 = vmatprep.subr.bf16.mxu0 0
      %320 = vmatpush1.bf16.msra.mxu0 0
      %321 = vmatprep.subr.bf16.mxu0 0
      %322 = vmatpush1.bf16.msra.mxu0 0
      %323 = vmatprep.subr.bf16.mxu0 0
      %324 = vmatpush1.bf16.msra.mxu0 0
      %325 = vmatprep.subr.bf16.mxu0 0
      %326 = vmatpush1.bf16.msra.mxu0 0
      %327 = vmatprep.subr.bf16.mxu0 0
      %328 = vmatpush1.bf16.msra.mxu0 0
      %329 = vmatprep.subr.bf16.mxu0 0
      %330 = vmatpush1.bf16.msra.mxu0 0
      %331 = vmatprep.subr.bf16.mxu0 0
      %332 = vmatpush1.bf16.msra.mxu0 0
      %333 = vmatprep.subr.bf16.mxu0 0
      %334 = vmatpush1.bf16.msra.mxu0 0
      %335 = vmatprep.subr.bf16.mxu0 0
      %336 = vmatpush1.bf16.msra.mxu0 0
      %337 = vmatprep.mubr.bf16.mxu0 0
      %338 = vmatmul.mubr.bf16.gmra.mrb[0].mxu0 %v294
      %v339 = vpop.f32.mrb[0].mxu0
      %v340 = vadd.f32 0.0, %v339
      %v341 = vpop.f32.mrb[0].mxu0
      %v342 = vpop.f32.mrb[0].mxu0
      %v343 = vadd.f32 0.0, %v342
      %v344 = vpop.f32.mrb[0].mxu0
      %345 = vmatprep.mubr.bf16.mxu0 0
      %346 = vmatmul.mubr.bf16.gmra.mrb[0].mxu0 %v297
      %v347 = vpop.f32.mrb[0].mxu0
      %v348 = vadd.f32 0.0, %v347
      %v349 = vpop.f32.mrb[0].mxu0
      %v350 = vpop.f32.mrb[0].mxu0
      %v351 = vadd.f32 0.0, %v350
      %v352 = vpop.f32.mrb[0].mxu0
      %353 = vmatprep.mubr.bf16.mxu0 0
      %354 = vmatmul.mubr.bf16.gmra.mrb[0].mxu0 %v300
      %v355 = vpop.f32.mrb[0].mxu0
      %v356 = vadd.f32 0.0, %v355
      %v357 = vpop.f32.mrb[0].mxu0
      %v358 = vpop.f32.mrb[0].mxu0
      %v359 = vadd.f32 0.0, %v358
      %v360 = vpop.f32.mrb[0].mxu0
      %361 = vmatprep.mubr.bf16.mxu0 0
      %362 = vmatmul.mubr.bf16.gmra.mrb[0].mxu0 %v303
      %v363 = vpop.f32.mrb[0].mxu0
      %v364 = vadd.f32 0.0, %v363
      %v365 = vpop.f32.mrb[0].mxu0
      %v366 = vpop.f32.mrb[0].mxu0
      %v367 = vadd.f32 0.0, %v366
      %v368 = vpop.f32.mrb[0].mxu0
      %369 = vdwg.mxu0
      %v370 = vadd.f32 %v232, %v340
      %v371 = vadd.f32 %v233, %v343
      %v372 = vadd.f32 %v234, %v348
      %v373 = vadd.f32 %v235, %v351
      %v374 = vadd.f32 %v236, %v356
      %v375 = vadd.f32 %v237, %v359
      %v376 = vadd.f32 %v238, %v364
      %v377 = vadd.f32 %v239, %v367
      %378 = vst [vmem:[#allocation2] sm:$0xff] %v370
      %379 = vst [vmem:[#allocation2 + $0x8] sm:$0xff] %v371
      %380 = vst [vmem:[#allocation2 + $0x10] sm:$0xff] %v372
      %381 = vst [vmem:[#allocation2 + $0x18] sm:$0xff] %v373
      %382 = vst [vmem:[#allocation2 + $0x20] sm:$0xff] %v374
      %383 = vst [vmem:[#allocation2 + $0x28] sm:$0xff] %v375
      %384 = vst [vmem:[#allocation2 + $0x30] sm:$0xff] %v376
      %385 = vst [vmem:[#allocation2 + $0x38] sm:$0xff] %v377
      // Predicated region
      $region37: #{generator_forward.8} parent=31 // pred_check
        %p386 = pneg %p220
      $region38: #{generator_forward.8} parent=31 // pred_check_branch
        %388 = sbr.rel (%p386) target = $region40
      $region39: #{generator_forward.8} parent=31 // pred_region
        %v389 = vld [vmem:[#allocation2] sm:$0xff]
        %v390 = vld [vmem:[#allocation2 + $0x8] sm:$0xff]
        %v391 = vld [vmem:[#allocation2 + $0x10] sm:$0xff]
        %v392 = vld [vmem:[#allocation2 + $0x18] sm:$0xff]
        %v393 = vld [vmem:[#allocation2 + $0x20] sm:$0xff]
        %v394 = vld [vmem:[#allocation2 + $0x28] sm:$0xff]
        %v395 = vld [vmem:[#allocation2 + $0x30] sm:$0xff]
        %v396 = vld [vmem:[#allocation2 + $0x38] sm:$0xff]
        %v397 = vld [vmem:[%s2] sm:$0x1]
        %v399 = vlaneseq
        %v400 = vshrl.u32 %v399, 7
        %v401 = vsub.s32 0, %v400
        %v402 = vrot.slane %v397, %v401
        %v404 = vadd.f32 %v389, %v402
        %v405 = vadd.f32 %v390, %v402
        %v406 = vadd.f32 %v391, %v402
        %v407 = vadd.f32 %v392, %v402
        %v408 = vadd.f32 %v393, %v402
        %v409 = vadd.f32 %v394, %v402
        %v410 = vadd.f32 %v395, %v402
        %v411 = vadd.f32 %v396, %v402
        %vm412 = vcmp.gt.f32.partialorder %v404, 0.0
        %vm413 = vcmp.gt.f32.partialorder %v405, 0.0
        %vm414 = vcmp.gt.f32.partialorder %v406, 0.0
        %vm415 = vcmp.gt.f32.partialorder %v407, 0.0
        %vm416 = vcmp.gt.f32.partialorder %v408, 0.0
        %vm417 = vcmp.gt.f32.partialorder %v409, 0.0
        %vm418 = vcmp.gt.f32.partialorder %v410, 0.0
        %vm419 = vcmp.gt.f32.partialorder %v411, 0.0
        %v420 = vmul.f32 %v404, 0.2
        %v421 = vmul.f32 %v405, 0.2
        %v422 = vmul.f32 %v406, 0.2
        %v423 = vmul.f32 %v407, 0.2
        %v424 = vmul.f32 %v408, 0.2
        %v425 = vmul.f32 %v409, 0.2
        %v426 = vmul.f32 %v410, 0.2
        %v427 = vmul.f32 %v411, 0.2
        %v428 = vsel %vm412, %v404, %v420
        %v429 = vsel %vm413, %v405, %v421
        %v430 = vsel %vm414, %v406, %v422
        %v431 = vsel %vm415, %v407, %v423
        %v432 = vsel %vm416, %v408, %v424
        %v433 = vsel %vm417, %v409, %v425
        %v434 = vsel %vm418, %v410, %v426
        %v435 = vsel %vm419, %v411, %v427
        %436 = vst [vmem:[%s217] sm:$0xff] %v428
        %437 = vst [vmem:[%s217 + $0x8] sm:$0xff] %v429
        %438 = vst [vmem:[%s217 + $0x10] sm:$0xff] %v430
        %439 = vst [vmem:[%s217 + $0x18] sm:$0xff] %v431
        %440 = vst [vmem:[%s217 + $0x20] sm:$0xff] %v432
        %441 = vst [vmem:[%s217 + $0x28] sm:$0xff] %v433
        %442 = vst [vmem:[%s217 + $0x30] sm:$0xff] %v434
        %443 = vst [vmem:[%s217 + $0x38] sm:$0xff] %v435
      $region40: #{generator_forward.8} parent=31 // pred_fallthru
        _
      %s444 = smul.u32 8, %s18
      %p445 = scmp.lt.s32.totalorder %s444, 15
      %s446 = scalar_select %p445, %s444, 15
      %s447 = smul.addr %s446, 8
      %s448 = scalar_lea.vmem %s3, %s447
      // Predicated region
      $region41: #{generator_forward.8} parent=31 // pred_check
        %p449 = pneg %p119
      $region42: #{generator_forward.8} parent=31 // pred_check_branch
        %451 = sbr.rel (%p449) target = $region44
      $region43: #{generator_forward.8} parent=31 // pred_region
        %s452 = smul.u32 8, %s18
      $region44: #{generator_forward.8} parent=31 // pred_fallthru
        _
    $region32: #{generator_forward.8} parent=5 // pred_fallthru
      _
    %p453 = scmp.le.s32.totalorder 2, %s9
    // Predicated region
    $region45: #{generator_forward.8} parent=5 // pred_check
      %p454 = pneg %p453
    $region46: #{generator_forward.8} parent=5 // pred_check_branch
      %456 = sbr.rel (%p454) target = $region48
    $region47: #{generator_forward.8} parent=5 // pred_region
      %s457 = ssub.s32 %s9, 2
      // Predicated region
      $region49: #{generator_forward.8} parent=47 // pred_check
        %p458 = pneg %p125
      $region50: #{generator_forward.8} parent=47 // pred_check_branch
        %460 = sbr.rel (%p458) target = $region52
      $region51: #{generator_forward.8} parent=47 // pred_region
        %s461 = smul.u32 8, %s20
        %p462 = scmp.lt.s32.totalorder %s461, 15
        %s463 = scalar_select %p462, %s461, 15
        %s464 = smul.addr %s463, 8
        %s465 = scalar_lea.vmem %s3, %s464
      $region52: #{generator_forward.8} parent=47 // pred_fallthru
        _
    $region48: #{generator_forward.8} parent=5 // pred_fallthru
      _
  $region6: #{generator_forward.8} parent=0 // loop_footer
    %s13 = sadd.s32 1, %s9
  $region7: #{generator_forward.8} parent=0 // loop_footer_branch
    %8 = sbr.rel target = $region3
  $region8: #{generator_forward.8} parent=0 // loop_exit
    _

// kernel: generator_forward.9
$region0: #{generator_forward.9}
  #allocation0 [shape = 'u32[]', space=smem, size = 0x4, offset = 0x4, fixed_abs, tag = 'smem constant byte address 0x4 - core index']
  #allocation1 [shape = 'u32[144,128]{1,0:T(1,128)}', space=vmem, size = 0x12000, scoped, tag = 'internal scratch']
  #allocation2 [shape = 'f32[16,128]{1,0:T(8,128)}', space=vmem, size = 0x2000, scoped, tag = 'scratch operand']
  %s0 = inlined_call_operand.vmem [shape: bf16[32,128], index: 0, kind: input, shape index: {}]
  %s1 = inlined_call_operand.vmem [shape: bf16[128,128], index: 1, kind: input, shape index: {}]
  %s2 = inlined_call_operand.vmem [shape: f32[1,128], index: 2, kind: input, shape index: {}]
  %s3 = inlined_call_operand.vmem [shape: f32[32,128], index: 3, kind: output, shape index: {}]
  %s4 = sld [smem:[#allocation0]]
  $region53: #{generator_forward.9} parent=0
    _
  %s6 = ssub.s32 1, %s4
  %s7 = scalar_select 0, %s6, %s4
  loop: start=0, step=1, limit=4
  $region2: #{generator_forward.9} parent=0 // loop_pre_header
    _
  $region3: #{generator_forward.9} parent=0 // loop_header
    %s9 = sphi 0, %s13
    %p10 = scmp.ge.s32.totalorder %s9, 4
    %s16 = sphi 0, %s28
    %s17 = sphi 0, %s24
    %s18 = sphi 0, %s16
    %s19 = sphi 0, %s17
    %s20 = sphi 0, %s18
    %s21 = sphi 0, %s19
    %s33 = sphi 0, %s35
    %s36 = sphi 0, %s33
    %s37 = sphi 0, %s36
    %s53 = sphi 0, %s37
    %s59 = sphi 0, %s61
    %s62 = sphi 0, %s59
    %s63 = sphi 0, %s62
    %s79 = sphi 0, %s63
    %s83 = sphi 0, %s83
    %s85 = sphi 0, %s83
    %s86 = sphi 0, %s85
    %s100 = sphi 0, %s86
    %s106 = sphi 0, %s108
    %s109 = sphi 0, %s106
    %s110 = sphi 0, %s109
    %s126 = sphi 0, %s110
  $region4: #{generator_forward.9} parent=0 // loop_header_branch
    %12 = sbr.rel (%p10) target = $region8
  $region5: #{generator_forward.9} parent=0 // loop_body
    %s14 = ssub.s32 %s9, 1
    %s15 = ssub.s32 %s9, 2
    %s22 = sadd.s32 1, %s17
    %p23 = scmp.ge.s32.totalorder %s22, 1
    %s24 = scalar_select %p23, 0, %s22
    %s25 = sadd.s32 1, %s16
    %s26 = scalar_select %p23, %s25, %s16
    %p27 = scmp.ge.s32.totalorder %s26, 2
    %s28 = scalar_select %p27, 0, %s26
    %s29 = ssub.s32 %s16, %s28
    %s30 = ssub.s32 %s17, %s24
    %s31 = sor.u32 %s29, %s30
    %p32 = scmp.eq.s32.totalorder %s31, 0
    %s34 = sadd.s32 %s33, 1
    %s35 = scalar_select %p32, %s33, %s34
    %p38 = pneg %p32
    %p39 = scmp.eq.s32.totalorder %s9, 1
    %p40 = por %p38, %p39
    %p41 = scmp.ne.s32.totalorder %s33, %s36
    %p42 = scmp.eq.s32.totalorder %s9, 0
    %p43 = por %p41, %p42
    %p44 = scmp.ne.s32.totalorder %s33, %s36
    %p45 = scmp.eq.s32.totalorder %s14, 1
    %p46 = por %p44, %p45
    %p47 = scmp.ne.s32.totalorder %s36, %s37
    %p48 = scmp.eq.s32.totalorder %s14, 0
    %p49 = por %p47, %p48
    %p50 = scmp.ne.s32.totalorder %s36, %s37
    %p51 = scmp.eq.s32.totalorder %s15, 1
    %p52 = por %p50, %p51
    %p54 = scmp.ne.s32.totalorder %s37, %s53
    %p55 = scmp.eq.s32.totalorder %s15, 0
    %p56 = por %p54, %p55
    %s57 = ssub.s32 %s17, %s24
    %p58 = scmp.eq.s32.totalorder %s57, 0
    %s60 = sadd.s32 %s59, 1
    %s61 = scalar_select %p58, %s59, %s60
    %p64 = pneg %p58
    %p65 = scmp.eq.s32.totalorder %s9, 1
    %p66 = por %p64, %p65
    %p67 = scmp.ne.s32.totalorder %s59, %s62
    %p68 = scmp.eq.s32.totalorder %s9, 0
    %p69 = por %p67, %p68
    %p70 = scmp.ne.s32.totalorder %s59, %s62
    %p71 = scmp.eq.s32.totalorder %s14, 1
    %p72 = por %p70, %p71
    %p73 = scmp.ne.s32.totalorder %s62, %s63
    %p74 = scmp.eq.s32.totalorder %s14, 0
    %p75 = por %p73, %p74
    %p76 = scmp.ne.s32.totalorder %s62, %s63
    %p77 = scmp.eq.s32.totalorder %s15, 1
    %p78 = por %p76, %p77
    %p80 = scmp.ne.s32.totalorder %s63, %s79
    %p81 = scmp.eq.s32.totalorder %s15, 0
    %p82 = por %p80, %p81
    %s84 = sadd.s32 %s83, 1
    %p87 = scmp.eq.s32.totalorder %s9, 1
    %p88 = scmp.ne.s32.totalorder %s83, %s85
    %p89 = scmp.eq.s32.totalorder %s9, 0
    %p90 = por %p88, %p89
    %p91 = scmp.ne.s32.totalorder %s83, %s85
    %p92 = scmp.eq.s32.totalorder %s14, 1
    %p93 = por %p91, %p92
    %p94 = scmp.ne.s32.totalorder %s85, %s86
    %p95 = scmp.eq.s32.totalorder %s14, 0
    %p96 = por %p94, %p95
    %p97 = scmp.ne.s32.totalorder %s85, %s86
    %p98 = scmp.eq.s32.totalorder %s15, 1
    %p99 = por %p97, %p98
    %p101 = scmp.ne.s32.totalorder %s86, %s100
    %p102 = scmp.eq.s32.totalorder %s15, 0
    %p103 = por %p101, %p102
    %s104 = ssub.s32 %s16, %s28
    %p105 = scmp.eq.s32.totalorder %s104, 0
    %s107 = sadd.s32 %s106, 1
    %s108 = scalar_select %p105, %s106, %s107
    %p111 = pneg %p105
    %p112 = scmp.eq.s32.totalorder %s9, 1
    %p113 = por %p111, %p112
    %p114 = scmp.ne.s32.totalorder %s106, %s109
    %p115 = scmp.eq.s32.totalorder %s9, 0
    %p116 = por %p114, %p115
    %p117 = scmp.ne.s32.totalorder %s106, %s109
    %p118 = scmp.eq.s32.totalorder %s14, 1
    %p119 = por %p117, %p118
    %p120 = scmp.ne.s32.totalorder %s109, %s110
    %p121 = scmp.eq.s32.totalorder %s14, 0
    %p122 = por %p120, %p121
    %p123 = scmp.ne.s32.totalorder %s109, %s110
    %p124 = scmp.eq.s32.totalorder %s15, 1
    %p125 = por %p123, %p124
    %p127 = scmp.ne.s32.totalorder %s110, %s126
    %p128 = scmp.eq.s32.totalorder %s15, 0
    %p129 = por %p127, %p128
    %p130 = scmp.le.s32.totalorder 1, %s9
    %p131 = scmp.lt.s32.totalorder %s9, 3
    %p132 = pnand %p130, %p131
    %p133 = pneg %p132
    // Predicated region
    $region9: #{generator_forward.9} parent=5 // pred_check
      _
    $region10: #{generator_forward.9} parent=5 // pred_check_branch
      %135 = sbr.rel (%p132) target = $region12
    $region11: #{generator_forward.9} parent=5 // pred_region
      %s136 = ssub.s32 %s9, 1
      // Predicated region
      $region13: #{generator_forward.9} parent=11 // pred_check
        %p137 = pneg %p75
      $region14: #{generator_forward.9} parent=11 // pred_check_branch
        %139 = sbr.rel (%p137) target = $region16
      $region15: #{generator_forward.9} parent=11 // pred_region
        %s140 = smul.u32 16, %s19
        %p141 = scmp.lt.s32.totalorder %s140, 15
        %s142 = scalar_select %p141, %s140, 15
        %s143 = smul.addr %s142, 4
        %s144 = scalar_lea.vmem %s1, %s143
        %s145 = smul.u32 16, %s19
      $region16: #{generator_forward.9} parent=11 // pred_fallthru
        _
      // Predicated region
      $region17: #{generator_forward.9} parent=11 // pred_check
        %p146 = pneg %p96
      $region18: #{generator_forward.9} parent=11 // pred_check_branch
        %148 = sbr.rel (%p146) target = $region20
      $region19: #{generator_forward.9} parent=11 // pred_region
        _
      $region20: #{generator_forward.9} parent=11 // pred_fallthru
        _
    $region12: #{generator_forward.9} parent=5 // pred_fallthru
      _
    %p149 = scmp.lt.s32.totalorder %s9, 2
    // Predicated region
    $region21: #{generator_forward.9} parent=5 // pred_check
      %p150 = pneg %p149
    $region22: #{generator_forward.9} parent=5 // pred_check_branch
      %152 = sbr.rel (%p150) target = $region24
    $region23: #{generator_forward.9} parent=5 // pred_region
      // Predicated region
      $region25: #{generator_forward.9} parent=23 // pred_check
        %p153 = pneg %p43
      $region26: #{generator_forward.9} parent=23 // pred_check_branch
        %155 = sbr.rel (%p153) target = $region28
      $region27: #{generator_forward.9} parent=23 // pred_region
        %s156 = smul.u32 2, %s16
        %p157 = scmp.lt.s32.totalorder %s156, 3
        %s158 = scalar_select %p157, %s156, 3
        %p159 = scmp.lt.s32.totalorder %s17, 0
        %s160 = scalar_select %p159, %s17, 0
        %s161 = sadd.s32 %s160, %s158
        %s162 = smul.addr %s161, 4
        %s163 = scalar_lea.vmem %s0, %s162
        %s164 = smul.u32 2, %s16
      $region28: #{generator_forward.9} parent=23 // pred_fallthru
        _
    $region24: #{generator_forward.9} parent=5 // pred_fallthru
      _
    %p165 = scmp.le.s32.totalorder 1, %s9
    %p166 = scmp.lt.s32.totalorder %s9, 3
    %p167 = pnand %p165, %p166
    %p168 = pneg %p167
    // Predicated region
    $region29: #{generator_forward.9} parent=5 // pred_check
      _
    $region30: #{generator_forward.9} parent=5 // pred_check_branch
      %170 = sbr.rel (%p167) target = $region32
    $region31: #{generator_forward.9} parent=5 // pred_region
      %s171 = ssub.s32 %s9, 1
      %s172 = smul.u32 2, %s18
      %p173 = scmp.lt.s32.totalorder %s172, 3
      %s174 = scalar_select %p173, %s172, 3
      %p175 = scmp.lt.s32.totalorder %s19, 0
      %s176 = scalar_select %p175, %s19, 0
      %s177 = sadd.s32 %s176, %s174
      %s178 = smul.addr %s177, 4
      %s179 = scalar_lea.vmem %s0, %s178
      %p180 = pneg %p49
      %p181 = pneg %p46
      %s182 = smul.u32 16, %s19
      %p183 = scmp.lt.s32.totalorder %s182, 15
      %s184 = scalar_select %p183, %s182, 15
      %s185 = smul.addr %s184, 4
      %s186 = scalar_lea.vmem %s1, %s185
      %p187 = pneg %p75
      %p188 = pneg %p72
      %p189 = pneg %p96
      %p190 = pneg %p93
      %p191 = pneg %p122
      %p192 = pneg %p119
      %s193 = smul.u32 2, %s18
      %p194 = scmp.lt.s32.totalorder %s193, 3
      %s195 = scalar_select %p194, %s193, 3
      %s196 = smul.addr %s195, 8
      %s197 = scalar_lea.vmem %s3, %s196
      %s198 = smul.u32 2, %s18
      %p199 = scmp.lt.s32.totalorder %s198, 3
      %s200 = scalar_select %p199, %s198, 3
      %p201 = scmp.lt.s32.totalorder %s19, 0
      %s202 = scalar_select %p201, %s19, 0
      %s203 = sadd.s32 %s202, %s200
      %s204 = smul.addr %s203, 4
      %s205 = scalar_lea.vmem %s0, %s204
      %s206 = smul.u32 2, %s18
      %s207 = smul.u32 16, %s19
      %p208 = scmp.lt.s32.totalorder %s207, 15
      %s209 = scalar_select %p208, %s207, 15
      %s210 = smul.addr %s209, 4
      %s211 = scalar_lea.vmem %s1, %s210
      %s212 = smul.u32 16, %s19
      %s213 = smul.u32 2, %s18
      %p214 = scmp.lt.s32.totalorder %s213, 3
      %s215 = scalar_select %p214, %s213, 3
      %s216 = smul.addr %s215, 8
      %s217 = scalar_lea.vmem %s3, %s216
      %s218 = smul.u32 2, %s18
      %p220 = scmp.eq.s32.totalorder %s19, 0
      // Predicated region
      $region33: #{generator_forward.9} parent=31 // pred_check
        %p221 = pneg %p220
      $region34: #{generator_forward.9} parent=31 // pred_check_branch
        %223 = sbr.rel (%p221) target = $region36
      $region35: #{generator_forward.9} parent=31 // pred_region
        %224 = vst [vmem:[#allocation2] sm:$0xff] 0.0
        %225 = vst [vmem:[#allocation2 + $0x8] sm:$0xff] 0.0
      $region36: #{generator_forward.9} parent=31 // pred_fallthru
        _
      %v226 = vld [vmem:[#allocation2] sm:$0xff]
      %v227 = vld [vmem:[#allocation2 + $0x8] sm:$0xff]
      %v228 = vld [vmem:[%s205] sm:$0xf]
      %v229 = vld [vmem:[%s205 + $0x4] sm:$0xf]
      %v230 = vld [vmem:[%s211] sm:$0xf]
      %v231 = vld [vmem:[%s211 + $0x4] sm:$0xf]
      %v232 = vld [vmem:[%s211 + $0x8] sm:$0xf]
      %v233 = vld [vmem:[%s211 + $0xc] sm:$0xf]
      %v234 = vld [vmem:[%s211 + $0x10] sm:$0xf]
      %v235 = vld [vmem:[%s211 + $0x14] sm:$0xf]
      %v236 = vld [vmem:[%s211 + $0x18] sm:$0xf]
      %v237 = vld [vmem:[%s211 + $0x1c] sm:$0xf]
      %v238 = vld [vmem:[%s211 + $0x20] sm:$0xf]
      %v239 = vld [vmem:[%s211 + $0x24] sm:$0xf]
      %v240 = vld [vmem:[%s211 + $0x28] sm:$0xf]
      %v241 = vld [vmem:[%s211 + $0x2c] sm:$0xf]
      %v242 = vld [vmem:[%s211 + $0x30] sm:$0xf]
      %v243 = vld [vmem:[%s211 + $0x34] sm:$0xf]
      %v244 = vld [vmem:[%s211 + $0x38] sm:$0xf]
      %v245 = vld [vmem:[%s211 + $0x3c] sm:$0xf]
      %v248 = vunpack.c.l.b16 %v228
      %v249 = vunpack.c.l.b16 %v229
      %v250 = vpack.c.b16 %v249, %v248
      %v268 = vunpack.c.l.b16 %v230
      %v269 = vunpack.c.l.b16 %v231
      %v270 = vunpack.c.l.b16 %v232
      %v271 = vunpack.c.l.b16 %v233
      %v272 = vunpack.c.l.b16 %v234
      %v273 = vunpack.c.l.b16 %v235
      %v274 = vunpack.c.l.b16 %v236
      %v275 = vunpack.c.l.b16 %v237
      %v276 = vunpack.c.l.b16 %v238
      %v277 = vunpack.c.l.b16 %v239
      %v278 = vunpack.c.l.b16 %v240
      %v279 = vunpack.c.l.b16 %v241
      %v280 = vunpack.c.l.b16 %v242
      %v281 = vunpack.c.l.b16 %v243
      %v282 = vunpack.c.l.b16 %v244
      %v283 = vunpack.c.l.b16 %v245
      %v284 = vpack.c.b16 %v269, %v268
      %v285 = vpack.c.b16 %v271, %v270
      %v286 = vpack.c.b16 %v273, %v272
      %v287 = vpack.c.b16 %v275, %v274
      %v288 = vpack.c.b16 %v277, %v276
      %v289 = vpack.c.b16 %v279, %v278
      %v290 = vpack.c.b16 %v281, %v280
      %v291 = vpack.c.b16 %v283, %v282
      %300 = vmatprep.subr.bf16.mxu0 0
      %301 = vmatpush1.bf16.msra.mxu0 %v284
      %302 = vmatprep.subr.bf16.mxu0 0
      %303 = vmatpush1.bf16.msra.mxu0 %v285
      %304 = vmatprep.subr.bf16.mxu0 0
      %305 = vmatpush1.bf16.msra.mxu0 %v286
      %306 = vmatprep.subr.bf16.mxu0 0
      %307 = vmatpush1.bf16.msra.mxu0 %v287
      %308 = vmatprep.subr.bf16.mxu0 0
      %309 = vmatpush1.bf16.msra.mxu0 %v288
      %310 = vmatprep.subr.bf16.mxu0 0
      %311 = vmatpush1.bf16.msra.mxu0 %v289
      %312 = vmatprep.subr.bf16.mxu0 0
      %313 = vmatpush1.bf16.msra.mxu0 %v290
      %314 = vmatprep.subr.bf16.mxu0 0
      %315 = vmatpush1.bf16.msra.mxu0 %v291
      %316 = vmatprep.subr.bf16.mxu0 0
      %317 = vmatpush1.bf16.msra.mxu0 0
      %318 = vmatprep.subr.bf16.mxu0 0
      %319 = vmatpush1.bf16.msra.mxu0 0
      %320 = vmatprep.subr.bf16.mxu0 0
      %321 = vmatpush1.bf16.msra.mxu0 0
      %322 = vmatprep.subr.bf16.mxu0 0
      %323 = vmatpush1.bf16.msra.mxu0 0
      %324 = vmatprep.subr.bf16.mxu0 0
      %325 = vmatpush1.bf16.msra.mxu0 0
      %326 = vmatprep.subr.bf16.mxu0 0
      %327 = vmatpush1.bf16.msra.mxu0 0
      %328 = vmatprep.subr.bf16.mxu0 0
      %329 = vmatpush1.bf16.msra.mxu0 0
      %330 = vmatprep.subr.bf16.mxu0 0
      %331 = vmatpush1.bf16.msra.mxu0 0
      %332 = vmatprep.mubr.bf16.mxu0 0
      %333 = vmatmul.mubr.bf16.gmra.mrb[0].mxu0 %v250
      %v334 = vpop.f32.mrb[0].mxu0
      %v335 = vadd.f32 0.0, %v334
      %v336 = vpop.f32.mrb[0].mxu0
      %v337 = vpop.f32.mrb[0].mxu0
      %v338 = vadd.f32 0.0, %v337
      %v339 = vpop.f32.mrb[0].mxu0
      %340 = vdwg.mxu0
      %v341 = vadd.f32 %v226, %v335
      %v342 = vadd.f32 %v227, %v338
      %343 = vst [vmem:[#allocation2] sm:$0xff] %v341
      %344 = vst [vmem:[#allocation2 + $0x8] sm:$0xff] %v342
      // Predicated region
      $region37: #{generator_forward.9} parent=31 // pred_check
        %p345 = pneg %p220
      $region38: #{generator_forward.9} parent=31 // pred_check_branch
        %347 = sbr.rel (%p345) target = $region40
      $region39: #{generator_forward.9} parent=31 // pred_region
        %v348 = vld [vmem:[#allocation2] sm:$0xff]
        %v349 = vld [vmem:[#allocation2 + $0x8] sm:$0xff]
        %v350 = vld [vmem:[%s2] sm:$0x1]
        %v352 = vlaneseq
        %v353 = vshrl.u32 %v352, 7
        %v354 = vsub.s32 0, %v353
        %v355 = vrot.slane %v350, %v354
        %v357 = vadd.f32 %v348, %v355
        %v358 = vadd.f32 %v349, %v355
        %vm359 = vcmp.gt.f32.partialorder %v357, 0.0
        %vm360 = vcmp.gt.f32.partialorder %v358, 0.0
        %v361 = vmul.f32 %v357, 0.2
        %v362 = vmul.f32 %v358, 0.2
        %v363 = vsel %vm359, %v357, %v361
        %v364 = vsel %vm360, %v358, %v362
        %365 = vst [vmem:[%s217] sm:$0xff] %v363
        %366 = vst [vmem:[%s217 + $0x8] sm:$0xff] %v364
      $region40: #{generator_forward.9} parent=31 // pred_fallthru
        _
      %s367 = smul.u32 2, %s18
      %p368 = scmp.lt.s32.totalorder %s367, 3
      %s369 = scalar_select %p368, %s367, 3
      %s370 = smul.addr %s369, 8
      %s371 = scalar_lea.vmem %s3, %s370
      // Predicated region
      $region41: #{generator_forward.9} parent=31 // pred_check
        %p372 = pneg %p119
      $region42: #{generator_forward.9} parent=31 // pred_check_branch
        %374 = sbr.rel (%p372) target = $region44
      $region43: #{generator_forward.9} parent=31 // pred_region
        %s375 = smul.u32 2, %s18
      $region44: #{generator_forward.9} parent=31 // pred_fallthru
        _
    $region32: #{generator_forward.9} parent=5 // pred_fallthru
      _
    %p376 = scmp.le.s32.totalorder 2, %s9
    // Predicated region
    $region45: #{generator_forward.9} parent=5 // pred_check
      %p377 = pneg %p376
    $region46: #{generator_forward.9} parent=5 // pred_check_branch
      %379 = sbr.rel (%p377) target = $region48
    $region47: #{generator_forward.9} parent=5 // pred_region
      %s380 = ssub.s32 %s9, 2
      // Predicated region
      $region49: #{generator_forward.9} parent=47 // pred_check
        %p381 = pneg %p125
      $region50: #{generator_forward.9} parent=47 // pred_check_branch
        %383 = sbr.rel (%p381) target = $region52
      $region51: #{generator_forward.9} parent=47 // pred_region
        %s384 = smul.u32 2, %s20
        %p385 = scmp.lt.s32.totalorder %s384, 3
        %s386 = scalar_select %p385, %s384, 3
        %s387 = smul.addr %s386, 8
        %s388 = scalar_lea.vmem %s3, %s387
      $region52: #{generator_forward.9} parent=47 // pred_fallthru
        _
    $region48: #{generator_forward.9} parent=5 // pred_fallthru
      _
  $region6: #{generator_forward.9} parent=0 // loop_footer
    %s13 = sadd.s32 1, %s9
  $region7: #{generator_forward.9} parent=0 // loop_footer_branch
    %8 = sbr.rel target = $region3
  $region8: #{generator_forward.9} parent=0 // loop_exit
    _

// kernel: generator_forward.10
$region0: #{generator_forward.10}
  #allocation0 [shape = 'u32[]', space=smem, size = 0x4, offset = 0x4, fixed_abs, tag = 'smem constant byte address 0x4 - core index']
  #allocation1 [shape = 'u32[144,128]{1,0:T(1,128)}', space=vmem, size = 0x12000, scoped, tag = 'internal scratch']
  #allocation2 [shape = 'f32[16,128]{1,0:T(8,128)}', space=vmem, size = 0x2000, scoped, tag = 'scratch operand']
  %s0 = inlined_call_operand.vmem [shape: bf16[16,256], index: 0, kind: input, shape index: {}]
  %s1 = inlined_call_operand.vmem [shape: bf16[256,128], index: 1, kind: input, shape index: {}]
  %s2 = inlined_call_operand.vmem [shape: f32[1,128], index: 2, kind: input, shape index: {}]
  %s3 = inlined_call_operand.vmem [shape: f32[16,128], index: 3, kind: output, shape index: {}]
  %s4 = sld [smem:[#allocation0]]
  $region30: #{generator_forward.10} parent=0
    _
  %s6 = ssub.s32 1, %s4
  %s7 = scalar_select 0, %s6, %s4
  // Predicated region
  $region2: #{generator_forward.10} parent=0 // pred_check
    _
  $region3: #{generator_forward.10} parent=0 // pred_check_branch
    %9 = sbr.rel (0) target = $region5
  $region4: #{generator_forward.10} parent=0 // pred_region
    _
  $region5: #{generator_forward.10} parent=0 // pred_fallthru
    _
  // Predicated region
  $region6: #{generator_forward.10} parent=0 // pred_check
    _
  $region7: #{generator_forward.10} parent=0 // pred_check_branch
    %11 = sbr.rel (0) target = $region9
  $region8: #{generator_forward.10} parent=0 // pred_region
    _
  $region9: #{generator_forward.10} parent=0 // pred_fallthru
    _
  // Predicated region
  $region10: #{generator_forward.10} parent=0 // pred_check
    _
  $region11: #{generator_forward.10} parent=0 // pred_check_branch
    %13 = sbr.rel (0) target = $region13
  $region12: #{generator_forward.10} parent=0 // pred_region
    _
  $region13: #{generator_forward.10} parent=0 // pred_fallthru
    _
  %p15 = scmp.eq.s32.totalorder 0, 0
  // Predicated region
  $region14: #{generator_forward.10} parent=0 // pred_check
    %p16 = pneg %p15
  $region15: #{generator_forward.10} parent=0 // pred_check_branch
    %18 = sbr.rel (%p16) target = $region17
  $region16: #{generator_forward.10} parent=0 // pred_region
    %19 = vst [vmem:[#allocation2] sm:$0xff] 0.0
    %20 = vst [vmem:[#allocation2 + $0x8] sm:$0xff] 0.0
  $region17: #{generator_forward.10} parent=0 // pred_fallthru
    _
  %v21 = vld [vmem:[#allocation2] sm:$0xff]
  %v22 = vld [vmem:[#allocation2 + $0x8] sm:$0xff]
  %v23 = vld [vmem:[%s0] sm:$0xff]
  %v24 = vld [vmem:[%s0 + $0x8] sm:$0xff]
  %v25 = vld [vmem:[%s1] sm:$0xf]
  %v26 = vld [vmem:[%s1 + $0x4] sm:$0xf]
  %v27 = vld [vmem:[%s1 + $0x8] sm:$0xf]
  %v28 = vld [vmem:[%s1 + $0xc] sm:$0xf]
  %v29 = vld [vmem:[%s1 + $0x10] sm:$0xf]
  %v30 = vld [vmem:[%s1 + $0x14] sm:$0xf]
  %v31 = vld [vmem:[%s1 + $0x18] sm:$0xf]
  %v32 = vld [vmem:[%s1 + $0x1c] sm:$0xf]
  %v33 = vld [vmem:[%s1 + $0x20] sm:$0xf]
  %v34 = vld [vmem:[%s1 + $0x24] sm:$0xf]
  %v35 = vld [vmem:[%s1 + $0x28] sm:$0xf]
  %v36 = vld [vmem:[%s1 + $0x2c] sm:$0xf]
  %v37 = vld [vmem:[%s1 + $0x30] sm:$0xf]
  %v38 = vld [vmem:[%s1 + $0x34] sm:$0xf]
  %v39 = vld [vmem:[%s1 + $0x38] sm:$0xf]
  %v40 = vld [vmem:[%s1 + $0x3c] sm:$0xf]
  %v41 = vld [vmem:[%s1 + $0x40] sm:$0xf]
  %v42 = vld [vmem:[%s1 + $0x44] sm:$0xf]
  %v43 = vld [vmem:[%s1 + $0x48] sm:$0xf]
  %v44 = vld [vmem:[%s1 + $0x4c] sm:$0xf]
  %v45 = vld [vmem:[%s1 + $0x50] sm:$0xf]
  %v46 = vld [vmem:[%s1 + $0x54] sm:$0xf]
  %v47 = vld [vmem:[%s1 + $0x58] sm:$0xf]
  %v48 = vld [vmem:[%s1 + $0x5c] sm:$0xf]
  %v49 = vld [vmem:[%s1 + $0x60] sm:$0xf]
  %v50 = vld [vmem:[%s1 + $0x64] sm:$0xf]
  %v51 = vld [vmem:[%s1 + $0x68] sm:$0xf]
  %v52 = vld [vmem:[%s1 + $0x6c] sm:$0xf]
  %v53 = vld [vmem:[%s1 + $0x70] sm:$0xf]
  %v54 = vld [vmem:[%s1 + $0x74] sm:$0xf]
  %v55 = vld [vmem:[%s1 + $0x78] sm:$0xf]
  %v56 = vld [vmem:[%s1 + $0x7c] sm:$0xf]
  %v59 = vunpack.c.l.b16 %v23
  %v60 = vunpack.c.h.b16 %v23
  %v61 = vunpack.c.l.b16 %v24
  %v62 = vunpack.c.h.b16 %v24
  %v63 = vpack.c.b16 %v61, %v59
  %v64 = vpack.c.b16 %v62, %v60
  %v99 = vunpack.c.l.b16 %v25
  %v100 = vunpack.c.l.b16 %v26
  %v101 = vunpack.c.l.b16 %v27
  %v102 = vunpack.c.l.b16 %v28
  %v103 = vunpack.c.l.b16 %v29
  %v104 = vunpack.c.l.b16 %v30
  %v105 = vunpack.c.l.b16 %v31
  %v106 = vunpack.c.l.b16 %v32
  %v107 = vunpack.c.l.b16 %v33
  %v108 = vunpack.c.l.b16 %v34
  %v109 = vunpack.c.l.b16 %v35
  %v110 = vunpack.c.l.b16 %v36
  %v111 = vunpack.c.l.b16 %v37
  %v112 = vunpack.c.l.b16 %v38
  %v113 = vunpack.c.l.b16 %v39
  %v114 = vunpack.c.l.b16 %v40
  %v115 = vunpack.c.l.b16 %v41
  %v116 = vunpack.c.l.b16 %v42
  %v117 = vunpack.c.l.b16 %v43
  %v118 = vunpack.c.l.b16 %v44
  %v119 = vunpack.c.l.b16 %v45
  %v120 = vunpack.c.l.b16 %v46
  %v121 = vunpack.c.l.b16 %v47
  %v122 = vunpack.c.l.b16 %v48
  %v123 = vunpack.c.l.b16 %v49
  %v124 = vunpack.c.l.b16 %v50
  %v125 = vunpack.c.l.b16 %v51
  %v126 = vunpack.c.l.b16 %v52
  %v127 = vunpack.c.l.b16 %v53
  %v128 = vunpack.c.l.b16 %v54
  %v129 = vunpack.c.l.b16 %v55
  %v130 = vunpack.c.l.b16 %v56
  %v131 = vpack.c.b16 %v100, %v99
  %v132 = vpack.c.b16 %v102, %v101
  %v133 = vpack.c.b16 %v104, %v103
  %v134 = vpack.c.b16 %v106, %v105
  %v135 = vpack.c.b16 %v108, %v107
  %v136 = vpack.c.b16 %v110, %v109
  %v137 = vpack.c.b16 %v112, %v111
  %v138 = vpack.c.b16 %v114, %v113
  %v139 = vpack.c.b16 %v116, %v115
  %v140 = vpack.c.b16 %v118, %v117
  %v141 = vpack.c.b16 %v120, %v119
  %v142 = vpack.c.b16 %v122, %v121
  %v143 = vpack.c.b16 %v124, %v123
  %v144 = vpack.c.b16 %v126, %v125
  %v145 = vpack.c.b16 %v128, %v127
  %v146 = vpack.c.b16 %v130, %v129
  %163 = vmatprep.subr.bf16.mxu0 0
  %164 = vmatpush1.bf16.msra.mxu0 %v131
  %165 = vmatprep.subr.bf16.mxu0 0
  %166 = vmatpush1.bf16.msra.mxu0 %v132
  %167 = vmatprep.subr.bf16.mxu0 0
  %168 = vmatpush1.bf16.msra.mxu0 %v133
  %169 = vmatprep.subr.bf16.mxu0 0
  %170 = vmatpush1.bf16.msra.mxu0 %v134
  %171 = vmatprep.subr.bf16.mxu0 0
  %172 = vmatpush1.bf16.msra.mxu0 %v135
  %173 = vmatprep.subr.bf16.mxu0 0
  %174 = vmatpush1.bf16.msra.mxu0 %v136
  %175 = vmatprep.subr.bf16.mxu0 0
  %176 = vmatpush1.bf16.msra.mxu0 %v137
  %177 = vmatprep.subr.bf16.mxu0 0
  %178 = vmatpush1.bf16.msra.mxu0 %v138
  %179 = vmatprep.subr.bf16.mxu0 0
  %180 = vmatpush1.bf16.msra.mxu0 %v139
  %181 = vmatprep.subr.bf16.mxu0 0
  %182 = vmatpush1.bf16.msra.mxu0 %v140
  %183 = vmatprep.subr.bf16.mxu0 0
  %184 = vmatpush1.bf16.msra.mxu0 %v141
  %185 = vmatprep.subr.bf16.mxu0 0
  %186 = vmatpush1.bf16.msra.mxu0 %v142
  %187 = vmatprep.subr.bf16.mxu0 0
  %188 = vmatpush1.bf16.msra.mxu0 %v143
  %189 = vmatprep.subr.bf16.mxu0 0
  %190 = vmatpush1.bf16.msra.mxu0 %v144
  %191 = vmatprep.subr.bf16.mxu0 0
  %192 = vmatpush1.bf16.msra.mxu0 %v145
  %193 = vmatprep.subr.bf16.mxu0 0
  %194 = vmatpush1.bf16.msra.mxu0 %v146
  %195 = vmatprep.mubr.bf16.mxu0 %v64
  %196 = vmatmul.mubr.bf16.gmra.mrb[0].mxu0 %v63
  %v197 = vpop.f32.mrb[0].mxu0
  %v198 = vadd.f32 0.0, %v197
  %v199 = vpop.f32.mrb[0].mxu0
  %v200 = vpop.f32.mrb[0].mxu0
  %v201 = vadd.f32 0.0, %v200
  %v202 = vpop.f32.mrb[0].mxu0
  %203 = vdwg.mxu0
  %v204 = vadd.f32 %v21, %v198
  %v205 = vadd.f32 %v22, %v201
  %206 = vst [vmem:[#allocation2] sm:$0xff] %v204
  %207 = vst [vmem:[#allocation2 + $0x8] sm:$0xff] %v205
  // Predicated region
  $region18: #{generator_forward.10} parent=0 // pred_check
    %p208 = pneg %p15
  $region19: #{generator_forward.10} parent=0 // pred_check_branch
    %210 = sbr.rel (%p208) target = $region21
  $region20: #{generator_forward.10} parent=0 // pred_region
    %v211 = vld [vmem:[#allocation2] sm:$0xff]
    %v212 = vld [vmem:[#allocation2 + $0x8] sm:$0xff]
    %v213 = vld [vmem:[%s2] sm:$0x1]
    %v215 = vlaneseq
    %v216 = vshrl.u32 %v215, 7
    %v217 = vsub.s32 0, %v216
    %v218 = vrot.slane %v213, %v217
    %v220 = vadd.f32 %v211, %v218
    %v221 = vadd.f32 %v212, %v218
    %vm222 = vcmp.gt.f32.partialorder %v220, 0.0
    %vm223 = vcmp.gt.f32.partialorder %v221, 0.0
    %v224 = vmul.f32 %v220, 0.2
    %v225 = vmul.f32 %v221, 0.2
    %v226 = vsel %vm222, %v220, %v224
    %v227 = vsel %vm223, %v221, %v225
    %228 = vst [vmem:[%s3] sm:$0xff] %v226
    %229 = vst [vmem:[%s3 + $0x8] sm:$0xff] %v227
  $region21: #{generator_forward.10} parent=0 // pred_fallthru
    _
  // Predicated region
  $region22: #{generator_forward.10} parent=0 // pred_check
    _
  $region23: #{generator_forward.10} parent=0 // pred_check_branch
    %231 = sbr.rel (0) target = $region25
  $region24: #{generator_forward.10} parent=0 // pred_region
    _
  $region25: #{generator_forward.10} parent=0 // pred_fallthru
    _
  // Predicated region
  $region26: #{generator_forward.10} parent=0 // pred_check
    _
  $region27: #{generator_forward.10} parent=0 // pred_check_branch
    %233 = sbr.rel (0) target = $region29
  $region28: #{generator_forward.10} parent=0 // pred_region
    _
  $region29: #{generator_forward.10} parent=0 // pred_fallthru
    _

// kernel: generator_forward.11
$region0: #{generator_forward.11}
  #allocation0 [shape = 'u32[]', space=smem, size = 0x4, offset = 0x4, fixed_abs, tag = 'smem constant byte address 0x4 - core index']
  #allocation1 [shape = 'u32[144,128]{1,0:T(1,128)}', space=vmem, size = 0x12000, scoped, tag = 'internal scratch']
  #allocation2 [shape = 'f32[16,128]{1,0:T(8,128)}', space=vmem, size = 0x2000, scoped, tag = 'scratch operand']
  %s0 = inlined_call_operand.vmem [shape: bf16[16,512], index: 0, kind: input, shape index: {}]
  %s1 = inlined_call_operand.vmem [shape: bf16[512,128], index: 1, kind: input, shape index: {}]
  %s2 = inlined_call_operand.vmem [shape: f32[1,128], index: 2, kind: input, shape index: {}]
  %s3 = inlined_call_operand.vmem [shape: f32[16,128], index: 3, kind: output, shape index: {}]
  %s4 = sld [smem:[#allocation0]]
  $region30: #{generator_forward.11} parent=0
    _
  %s6 = ssub.s32 1, %s4
  %s7 = scalar_select 0, %s6, %s4
  // Predicated region
  $region2: #{generator_forward.11} parent=0 // pred_check
    _
  $region3: #{generator_forward.11} parent=0 // pred_check_branch
    %9 = sbr.rel (0) target = $region5
  $region4: #{generator_forward.11} parent=0 // pred_region
    _
  $region5: #{generator_forward.11} parent=0 // pred_fallthru
    _
  // Predicated region
  $region6: #{generator_forward.11} parent=0 // pred_check
    _
  $region7: #{generator_forward.11} parent=0 // pred_check_branch
    %11 = sbr.rel (0) target = $region9
  $region8: #{generator_forward.11} parent=0 // pred_region
    _
  $region9: #{generator_forward.11} parent=0 // pred_fallthru
    _
  // Predicated region
  $region10: #{generator_forward.11} parent=0 // pred_check
    _
  $region11: #{generator_forward.11} parent=0 // pred_check_branch
    %13 = sbr.rel (0) target = $region13
  $region12: #{generator_forward.11} parent=0 // pred_region
    _
  $region13: #{generator_forward.11} parent=0 // pred_fallthru
    _
  %p15 = scmp.eq.s32.totalorder 0, 0
  // Predicated region
  $region14: #{generator_forward.11} parent=0 // pred_check
    %p16 = pneg %p15
  $region15: #{generator_forward.11} parent=0 // pred_check_branch
    %18 = sbr.rel (%p16) target = $region17
  $region16: #{generator_forward.11} parent=0 // pred_region
    %19 = vst [vmem:[#allocation2] sm:$0xff] 0.0
    %20 = vst [vmem:[#allocation2 + $0x8] sm:$0xff] 0.0
  $region17: #{generator_forward.11} parent=0 // pred_fallthru
    _
  %v21 = vld [vmem:[#allocation2] sm:$0xff]
  %v22 = vld [vmem:[#allocation2 + $0x8] sm:$0xff]
  %v23 = vld [vmem:[%s0] sm:$0xff]
  %v24 = vld [vmem:[%s0 + $0x8] sm:$0xff]
  %v25 = vld [vmem:[%s0 + $0x10] sm:$0xff]
  %v26 = vld [vmem:[%s0 + $0x18] sm:$0xff]
  %v27 = vld [vmem:[%s1] sm:$0xf]
  %v28 = vld [vmem:[%s1 + $0x4] sm:$0xf]
  %v29 = vld [vmem:[%s1 + $0x8] sm:$0xf]
  %v30 = vld [vmem:[%s1 + $0xc] sm:$0xf]
  %v31 = vld [vmem:[%s1 + $0x10] sm:$0xf]
  %v32 = vld [vmem:[%s1 + $0x14] sm:$0xf]
  %v33 = vld [vmem:[%s1 + $0x18] sm:$0xf]
  %v34 = vld [vmem:[%s1 + $0x1c] sm:$0xf]
  %v35 = vld [vmem:[%s1 + $0x20] sm:$0xf]
  %v36 = vld [vmem:[%s1 + $0x24] sm:$0xf]
  %v37 = vld [vmem:[%s1 + $0x28] sm:$0xf]
  %v38 = vld [vmem:[%s1 + $0x2c] sm:$0xf]
  %v39 = vld [vmem:[%s1 + $0x30] sm:$0xf]
  %v40 = vld [vmem:[%s1 + $0x34] sm:$0xf]
  %v41 = vld [vmem:[%s1 + $0x38] sm:$0xf]
  %v42 = vld [vmem:[%s1 + $0x3c] sm:$0xf]
  %v43 = vld [vmem:[%s1 + $0x40] sm:$0xf]
  %v44 = vld [vmem:[%s1 + $0x44] sm:$0xf]
  %v45 = vld [vmem:[%s1 + $0x48] sm:$0xf]
  %v46 = vld [vmem:[%s1 + $0x4c] sm:$0xf]
  %v47 = vld [vmem:[%s1 + $0x50] sm:$0xf]
  %v48 = vld [vmem:[%s1 + $0x54] sm:$0xf]
  %v49 = vld [vmem:[%s1 + $0x58] sm:$0xf]
  %v50 = vld [vmem:[%s1 + $0x5c] sm:$0xf]
  %v51 = vld [vmem:[%s1 + $0x60] sm:$0xf]
  %v52 = vld [vmem:[%s1 + $0x64] sm:$0xf]
  %v53 = vld [vmem:[%s1 + $0x68] sm:$0xf]
  %v54 = vld [vmem:[%s1 + $0x6c] sm:$0xf]
  %v55 = vld [vmem:[%s1 + $0x70] sm:$0xf]
  %v56 = vld [vmem:[%s1 + $0x74] sm:$0xf]
  %v57 = vld [vmem:[%s1 + $0x78] sm:$0xf]
  %v58 = vld [vmem:[%s1 + $0x7c] sm:$0xf]
  %v59 = vld [vmem:[%s1 + $0x80] sm:$0xf]
  %v60 = vld [vmem:[%s1 + $0x84] sm:$0xf]
  %v61 = vld [vmem:[%s1 + $0x88] sm:$0xf]
  %v62 = vld [vmem:[%s1 + $0x8c] sm:$0xf]
  %v63 = vld [vmem:[%s1 + $0x90] sm:$0xf]
  %v64 = vld [vmem:[%s1 + $0x94] sm:$0xf]
  %v65 = vld [vmem:[%s1 + $0x98] sm:$0xf]
  %v66 = vld [vmem:[%s1 + $0x9c] sm:$0xf]
  %v67 = vld [vmem:[%s1 + $0xa0] sm:$0xf]
  %v68 = vld [vmem:[%s1 + $0xa4] sm:$0xf]
  %v69 = vld [vmem:[%s1 + $0xa8] sm:$0xf]
  %v70 = vld [vmem:[%s1 + $0xac] sm:$0xf]
  %v71 = vld [vmem:[%s1 + $0xb0] sm:$0xf]
  %v72 = vld [vmem:[%s1 + $0xb4] sm:$0xf]
  %v73 = vld [vmem:[%s1 + $0xb8] sm:$0xf]
  %v74 = vld [vmem:[%s1 + $0xbc] sm:$0xf]
  %v75 = vld [vmem:[%s1 + $0xc0] sm:$0xf]
  %v76 = vld [vmem:[%s1 + $0xc4] sm:$0xf]
  %v77 = vld [vmem:[%s1 + $0xc8] sm:$0xf]
  %v78 = vld [vmem:[%s1 + $0xcc] sm:$0xf]
  %v79 = vld [vmem:[%s1 + $0xd0] sm:$0xf]
  %v80 = vld [vmem:[%s1 + $0xd4] sm:$0xf]
  %v81 = vld [vmem:[%s1 + $0xd8] sm:$0xf]
  %v82 = vld [vmem:[%s1 + $0xdc] sm:$0xf]
  %v83 = vld [vmem:[%s1 + $0xe0] sm:$0xf]
  %v84 = vld [vmem:[%s1 + $0xe4] sm:$0xf]
  %v85 = vld [vmem:[%s1 + $0xe8] sm:$0xf]
  %v86 = vld [vmem:[%s1 + $0xec] sm:$0xf]
  %v87 = vld [vmem:[%s1 + $0xf0] sm:$0xf]
  %v88 = vld [vmem:[%s1 + $0xf4] sm:$0xf]
  %v89 = vld [vmem:[%s1 + $0xf8] sm:$0xf]
  %v90 = vld [vmem:[%s1 + $0xfc] sm:$0xf]
  %v95 = vunpack.c.l.b16 %v23
  %v96 = vunpack.c.h.b16 %v23
  %v97 = vunpack.c.l.b16 %v24
  %v98 = vunpack.c.h.b16 %v24
  %v99 = vunpack.c.l.b16 %v25
  %v100 = vunpack.c.h.b16 %v25
  %v101 = vunpack.c.l.b16 %v26
  %v102 = vunpack.c.h.b16 %v26
  %v103 = vpack.c.b16 %v99, %v95
  %v104 = vpack.c.b16 %v100, %v96
  %v105 = vpack.c.b16 %v101, %v97
  %v106 = vpack.c.b16 %v102, %v98
  %v175 = vunpack.c.l.b16 %v27
  %v176 = vunpack.c.l.b16 %v28
  %v177 = vunpack.c.l.b16 %v29
  %v178 = vunpack.c.l.b16 %v30
  %v179 = vunpack.c.l.b16 %v31
  %v180 = vunpack.c.l.b16 %v32
  %v181 = vunpack.c.l.b16 %v33
  %v182 = vunpack.c.l.b16 %v34
  %v183 = vunpack.c.l.b16 %v35
  %v184 = vunpack.c.l.b16 %v36
  %v185 = vunpack.c.l.b16 %v37
  %v186 = vunpack.c.l.b16 %v38
  %v187 = vunpack.c.l.b16 %v39
  %v188 = vunpack.c.l.b16 %v40
  %v189 = vunpack.c.l.b16 %v41
  %v190 = vunpack.c.l.b16 %v42
  %v191 = vunpack.c.l.b16 %v43
  %v192 = vunpack.c.l.b16 %v44
  %v193 = vunpack.c.l.b16 %v45
  %v194 = vunpack.c.l.b16 %v46
  %v195 = vunpack.c.l.b16 %v47
  %v196 = vunpack.c.l.b16 %v48
  %v197 = vunpack.c.l.b16 %v49
  %v198 = vunpack.c.l.b16 %v50
  %v199 = vunpack.c.l.b16 %v51
  %v200 = vunpack.c.l.b16 %v52
  %v201 = vunpack.c.l.b16 %v53
  %v202 = vunpack.c.l.b16 %v54
  %v203 = vunpack.c.l.b16 %v55
  %v204 = vunpack.c.l.b16 %v56
  %v205 = vunpack.c.l.b16 %v57
  %v206 = vunpack.c.l.b16 %v58
  %v207 = vunpack.c.l.b16 %v59
  %v208 = vunpack.c.l.b16 %v60
  %v209 = vunpack.c.l.b16 %v61
  %v210 = vunpack.c.l.b16 %v62
  %v211 = vunpack.c.l.b16 %v63
  %v212 = vunpack.c.l.b16 %v64
  %v213 = vunpack.c.l.b16 %v65
  %v214 = vunpack.c.l.b16 %v66
  %v215 = vunpack.c.l.b16 %v67
  %v216 = vunpack.c.l.b16 %v68
  %v217 = vunpack.c.l.b16 %v69
  %v218 = vunpack.c.l.b16 %v70
  %v219 = vunpack.c.l.b16 %v71
  %v220 = vunpack.c.l.b16 %v72
  %v221 = vunpack.c.l.b16 %v73
  %v222 = vunpack.c.l.b16 %v74
  %v223 = vunpack.c.l.b16 %v75
  %v224 = vunpack.c.l.b16 %v76
  %v225 = vunpack.c.l.b16 %v77
  %v226 = vunpack.c.l.b16 %v78
  %v227 = vunpack.c.l.b16 %v79
  %v228 = vunpack.c.l.b16 %v80
  %v229 = vunpack.c.l.b16 %v81
  %v230 = vunpack.c.l.b16 %v82
  %v231 = vunpack.c.l.b16 %v83
  %v232 = vunpack.c.l.b16 %v84
  %v233 = vunpack.c.l.b16 %v85
  %v234 = vunpack.c.l.b16 %v86
  %v235 = vunpack.c.l.b16 %v87
  %v236 = vunpack.c.l.b16 %v88
  %v237 = vunpack.c.l.b16 %v89
  %v238 = vunpack.c.l.b16 %v90
  %v239 = vpack.c.b16 %v176, %v175
  %v240 = vpack.c.b16 %v178, %v177
  %v241 = vpack.c.b16 %v180, %v179
  %v242 = vpack.c.b16 %v182, %v181
  %v243 = vpack.c.b16 %v184, %v183
  %v244 = vpack.c.b16 %v186, %v185
  %v245 = vpack.c.b16 %v188, %v187
  %v246 = vpack.c.b16 %v190, %v189
  %v247 = vpack.c.b16 %v192, %v191
  %v248 = vpack.c.b16 %v194, %v193
  %v249 = vpack.c.b16 %v196, %v195
  %v250 = vpack.c.b16 %v198, %v197
  %v251 = vpack.c.b16 %v200, %v199
  %v252 = vpack.c.b16 %v202, %v201
  %v253 = vpack.c.b16 %v204, %v203
  %v254 = vpack.c.b16 %v206, %v205
  %v255 = vpack.c.b16 %v208, %v207
  %v256 = vpack.c.b16 %v210, %v209
  %v257 = vpack.c.b16 %v212, %v211
  %v258 = vpack.c.b16 %v214, %v213
  %v259 = vpack.c.b16 %v216, %v215
  %v260 = vpack.c.b16 %v218, %v217
  %v261 = vpack.c.b16 %v220, %v219
  %v262 = vpack.c.b16 %v222, %v221
  %v263 = vpack.c.b16 %v224, %v223
  %v264 = vpack.c.b16 %v226, %v225
  %v265 = vpack.c.b16 %v228, %v227
  %v266 = vpack.c.b16 %v230, %v229
  %v267 = vpack.c.b16 %v232, %v231
  %v268 = vpack.c.b16 %v234, %v233
  %v269 = vpack.c.b16 %v236, %v235
  %v270 = vpack.c.b16 %v238, %v237
  %303 = vmatprep.subr.bf16.mxu0 0
  %304 = vmatpush1.bf16.msra.mxu0 %v239
  %305 = vmatprep.subr.bf16.mxu0 0
  %306 = vmatpush1.bf16.msra.mxu0 %v240
  %307 = vmatprep.subr.bf16.mxu0 0
  %308 = vmatpush1.bf16.msra.mxu0 %v241
  %309 = vmatprep.subr.bf16.mxu0 0
  %310 = vmatpush1.bf16.msra.mxu0 %v242
  %311 = vmatprep.subr.bf16.mxu0 0
  %312 = vmatpush1.bf16.msra.mxu0 %v243
  %313 = vmatprep.subr.bf16.mxu0 0
  %314 = vmatpush1.bf16.msra.mxu0 %v244
  %315 = vmatprep.subr.bf16.mxu0 0
  %316 = vmatpush1.bf16.msra.mxu0 %v245
  %317 = vmatprep.subr.bf16.mxu0 0
  %318 = vmatpush1.bf16.msra.mxu0 %v246
  %319 = vmatprep.subr.bf16.mxu0 0
  %320 = vmatpush1.bf16.msra.mxu0 %v247
  %321 = vmatprep.subr.bf16.mxu0 0
  %322 = vmatpush1.bf16.msra.mxu0 %v248
  %323 = vmatprep.subr.bf16.mxu0 0
  %324 = vmatpush1.bf16.msra.mxu0 %v249
  %325 = vmatprep.subr.bf16.mxu0 0
  %326 = vmatpush1.bf16.msra.mxu0 %v250
  %327 = vmatprep.subr.bf16.mxu0 0
  %328 = vmatpush1.bf16.msra.mxu0 %v251
  %329 = vmatprep.subr.bf16.mxu0 0
  %330 = vmatpush1.bf16.msra.mxu0 %v252
  %331 = vmatprep.subr.bf16.mxu0 0
  %332 = vmatpush1.bf16.msra.mxu0 %v253
  %333 = vmatprep.subr.bf16.mxu0 0
  %334 = vmatpush1.bf16.msra.mxu0 %v254
  %335 = vmatprep.mubr.bf16.mxu0 %v104
  %336 = vmatmul.mubr.bf16.gmra.mrb[0].mxu0 %v103
  %v337 = vpop.f32.mrb[0].mxu0
  %v338 = vadd.f32 0.0, %v337
  %v339 = vpop.f32.mrb[0].mxu0
  %v340 = vpop.f32.mrb[0].mxu0
  %v341 = vadd.f32 0.0, %v340
  %v342 = vpop.f32.mrb[0].mxu0
  %343 = vdwg.mxu0
  %344 = vmatprep.subr.bf16.mxu0 0
  %345 = vmatpush1.bf16.msra.mxu0 %v255
  %346 = vmatprep.subr.bf16.mxu0 0
  %347 = vmatpush1.bf16.msra.mxu0 %v256
  %348 = vmatprep.subr.bf16.mxu0 0
  %349 = vmatpush1.bf16.msra.mxu0 %v257
  %350 = vmatprep.subr.bf16.mxu0 0
  %351 = vmatpush1.bf16.msra.mxu0 %v258
  %352 = vmatprep.subr.bf16.mxu0 0
  %353 = vmatpush1.bf16.msra.mxu0 %v259
  %354 = vmatprep.subr.bf16.mxu0 0
  %355 = vmatpush1.bf16.msra.mxu0 %v260
  %356 = vmatprep.subr.bf16.mxu0 0
  %357 = vmatpush1.bf16.msra.mxu0 %v261
  %358 = vmatprep.subr.bf16.mxu0 0
  %359 = vmatpush1.bf16.msra.mxu0 %v262
  %360 = vmatprep.subr.bf16.mxu0 0
  %361 = vmatpush1.bf16.msra.mxu0 %v263
  %362 = vmatprep.subr.bf16.mxu0 0
  %363 = vmatpush1.bf16.msra.mxu0 %v264
  %364 = vmatprep.subr.bf16.mxu0 0
  %365 = vmatpush1.bf16.msra.mxu0 %v265
  %366 = vmatprep.subr.bf16.mxu0 0
  %367 = vmatpush1.bf16.msra.mxu0 %v266
  %368 = vmatprep.subr.bf16.mxu0 0
  %369 = vmatpush1.bf16.msra.mxu0 %v267
  %370 = vmatprep.subr.bf16.mxu0 0
  %371 = vmatpush1.bf16.msra.mxu0 %v268
  %372 = vmatprep.subr.bf16.mxu0 0
  %373 = vmatpush1.bf16.msra.mxu0 %v269
  %374 = vmatprep.subr.bf16.mxu0 0
  %375 = vmatpush1.bf16.msra.mxu0 %v270
  %376 = vmatprep.mubr.bf16.mxu0 %v106
  %377 = vmatmul.mubr.bf16.gmra.mrb[0].mxu0 %v105
  %v378 = vpop.f32.mrb[0].mxu0
  %v379 = vadd.f32 %v338, %v378
  %v380 = vpop.f32.mrb[0].mxu0
  %v381 = vpop.f32.mrb[0].mxu0
  %v382 = vadd.f32 %v341, %v381
  %v383 = vpop.f32.mrb[0].mxu0
  %384 = vdwg.mxu0
  %v385 = vadd.f32 %v21, %v379
  %v386 = vadd.f32 %v22, %v382
  %387 = vst [vmem:[#allocation2] sm:$0xff] %v385
  %388 = vst [vmem:[#allocation2 + $0x8] sm:$0xff] %v386
  // Predicated region
  $region18: #{generator_forward.11} parent=0 // pred_check
    %p389 = pneg %p15
  $region19: #{generator_forward.11} parent=0 // pred_check_branch
    %391 = sbr.rel (%p389) target = $region21
  $region20: #{generator_forward.11} parent=0 // pred_region
    %v392 = vld [vmem:[#allocation2] sm:$0xff]
    %v393 = vld [vmem:[#allocation2 + $0x8] sm:$0xff]
    %v394 = vld [vmem:[%s2] sm:$0x1]
    %v396 = vlaneseq
    %v397 = vshrl.u32 %v396, 7
    %v398 = vsub.s32 0, %v397
    %v399 = vrot.slane %v394, %v398
    %v401 = vadd.f32 %v392, %v399
    %v402 = vadd.f32 %v393, %v399
    %v403 = vmax.f32 %v401, 0.0
    %v404 = vmax.f32 %v402, 0.0
    %405 = vst [vmem:[%s3] sm:$0xff] %v403
    %406 = vst [vmem:[%s3 + $0x8] sm:$0xff] %v404
  $region21: #{generator_forward.11} parent=0 // pred_fallthru
    _
  // Predicated region
  $region22: #{generator_forward.11} parent=0 // pred_check
    _
  $region23: #{generator_forward.11} parent=0 // pred_check_branch
    %408 = sbr.rel (0) target = $region25
  $region24: #{generator_forward.11} parent=0 // pred_region
    _
  $region25: #{generator_forward.11} parent=0 // pred_fallthru
    _
  // Predicated region
  $region26: #{generator_forward.11} parent=0 // pred_check
    _
  $region27: #{generator_forward.11} parent=0 // pred_check_branch
    %410 = sbr.rel (0) target = $region29
  $region28: #{generator_forward.11} parent=0 // pred_region
    _
  $region29: #{generator_forward.11} parent=0 // pred_fallthru
    _

// kernel: tile.43
$region0: #{tile.43}
  #allocation0 [shape = 's32[1]{0}', space=sflag, size = 0x4, scoped, tag = 'scoped memory for tile.43']
  %s0 = inlined_call_operand.vmem [shape: f32[32], index: 0, kind: input, shape index: {}]
  %s1 = inlined_call_operand.vmem [shape: f32[4,32], index: 1, kind: output, shape index: {}]
  // Predicated region
  $region2: #{tile.43} parent=0 // pred_check
    _
  $region3: #{tile.43} parent=0 // pred_check_branch
    %3 = sbr.rel (0) target = $region5
  $region4: #{tile.43} parent=0 // pred_region
    _
  $region5: #{tile.43} parent=0 // pred_fallthru
    _
  %v4 = vld [vmem:[%s0] ss:$0 sm:$0xff]
  %5 = vst [vmem:[%s1] sm:$0xf] %v4

// kernel: mul.49
$region0: #{mul.49}
  %s0 = inlined_call_operand.vmem [shape: f32[4,32], index: 0, kind: input, shape index: {}]
  %s1 = inlined_call_operand.vmem [shape: f32[128], index: 1, kind: output, shape index: {}]
  $region1: #{mul.49} parent=0
    #allocation0 [shape = 'u8[4096]{0}', space=vmem, size = 0x1000, scoped, tag = 'scoped mem for output reshape']
    #allocation1 [shape = 'u8[4096]{0}', space=vmem, size = 0x1000, scoped, tag = 'scoped mem for input reshape']
    %s3 = sshllo.u32 0, 4
    %v4 = vld [vmem:[%s0] sm:%s3]
    %5 = vst [vmem:[#allocation1] sm:%s3] %v4
    %v6 = vld [vmem:[#allocation1] sm:$0x1]
    %vm7 = vcmask 261120
    %8 = vst.msk [vmem:[#allocation0] sm:$0x1] %vm7, %v6
    %s9 = scalar_lea.vmem [#allocation1], 3
    %v10 = vld [vmem:[%s9] sm:$0x1]
    %11 = vrot.lane.b32.xlu0 %v10, 96
    %v12 = vpop.permute.xlu0 %11
    %vm13 = vcmask 1048320
    %14 = vst.msk [vmem:[#allocation0] sm:$0x1] %vm13, %v12
    %s15 = scalar_lea.vmem [#allocation1], 2
    %v16 = vld [vmem:[%s15] sm:$0x1]
    %17 = vrot.lane.b32.xlu0 %v16, 64
    %v18 = vpop.permute.xlu0 %17
    %vm19 = vcmask 785920
    %20 = vst.msk [vmem:[#allocation0] sm:$0x1] %vm19, %v18
    %s21 = scalar_lea.vmem [#allocation1], 1
    %v22 = vld [vmem:[%s21] sm:$0x1]
    %23 = vrot.lane.b32.xlu0 %v22, 32
    %v24 = vpop.permute.xlu0 %23
    %vm25 = vcmask 523520
    %26 = vst.msk [vmem:[#allocation0] sm:$0x1] %vm25, %v24
    %s28 = sshllo.u32 0, 1
    %v30 = vld [vmem:[#allocation0] sm:%s28]
    %s31 = sshllo.u32 0, 1
    %32 = vst [vmem:[%s1] sm:%s31] %v30

// kernel: tile.49
$region0: #{tile.49}
  %s0 = inlined_call_operand.vmem [shape: f32[4,32], index: 0, kind: input, shape index: {}]
  %s1 = inlined_call_operand.vmem [shape: f32[1,128], index: 1, kind: output, shape index: {}]
  $region1: #{tile.49} parent=0
    #allocation0 [shape = 'u8[4096]{0}', space=vmem, size = 0x1000, scoped, tag = 'scoped mem for output reshape']
    #allocation1 [shape = 'u8[4096]{0}', space=vmem, size = 0x1000, scoped, tag = 'scoped mem for input reshape']
    %s3 = sshllo.u32 0, 4
    %v4 = vld [vmem:[%s0] sm:%s3]
    %5 = vst [vmem:[#allocation1] sm:%s3] %v4
    %v6 = vld [vmem:[#allocation1] sm:$0x1]
    %vm7 = vcmask 261120
    %8 = vst.msk [vmem:[#allocation0] sm:$0x1] %vm7, %v6
    %s9 = scalar_lea.vmem [#allocation1], 3
    %v10 = vld [vmem:[%s9] sm:$0x1]
    %11 = vrot.lane.b32.xlu0 %v10, 96
    %v12 = vpop.permute.xlu0 %11
    %vm13 = vcmask 1048320
    %14 = vst.msk [vmem:[#allocation0] sm:$0x1] %vm13, %v12
    %s15 = scalar_lea.vmem [#allocation1], 2
    %v16 = vld [vmem:[%s15] sm:$0x1]
    %17 = vrot.lane.b32.xlu0 %v16, 64
    %v18 = vpop.permute.xlu0 %17
    %vm19 = vcmask 785920
    %20 = vst.msk [vmem:[#allocation0] sm:$0x1] %vm19, %v18
    %s21 = scalar_lea.vmem [#allocation1], 1
    %v22 = vld [vmem:[%s21] sm:$0x1]
    %23 = vrot.lane.b32.xlu0 %v22, 32
    %v24 = vpop.permute.xlu0 %23
    %vm25 = vcmask 523520
    %26 = vst.msk [vmem:[#allocation0] sm:$0x1] %vm25, %v24
    %s28 = sshllo.u32 0, 1
    %v30 = vld [vmem:[#allocation0] sm:%s28]
    %s31 = sshllo.u32 0, 1
    %32 = vst [vmem:[%s1] sm:%s31] %v30

// kernel: generator_forward.12
$region0: #{generator_forward.12}
  #allocation0 [shape = 'u32[]', space=smem, size = 0x4, offset = 0x4, fixed_abs, tag = 'smem constant byte address 0x4 - core index']
  #allocation1 [shape = 'u32[144,128]{1,0:T(1,128)}', space=vmem, size = 0x12000, scoped, tag = 'internal scratch']
  #allocation2 [shape = 'f32[16,128]{1,0:T(8,128)}', space=vmem, size = 0x2000, scoped, tag = 'scratch operand']
  %s0 = inlined_call_operand.vmem [shape: bf16[16,128], index: 0, kind: input, shape index: {}]
  %s1 = inlined_call_operand.vmem [shape: bf16[128,128], index: 1, kind: input, shape index: {}]
  %s2 = inlined_call_operand.vmem [shape: f32[1,128], index: 2, kind: input, shape index: {}]
  %s3 = inlined_call_operand.vmem [shape: f32[16,128], index: 3, kind: output, shape index: {}]
  %s4 = sld [smem:[#allocation0]]
  $region30: #{generator_forward.12} parent=0
    _
  %s6 = ssub.s32 1, %s4
  %s7 = scalar_select 0, %s6, %s4
  // Predicated region
  $region2: #{generator_forward.12} parent=0 // pred_check
    _
  $region3: #{generator_forward.12} parent=0 // pred_check_branch
    %9 = sbr.rel (0) target = $region5
  $region4: #{generator_forward.12} parent=0 // pred_region
    _
  $region5: #{generator_forward.12} parent=0 // pred_fallthru
    _
  // Predicated region
  $region6: #{generator_forward.12} parent=0 // pred_check
    _
  $region7: #{generator_forward.12} parent=0 // pred_check_branch
    %11 = sbr.rel (0) target = $region9
  $region8: #{generator_forward.12} parent=0 // pred_region
    _
  $region9: #{generator_forward.12} parent=0 // pred_fallthru
    _
  // Predicated region
  $region10: #{generator_forward.12} parent=0 // pred_check
    _
  $region11: #{generator_forward.12} parent=0 // pred_check_branch
    %13 = sbr.rel (0) target = $region13
  $region12: #{generator_forward.12} parent=0 // pred_region
    _
  $region13: #{generator_forward.12} parent=0 // pred_fallthru
    _
  %p15 = scmp.eq.s32.totalorder 0, 0
  // Predicated region
  $region14: #{generator_forward.12} parent=0 // pred_check
    %p16 = pneg %p15
  $region15: #{generator_forward.12} parent=0 // pred_check_branch
    %18 = sbr.rel (%p16) target = $region17
  $region16: #{generator_forward.12} parent=0 // pred_region
    %19 = vst [vmem:[#allocation2] sm:$0xff] 0.0
    %20 = vst [vmem:[#allocation2 + $0x8] sm:$0xff] 0.0
  $region17: #{generator_forward.12} parent=0 // pred_fallthru
    _
  %v21 = vld [vmem:[#allocation2] sm:$0xff]
  %v22 = vld [vmem:[#allocation2 + $0x8] sm:$0xff]
  %v23 = vld [vmem:[%s0] sm:$0xf]
  %v24 = vld [vmem:[%s0 + $0x4] sm:$0xf]
  %v25 = vld [vmem:[%s1] sm:$0xf]
  %v26 = vld [vmem:[%s1 + $0x4] sm:$0xf]
  %v27 = vld [vmem:[%s1 + $0x8] sm:$0xf]
  %v28 = vld [vmem:[%s1 + $0xc] sm:$0xf]
  %v29 = vld [vmem:[%s1 + $0x10] sm:$0xf]
  %v30 = vld [vmem:[%s1 + $0x14] sm:$0xf]
  %v31 = vld [vmem:[%s1 + $0x18] sm:$0xf]
  %v32 = vld [vmem:[%s1 + $0x1c] sm:$0xf]
  %v33 = vld [vmem:[%s1 + $0x20] sm:$0xf]
  %v34 = vld [vmem:[%s1 + $0x24] sm:$0xf]
  %v35 = vld [vmem:[%s1 + $0x28] sm:$0xf]
  %v36 = vld [vmem:[%s1 + $0x2c] sm:$0xf]
  %v37 = vld [vmem:[%s1 + $0x30] sm:$0xf]
  %v38 = vld [vmem:[%s1 + $0x34] sm:$0xf]
  %v39 = vld [vmem:[%s1 + $0x38] sm:$0xf]
  %v40 = vld [vmem:[%s1 + $0x3c] sm:$0xf]
  %v43 = vunpack.c.l.b16 %v23
  %v44 = vunpack.c.l.b16 %v24
  %v45 = vpack.c.b16 %v44, %v43
  %v63 = vunpack.c.l.b16 %v25
  %v64 = vunpack.c.l.b16 %v26
  %v65 = vunpack.c.l.b16 %v27
  %v66 = vunpack.c.l.b16 %v28
  %v67 = vunpack.c.l.b16 %v29
  %v68 = vunpack.c.l.b16 %v30
  %v69 = vunpack.c.l.b16 %v31
  %v70 = vunpack.c.l.b16 %v32
  %v71 = vunpack.c.l.b16 %v33
  %v72 = vunpack.c.l.b16 %v34
  %v73 = vunpack.c.l.b16 %v35
  %v74 = vunpack.c.l.b16 %v36
  %v75 = vunpack.c.l.b16 %v37
  %v76 = vunpack.c.l.b16 %v38
  %v77 = vunpack.c.l.b16 %v39
  %v78 = vunpack.c.l.b16 %v40
  %v79 = vpack.c.b16 %v64, %v63
  %v80 = vpack.c.b16 %v66, %v65
  %v81 = vpack.c.b16 %v68, %v67
  %v82 = vpack.c.b16 %v70, %v69
  %v83 = vpack.c.b16 %v72, %v71
  %v84 = vpack.c.b16 %v74, %v73
  %v85 = vpack.c.b16 %v76, %v75
  %v86 = vpack.c.b16 %v78, %v77
  %95 = vmatprep.subr.bf16.mxu0 0
  %96 = vmatpush1.bf16.msra.mxu0 %v79
  %97 = vmatprep.subr.bf16.mxu0 0
  %98 = vmatpush1.bf16.msra.mxu0 %v80
  %99 = vmatprep.subr.bf16.mxu0 0
  %100 = vmatpush1.bf16.msra.mxu0 %v81
  %101 = vmatprep.subr.bf16.mxu0 0
  %102 = vmatpush1.bf16.msra.mxu0 %v82
  %103 = vmatprep.subr.bf16.mxu0 0
  %104 = vmatpush1.bf16.msra.mxu0 %v83
  %105 = vmatprep.subr.bf16.mxu0 0
  %106 = vmatpush1.bf16.msra.mxu0 %v84
  %107 = vmatprep.subr.bf16.mxu0 0
  %108 = vmatpush1.bf16.msra.mxu0 %v85
  %109 = vmatprep.subr.bf16.mxu0 0
  %110 = vmatpush1.bf16.msra.mxu0 %v86
  %111 = vmatprep.subr.bf16.mxu0 0
  %112 = vmatpush1.bf16.msra.mxu0 0
  %113 = vmatprep.subr.bf16.mxu0 0
  %114 = vmatpush1.bf16.msra.mxu0 0
  %115 = vmatprep.subr.bf16.mxu0 0
  %116 = vmatpush1.bf16.msra.mxu0 0
  %117 = vmatprep.subr.bf16.mxu0 0
  %118 = vmatpush1.bf16.msra.mxu0 0
  %119 = vmatprep.subr.bf16.mxu0 0
  %120 = vmatpush1.bf16.msra.mxu0 0
  %121 = vmatprep.subr.bf16.mxu0 0
  %122 = vmatpush1.bf16.msra.mxu0 0
  %123 = vmatprep.subr.bf16.mxu0 0
  %124 = vmatpush1.bf16.msra.mxu0 0
  %125 = vmatprep.subr.bf16.mxu0 0
  %126 = vmatpush1.bf16.msra.mxu0 0
  %127 = vmatprep.mubr.bf16.mxu0 0
  %128 = vmatmul.mubr.bf16.gmra.mrb[0].mxu0 %v45
  %v129 = vpop.f32.mrb[0].mxu0
  %v130 = vadd.f32 0.0, %v129
  %v131 = vpop.f32.mrb[0].mxu0
  %v132 = vpop.f32.mrb[0].mxu0
  %v133 = vadd.f32 0.0, %v132
  %v134 = vpop.f32.mrb[0].mxu0
  %135 = vdwg.mxu0
  %v136 = vadd.f32 %v21, %v130
  %v137 = vadd.f32 %v22, %v133
  %138 = vst [vmem:[#allocation2] sm:$0xff] %v136
  %139 = vst [vmem:[#allocation2 + $0x8] sm:$0xff] %v137
  // Predicated region
  $region18: #{generator_forward.12} parent=0 // pred_check
    %p140 = pneg %p15
  $region19: #{generator_forward.12} parent=0 // pred_check_branch
    %142 = sbr.rel (%p140) target = $region21
  $region20: #{generator_forward.12} parent=0 // pred_region
    %v143 = vld [vmem:[#allocation2] sm:$0xff]
    %v144 = vld [vmem:[#allocation2 + $0x8] sm:$0xff]
    %v145 = vld [vmem:[%s2] sm:$0x1]
    %v147 = vlaneseq
    %v148 = vshrl.u32 %v147, 7
    %v149 = vsub.s32 0, %v148
    %v150 = vrot.slane %v145, %v149
    %v152 = vadd.f32 %v143, %v150
    %v153 = vadd.f32 %v144, %v150
    %v154 = vmax.f32 %v152, 0.0
    %v155 = vmax.f32 %v153, 0.0
    %156 = vst [vmem:[%s3] sm:$0xff] %v154
    %157 = vst [vmem:[%s3 + $0x8] sm:$0xff] %v155
  $region21: #{generator_forward.12} parent=0 // pred_fallthru
    _
  // Predicated region
  $region22: #{generator_forward.12} parent=0 // pred_check
    _
  $region23: #{generator_forward.12} parent=0 // pred_check_branch
    %159 = sbr.rel (0) target = $region25
  $region24: #{generator_forward.12} parent=0 // pred_region
    _
  $region25: #{generator_forward.12} parent=0 // pred_fallthru
    _
  // Predicated region
  $region26: #{generator_forward.12} parent=0 // pred_check
    _
  $region27: #{generator_forward.12} parent=0 // pred_check_branch
    %161 = sbr.rel (0) target = $region29
  $region28: #{generator_forward.12} parent=0 // pred_region
    _
  $region29: #{generator_forward.12} parent=0 // pred_fallthru
    _

// kernel: tile.53
$region0: #{tile.53}
  #allocation0 [shape = 's32[1]{0}', space=sflag, size = 0x4, scoped, tag = 'scoped memory for tile.53']
  %s0 = inlined_call_operand.vmem [shape: f32[16], index: 0, kind: input, shape index: {}]
  %s1 = inlined_call_operand.vmem [shape: f32[4,16], index: 1, kind: output, shape index: {}]
  // Predicated region
  $region2: #{tile.53} parent=0 // pred_check
    _
  $region3: #{tile.53} parent=0 // pred_check_branch
    %3 = sbr.rel (0) target = $region5
  $region4: #{tile.53} parent=0 // pred_region
    _
  $region5: #{tile.53} parent=0 // pred_fallthru
    _
  %v4 = vld [vmem:[%s0] ss:$0 sm:$0xff]
  %5 = vst [vmem:[%s1] sm:$0xf] %v4

// kernel: mul.53
$region0: #{mul.53}
  %s0 = inlined_call_operand.vmem [shape: f32[4,16], index: 0, kind: input, shape index: {}]
  %s1 = inlined_call_operand.vmem [shape: f32[64], index: 1, kind: output, shape index: {}]
  $region1: #{mul.53} parent=0
    #allocation0 [shape = 'u8[4096]{0}', space=vmem, size = 0x1000, scoped, tag = 'scoped mem for output reshape']
    #allocation1 [shape = 'u8[4096]{0}', space=vmem, size = 0x1000, scoped, tag = 'scoped mem for input reshape']
    %s3 = sshllo.u32 0, 4
    %v4 = vld [vmem:[%s0] sm:%s3]
    %5 = vst [vmem:[#allocation1] sm:%s3] %v4
    %v6 = vld [vmem:[#allocation1] sm:$0x1]
    %vm7 = vcmask 130048
    %8 = vst.msk [vmem:[#allocation0] sm:$0x1] %vm7, %v6
    %s9 = scalar_lea.vmem [#allocation1], 3
    %v10 = vld [vmem:[%s9] sm:$0x1]
    %11 = vrot.lane.b32.xlu0 %v10, 48
    %v12 = vpop.permute.xlu0 %11
    %vm13 = vcmask 523648
    %14 = vst.msk [vmem:[#allocation0] sm:$0x1] %vm13, %v12
    %s15 = scalar_lea.vmem [#allocation1], 2
    %v16 = vld [vmem:[%s15] sm:$0x1]
    %17 = vrot.lane.b32.xlu0 %v16, 32
    %v18 = vpop.permute.xlu0 %17
    %vm19 = vcmask 392448
    %20 = vst.msk [vmem:[#allocation0] sm:$0x1] %vm19, %v18
    %s21 = scalar_lea.vmem [#allocation1], 1
    %v22 = vld [vmem:[%s21] sm:$0x1]
    %23 = vrot.lane.b32.xlu0 %v22, 16
    %v24 = vpop.permute.xlu0 %23
    %vm25 = vcmask 261248
    %26 = vst.msk [vmem:[#allocation0] sm:$0x1] %vm25, %v24
    %s28 = sshllo.u32 0, 1
    %v30 = vld [vmem:[#allocation0] sm:%s28]
    %s31 = sshllo.u32 0, 1
    %32 = vst [vmem:[%s1] sm:%s31] %v30

// kernel: generator_forward.13
$region0: #{generator_forward.13}
  #allocation0 [shape = 'u32[]', space=smem, size = 0x4, offset = 0x4, fixed_abs, tag = 'smem constant byte address 0x4 - core index']
  #allocation1 [shape = 'u32[144,128]{1,0:T(1,128)}', space=vmem, size = 0x12000, scoped, tag = 'internal scratch']
  #allocation2 [shape = 'f32[32,128]{1,0:T(8,128)}', space=vmem, size = 0x4000, scoped, tag = 'scratch operand']
  %s0 = inlined_call_operand.vmem [shape: bf16[32,256], index: 0, kind: input, shape index: {}]
  %s1 = inlined_call_operand.vmem [shape: bf16[256,128], index: 1, kind: input, shape index: {}]
  %s2 = inlined_call_operand.vmem [shape: f32[1,128], index: 2, kind: input, shape index: {}]
  %s3 = inlined_call_operand.vmem [shape: f32[32,128], index: 3, kind: output, shape index: {}]
  %s4 = sld [smem:[#allocation0]]
  $region30: #{generator_forward.13} parent=0
    _
  %s6 = ssub.s32 1, %s4
  %s7 = scalar_select 0, %s6, %s4
  // Predicated region
  $region2: #{generator_forward.13} parent=0 // pred_check
    _
  $region3: #{generator_forward.13} parent=0 // pred_check_branch
    %9 = sbr.rel (0) target = $region5
  $region4: #{generator_forward.13} parent=0 // pred_region
    _
  $region5: #{generator_forward.13} parent=0 // pred_fallthru
    _
  // Predicated region
  $region6: #{generator_forward.13} parent=0 // pred_check
    _
  $region7: #{generator_forward.13} parent=0 // pred_check_branch
    %11 = sbr.rel (0) target = $region9
  $region8: #{generator_forward.13} parent=0 // pred_region
    _
  $region9: #{generator_forward.13} parent=0 // pred_fallthru
    _
  // Predicated region
  $region10: #{generator_forward.13} parent=0 // pred_check
    _
  $region11: #{generator_forward.13} parent=0 // pred_check_branch
    %13 = sbr.rel (0) target = $region13
  $region12: #{generator_forward.13} parent=0 // pred_region
    _
  $region13: #{generator_forward.13} parent=0 // pred_fallthru
    _
  %p15 = scmp.eq.s32.totalorder 0, 0
  // Predicated region
  $region14: #{generator_forward.13} parent=0 // pred_check
    %p16 = pneg %p15
  $region15: #{generator_forward.13} parent=0 // pred_check_branch
    %18 = sbr.rel (%p16) target = $region17
  $region16: #{generator_forward.13} parent=0 // pred_region
    %19 = vst [vmem:[#allocation2] sm:$0xff] 0.0
    %20 = vst [vmem:[#allocation2 + $0x8] sm:$0xff] 0.0
    %21 = vst [vmem:[#allocation2 + $0x10] sm:$0xff] 0.0
    %22 = vst [vmem:[#allocation2 + $0x18] sm:$0xff] 0.0
  $region17: #{generator_forward.13} parent=0 // pred_fallthru
    _
  %v23 = vld [vmem:[#allocation2] sm:$0xff]
  %v24 = vld [vmem:[#allocation2 + $0x8] sm:$0xff]
  %v25 = vld [vmem:[#allocation2 + $0x10] sm:$0xff]
  %v26 = vld [vmem:[#allocation2 + $0x18] sm:$0xff]
  %v27 = vld [vmem:[%s0] sm:$0xff]
  %v28 = vld [vmem:[%s0 + $0x8] sm:$0xff]
  %v29 = vld [vmem:[%s0 + $0x10] sm:$0xff]
  %v30 = vld [vmem:[%s0 + $0x18] sm:$0xff]
  %v31 = vld [vmem:[%s1] sm:$0xf]
  %v32 = vld [vmem:[%s1 + $0x4] sm:$0xf]
  %v33 = vld [vmem:[%s1 + $0x8] sm:$0xf]
  %v34 = vld [vmem:[%s1 + $0xc] sm:$0xf]
  %v35 = vld [vmem:[%s1 + $0x10] sm:$0xf]
  %v36 = vld [vmem:[%s1 + $0x14] sm:$0xf]
  %v37 = vld [vmem:[%s1 + $0x18] sm:$0xf]
  %v38 = vld [vmem:[%s1 + $0x1c] sm:$0xf]
  %v39 = vld [vmem:[%s1 + $0x20] sm:$0xf]
  %v40 = vld [vmem:[%s1 + $0x24] sm:$0xf]
  %v41 = vld [vmem:[%s1 + $0x28] sm:$0xf]
  %v42 = vld [vmem:[%s1 + $0x2c] sm:$0xf]
  %v43 = vld [vmem:[%s1 + $0x30] sm:$0xf]
  %v44 = vld [vmem:[%s1 + $0x34] sm:$0xf]
  %v45 = vld [vmem:[%s1 + $0x38] sm:$0xf]
  %v46 = vld [vmem:[%s1 + $0x3c] sm:$0xf]
  %v47 = vld [vmem:[%s1 + $0x40] sm:$0xf]
  %v48 = vld [vmem:[%s1 + $0x44] sm:$0xf]
  %v49 = vld [vmem:[%s1 + $0x48] sm:$0xf]
  %v50 = vld [vmem:[%s1 + $0x4c] sm:$0xf]
  %v51 = vld [vmem:[%s1 + $0x50] sm:$0xf]
  %v52 = vld [vmem:[%s1 + $0x54] sm:$0xf]
  %v53 = vld [vmem:[%s1 + $0x58] sm:$0xf]
  %v54 = vld [vmem:[%s1 + $0x5c] sm:$0xf]
  %v55 = vld [vmem:[%s1 + $0x60] sm:$0xf]
  %v56 = vld [vmem:[%s1 + $0x64] sm:$0xf]
  %v57 = vld [vmem:[%s1 + $0x68] sm:$0xf]
  %v58 = vld [vmem:[%s1 + $0x6c] sm:$0xf]
  %v59 = vld [vmem:[%s1 + $0x70] sm:$0xf]
  %v60 = vld [vmem:[%s1 + $0x74] sm:$0xf]
  %v61 = vld [vmem:[%s1 + $0x78] sm:$0xf]
  %v62 = vld [vmem:[%s1 + $0x7c] sm:$0xf]
  %v67 = vunpack.c.l.b16 %v27
  %v68 = vunpack.c.h.b16 %v27
  %v69 = vunpack.c.l.b16 %v28
  %v70 = vunpack.c.h.b16 %v28
  %v71 = vunpack.c.l.b16 %v29
  %v72 = vunpack.c.h.b16 %v29
  %v73 = vunpack.c.l.b16 %v30
  %v74 = vunpack.c.h.b16 %v30
  %v75 = vpack.c.b16 %v69, %v67
  %v76 = vpack.c.b16 %v70, %v68
  %v77 = vpack.c.b16 %v73, %v71
  %v78 = vpack.c.b16 %v74, %v72
  %v115 = vunpack.c.l.b16 %v31
  %v116 = vunpack.c.l.b16 %v32
  %v117 = vunpack.c.l.b16 %v33
  %v118 = vunpack.c.l.b16 %v34
  %v119 = vunpack.c.l.b16 %v35
  %v120 = vunpack.c.l.b16 %v36
  %v121 = vunpack.c.l.b16 %v37
  %v122 = vunpack.c.l.b16 %v38
  %v123 = vunpack.c.l.b16 %v39
  %v124 = vunpack.c.l.b16 %v40
  %v125 = vunpack.c.l.b16 %v41
  %v126 = vunpack.c.l.b16 %v42
  %v127 = vunpack.c.l.b16 %v43
  %v128 = vunpack.c.l.b16 %v44
  %v129 = vunpack.c.l.b16 %v45
  %v130 = vunpack.c.l.b16 %v46
  %v131 = vunpack.c.l.b16 %v47
  %v132 = vunpack.c.l.b16 %v48
  %v133 = vunpack.c.l.b16 %v49
  %v134 = vunpack.c.l.b16 %v50
  %v135 = vunpack.c.l.b16 %v51
  %v136 = vunpack.c.l.b16 %v52
  %v137 = vunpack.c.l.b16 %v53
  %v138 = vunpack.c.l.b16 %v54
  %v139 = vunpack.c.l.b16 %v55
  %v140 = vunpack.c.l.b16 %v56
  %v141 = vunpack.c.l.b16 %v57
  %v142 = vunpack.c.l.b16 %v58
  %v143 = vunpack.c.l.b16 %v59
  %v144 = vunpack.c.l.b16 %v60
  %v145 = vunpack.c.l.b16 %v61
  %v146 = vunpack.c.l.b16 %v62
  %v147 = vpack.c.b16 %v116, %v115
  %v148 = vpack.c.b16 %v118, %v117
  %v149 = vpack.c.b16 %v120, %v119
  %v150 = vpack.c.b16 %v122, %v121
  %v151 = vpack.c.b16 %v124, %v123
  %v152 = vpack.c.b16 %v126, %v125
  %v153 = vpack.c.b16 %v128, %v127
  %v154 = vpack.c.b16 %v130, %v129
  %v155 = vpack.c.b16 %v132, %v131
  %v156 = vpack.c.b16 %v134, %v133
  %v157 = vpack.c.b16 %v136, %v135
  %v158 = vpack.c.b16 %v138, %v137
  %v159 = vpack.c.b16 %v140, %v139
  %v160 = vpack.c.b16 %v142, %v141
  %v161 = vpack.c.b16 %v144, %v143
  %v162 = vpack.c.b16 %v146, %v145
  %179 = vmatprep.subr.bf16.mxu0 0
  %180 = vmatpush1.bf16.msra.mxu0 %v147
  %181 = vmatprep.subr.bf16.mxu0 0
  %182 = vmatpush1.bf16.msra.mxu0 %v148
  %183 = vmatprep.subr.bf16.mxu0 0
  %184 = vmatpush1.bf16.msra.mxu0 %v149
  %185 = vmatprep.subr.bf16.mxu0 0
  %186 = vmatpush1.bf16.msra.mxu0 %v150
  %187 = vmatprep.subr.bf16.mxu0 0
  %188 = vmatpush1.bf16.msra.mxu0 %v151
  %189 = vmatprep.subr.bf16.mxu0 0
  %190 = vmatpush1.bf16.msra.mxu0 %v152
  %191 = vmatprep.subr.bf16.mxu0 0
  %192 = vmatpush1.bf16.msra.mxu0 %v153
  %193 = vmatprep.subr.bf16.mxu0 0
  %194 = vmatpush1.bf16.msra.mxu0 %v154
  %195 = vmatprep.subr.bf16.mxu0 0
  %196 = vmatpush1.bf16.msra.mxu0 %v155
  %197 = vmatprep.subr.bf16.mxu0 0
  %198 = vmatpush1.bf16.msra.mxu0 %v156
  %199 = vmatprep.subr.bf16.mxu0 0
  %200 = vmatpush1.bf16.msra.mxu0 %v157
  %201 = vmatprep.subr.bf16.mxu0 0
  %202 = vmatpush1.bf16.msra.mxu0 %v158
  %203 = vmatprep.subr.bf16.mxu0 0
  %204 = vmatpush1.bf16.msra.mxu0 %v159
  %205 = vmatprep.subr.bf16.mxu0 0
  %206 = vmatpush1.bf16.msra.mxu0 %v160
  %207 = vmatprep.subr.bf16.mxu0 0
  %208 = vmatpush1.bf16.msra.mxu0 %v161
  %209 = vmatprep.subr.bf16.mxu0 0
  %210 = vmatpush1.bf16.msra.mxu0 %v162
  %211 = vmatprep.mubr.bf16.mxu0 %v76
  %212 = vmatmul.mubr.bf16.gmra.mrb[0].mxu0 %v75
  %v213 = vpop.f32.mrb[0].mxu0
  %v214 = vadd.f32 0.0, %v213
  %v215 = vpop.f32.mrb[0].mxu0
  %v216 = vpop.f32.mrb[0].mxu0
  %v217 = vadd.f32 0.0, %v216
  %v218 = vpop.f32.mrb[0].mxu0
  %219 = vmatprep.mubr.bf16.mxu0 %v78
  %220 = vmatmul.mubr.bf16.gmra.mrb[0].mxu0 %v77
  %v221 = vpop.f32.mrb[0].mxu0
  %v222 = vadd.f32 0.0, %v221
  %v223 = vpop.f32.mrb[0].mxu0
  %v224 = vpop.f32.mrb[0].mxu0
  %v225 = vadd.f32 0.0, %v224
  %v226 = vpop.f32.mrb[0].mxu0
  %227 = vdwg.mxu0
  %v228 = vadd.f32 %v23, %v214
  %v229 = vadd.f32 %v24, %v217
  %v230 = vadd.f32 %v25, %v222
  %v231 = vadd.f32 %v26, %v225
  %232 = vst [vmem:[#allocation2] sm:$0xff] %v228
  %233 = vst [vmem:[#allocation2 + $0x8] sm:$0xff] %v229
  %234 = vst [vmem:[#allocation2 + $0x10] sm:$0xff] %v230
  %235 = vst [vmem:[#allocation2 + $0x18] sm:$0xff] %v231
  // Predicated region
  $region18: #{generator_forward.13} parent=0 // pred_check
    %p236 = pneg %p15
  $region19: #{generator_forward.13} parent=0 // pred_check_branch
    %238 = sbr.rel (%p236) target = $region21
  $region20: #{generator_forward.13} parent=0 // pred_region
    %v239 = vld [vmem:[#allocation2] sm:$0xff]
    %v240 = vld [vmem:[#allocation2 + $0x8] sm:$0xff]
    %v241 = vld [vmem:[#allocation2 + $0x10] sm:$0xff]
    %v242 = vld [vmem:[#allocation2 + $0x18] sm:$0xff]
    %v243 = vld [vmem:[%s2] sm:$0x1]
    %v245 = vlaneseq
    %v246 = vshrl.u32 %v245, 7
    %v247 = vsub.s32 0, %v246
    %v248 = vrot.slane %v243, %v247
    %v250 = vadd.f32 %v239, %v248
    %v251 = vadd.f32 %v240, %v248
    %v252 = vadd.f32 %v241, %v248
    %v253 = vadd.f32 %v242, %v248
    %v254 = vmax.f32 %v250, 0.0
    %v255 = vmax.f32 %v251, 0.0
    %v256 = vmax.f32 %v252, 0.0
    %v257 = vmax.f32 %v253, 0.0
    %258 = vst [vmem:[%s3] sm:$0xff] %v254
    %259 = vst [vmem:[%s3 + $0x8] sm:$0xff] %v255
    %260 = vst [vmem:[%s3 + $0x10] sm:$0xff] %v256
    %261 = vst [vmem:[%s3 + $0x18] sm:$0xff] %v257
  $region21: #{generator_forward.13} parent=0 // pred_fallthru
    _
  // Predicated region
  $region22: #{generator_forward.13} parent=0 // pred_check
    _
  $region23: #{generator_forward.13} parent=0 // pred_check_branch
    %263 = sbr.rel (0) target = $region25
  $region24: #{generator_forward.13} parent=0 // pred_region
    _
  $region25: #{generator_forward.13} parent=0 // pred_fallthru
    _
  // Predicated region
  $region26: #{generator_forward.13} parent=0 // pred_check
    _
  $region27: #{generator_forward.13} parent=0 // pred_check_branch
    %265 = sbr.rel (0) target = $region29
  $region28: #{generator_forward.13} parent=0 // pred_region
    _
  $region29: #{generator_forward.13} parent=0 // pred_fallthru
    _

// kernel: tile.63
$region0: #{tile.63}
  #allocation0 [shape = 's32[1]{0}', space=sflag, size = 0x4, scoped, tag = 'scoped memory for tile.63']
  %s0 = inlined_call_operand.vmem [shape: f32[8], index: 0, kind: input, shape index: {}]
  %s1 = inlined_call_operand.vmem [shape: f32[4,8], index: 1, kind: output, shape index: {}]
  // Predicated region
  $region2: #{tile.63} parent=0 // pred_check
    _
  $region3: #{tile.63} parent=0 // pred_check_branch
    %3 = sbr.rel (0) target = $region5
  $region4: #{tile.63} parent=0 // pred_region
    _
  $region5: #{tile.63} parent=0 // pred_fallthru
    _
  %v4 = vld [vmem:[%s0] ss:$0 sm:$0xff]
  %5 = vst [vmem:[%s1] sm:$0xf] %v4

// kernel: mul.57
$region0: #{mul.57}
  %s0 = inlined_call_operand.vmem [shape: f32[4,8], index: 0, kind: input, shape index: {}]
  %s1 = inlined_call_operand.vmem [shape: f32[32], index: 1, kind: output, shape index: {}]
  $region1: #{mul.57} parent=0
    #allocation0 [shape = 'u8[4096]{0}', space=vmem, size = 0x1000, scoped, tag = 'scoped mem for output reshape']
    #allocation1 [shape = 'u8[4096]{0}', space=vmem, size = 0x1000, scoped, tag = 'scoped mem for input reshape']
    %s3 = sshllo.u32 0, 4
    %v4 = vld [vmem:[%s0] sm:%s3]
    %5 = vst [vmem:[#allocation1] sm:%s3] %v4
    %v6 = vld [vmem:[#allocation1] sm:$0x1]
    %vm7 = vcmask 64512
    %8 = vst.msk [vmem:[#allocation0] sm:$0x1] %vm7, %v6
    %s9 = scalar_lea.vmem [#allocation1], 3
    %v10 = vld [vmem:[%s9] sm:$0x1]
    %11 = vrot.lane.b32.xlu0 %v10, 24
    %v12 = vpop.permute.xlu0 %11
    %vm13 = vcmask 261312
    %14 = vst.msk [vmem:[#allocation0] sm:$0x1] %vm13, %v12
    %s15 = scalar_lea.vmem [#allocation1], 2
    %v16 = vld [vmem:[%s15] sm:$0x1]
    %17 = vrot.lane.b32.xlu0 %v16, 16
    %v18 = vpop.permute.xlu0 %17
    %vm19 = vcmask 195712
    %20 = vst.msk [vmem:[#allocation0] sm:$0x1] %vm19, %v18
    %s21 = scalar_lea.vmem [#allocation1], 1
    %v22 = vld [vmem:[%s21] sm:$0x1]
    %23 = vrot.lane.b32.xlu0 %v22, 8
    %v24 = vpop.permute.xlu0 %23
    %vm25 = vcmask 130112
    %26 = vst.msk [vmem:[#allocation0] sm:$0x1] %vm25, %v24
    %s28 = sshllo.u32 0, 1
    %v30 = vld [vmem:[#allocation0] sm:%s28]
    %s31 = sshllo.u32 0, 1
    %32 = vst [vmem:[%s1] sm:%s31] %v30

// kernel: generator_forward.14
$region0: #{generator_forward.14}
  #allocation0 [shape = 'u32[]', space=smem, size = 0x4, offset = 0x4, fixed_abs, tag = 'smem constant byte address 0x4 - core index']
  #allocation1 [shape = 'u32[144,128]{1,0:T(1,128)}', space=vmem, size = 0x12000, scoped, tag = 'internal scratch']
  #allocation2 [shape = 'f32[32,128]{1,0:T(8,128)}', space=vmem, size = 0x4000, scoped, tag = 'scratch operand']
  %s0 = inlined_call_operand.vmem [shape: bf16[64,128], index: 0, kind: input, shape index: {}]
  %s1 = inlined_call_operand.vmem [shape: bf16[128,128], index: 1, kind: input, shape index: {}]
  %s2 = inlined_call_operand.vmem [shape: f32[1,128], index: 2, kind: input, shape index: {}]
  %s3 = inlined_call_operand.vmem [shape: f32[64,128], index: 3, kind: output, shape index: {}]
  %s4 = sld [smem:[#allocation0]]
  $region53: #{generator_forward.14} parent=0
    _
  %s6 = ssub.s32 1, %s4
  %s7 = scalar_select 0, %s6, %s4
  loop: start=0, step=1, limit=4
  $region2: #{generator_forward.14} parent=0 // loop_pre_header
    _
  $region3: #{generator_forward.14} parent=0 // loop_header
    %s9 = sphi 0, %s13
    %p10 = scmp.ge.s32.totalorder %s9, 4
    %s16 = sphi 0, %s28
    %s17 = sphi 0, %s24
    %s18 = sphi 0, %s16
    %s19 = sphi 0, %s17
    %s20 = sphi 0, %s18
    %s21 = sphi 0, %s19
    %s33 = sphi 0, %s35
    %s36 = sphi 0, %s33
    %s37 = sphi 0, %s36
    %s53 = sphi 0, %s37
    %s59 = sphi 0, %s61
    %s62 = sphi 0, %s59
    %s63 = sphi 0, %s62
    %s79 = sphi 0, %s63
    %s83 = sphi 0, %s83
    %s85 = sphi 0, %s83
    %s86 = sphi 0, %s85
    %s100 = sphi 0, %s86
    %s106 = sphi 0, %s108
    %s109 = sphi 0, %s106
    %s110 = sphi 0, %s109
    %s126 = sphi 0, %s110
  $region4: #{generator_forward.14} parent=0 // loop_header_branch
    %12 = sbr.rel (%p10) target = $region8
  $region5: #{generator_forward.14} parent=0 // loop_body
    %s14 = ssub.s32 %s9, 1
    %s15 = ssub.s32 %s9, 2
    %s22 = sadd.s32 1, %s17
    %p23 = scmp.ge.s32.totalorder %s22, 1
    %s24 = scalar_select %p23, 0, %s22
    %s25 = sadd.s32 1, %s16
    %s26 = scalar_select %p23, %s25, %s16
    %p27 = scmp.ge.s32.totalorder %s26, 2
    %s28 = scalar_select %p27, 0, %s26
    %s29 = ssub.s32 %s16, %s28
    %s30 = ssub.s32 %s17, %s24
    %s31 = sor.u32 %s29, %s30
    %p32 = scmp.eq.s32.totalorder %s31, 0
    %s34 = sadd.s32 %s33, 1
    %s35 = scalar_select %p32, %s33, %s34
    %p38 = pneg %p32
    %p39 = scmp.eq.s32.totalorder %s9, 1
    %p40 = por %p38, %p39
    %p41 = scmp.ne.s32.totalorder %s33, %s36
    %p42 = scmp.eq.s32.totalorder %s9, 0
    %p43 = por %p41, %p42
    %p44 = scmp.ne.s32.totalorder %s33, %s36
    %p45 = scmp.eq.s32.totalorder %s14, 1
    %p46 = por %p44, %p45
    %p47 = scmp.ne.s32.totalorder %s36, %s37
    %p48 = scmp.eq.s32.totalorder %s14, 0
    %p49 = por %p47, %p48
    %p50 = scmp.ne.s32.totalorder %s36, %s37
    %p51 = scmp.eq.s32.totalorder %s15, 1
    %p52 = por %p50, %p51
    %p54 = scmp.ne.s32.totalorder %s37, %s53
    %p55 = scmp.eq.s32.totalorder %s15, 0
    %p56 = por %p54, %p55
    %s57 = ssub.s32 %s17, %s24
    %p58 = scmp.eq.s32.totalorder %s57, 0
    %s60 = sadd.s32 %s59, 1
    %s61 = scalar_select %p58, %s59, %s60
    %p64 = pneg %p58
    %p65 = scmp.eq.s32.totalorder %s9, 1
    %p66 = por %p64, %p65
    %p67 = scmp.ne.s32.totalorder %s59, %s62
    %p68 = scmp.eq.s32.totalorder %s9, 0
    %p69 = por %p67, %p68
    %p70 = scmp.ne.s32.totalorder %s59, %s62
    %p71 = scmp.eq.s32.totalorder %s14, 1
    %p72 = por %p70, %p71
    %p73 = scmp.ne.s32.totalorder %s62, %s63
    %p74 = scmp.eq.s32.totalorder %s14, 0
    %p75 = por %p73, %p74
    %p76 = scmp.ne.s32.totalorder %s62, %s63
    %p77 = scmp.eq.s32.totalorder %s15, 1
    %p78 = por %p76, %p77
    %p80 = scmp.ne.s32.totalorder %s63, %s79
    %p81 = scmp.eq.s32.totalorder %s15, 0
    %p82 = por %p80, %p81
    %s84 = sadd.s32 %s83, 1
    %p87 = scmp.eq.s32.totalorder %s9, 1
    %p88 = scmp.ne.s32.totalorder %s83, %s85
    %p89 = scmp.eq.s32.totalorder %s9, 0
    %p90 = por %p88, %p89
    %p91 = scmp.ne.s32.totalorder %s83, %s85
    %p92 = scmp.eq.s32.totalorder %s14, 1
    %p93 = por %p91, %p92
    %p94 = scmp.ne.s32.totalorder %s85, %s86
    %p95 = scmp.eq.s32.totalorder %s14, 0
    %p96 = por %p94, %p95
    %p97 = scmp.ne.s32.totalorder %s85, %s86
    %p98 = scmp.eq.s32.totalorder %s15, 1
    %p99 = por %p97, %p98
    %p101 = scmp.ne.s32.totalorder %s86, %s100
    %p102 = scmp.eq.s32.totalorder %s15, 0
    %p103 = por %p101, %p102
    %s104 = ssub.s32 %s16, %s28
    %p105 = scmp.eq.s32.totalorder %s104, 0
    %s107 = sadd.s32 %s106, 1
    %s108 = scalar_select %p105, %s106, %s107
    %p111 = pneg %p105
    %p112 = scmp.eq.s32.totalorder %s9, 1
    %p113 = por %p111, %p112
    %p114 = scmp.ne.s32.totalorder %s106, %s109
    %p115 = scmp.eq.s32.totalorder %s9, 0
    %p116 = por %p114, %p115
    %p117 = scmp.ne.s32.totalorder %s106, %s109
    %p118 = scmp.eq.s32.totalorder %s14, 1
    %p119 = por %p117, %p118
    %p120 = scmp.ne.s32.totalorder %s109, %s110
    %p121 = scmp.eq.s32.totalorder %s14, 0
    %p122 = por %p120, %p121
    %p123 = scmp.ne.s32.totalorder %s109, %s110
    %p124 = scmp.eq.s32.totalorder %s15, 1
    %p125 = por %p123, %p124
    %p127 = scmp.ne.s32.totalorder %s110, %s126
    %p128 = scmp.eq.s32.totalorder %s15, 0
    %p129 = por %p127, %p128
    %p130 = scmp.le.s32.totalorder 1, %s9
    %p131 = scmp.lt.s32.totalorder %s9, 3
    %p132 = pnand %p130, %p131
    %p133 = pneg %p132
    // Predicated region
    $region9: #{generator_forward.14} parent=5 // pred_check
      _
    $region10: #{generator_forward.14} parent=5 // pred_check_branch
      %135 = sbr.rel (%p132) target = $region12
    $region11: #{generator_forward.14} parent=5 // pred_region
      %s136 = ssub.s32 %s9, 1
      // Predicated region
      $region13: #{generator_forward.14} parent=11 // pred_check
        %p137 = pneg %p75
      $region14: #{generator_forward.14} parent=11 // pred_check_branch
        %139 = sbr.rel (%p137) target = $region16
      $region15: #{generator_forward.14} parent=11 // pred_region
        %s140 = smul.u32 16, %s19
        %p141 = scmp.lt.s32.totalorder %s140, 15
        %s142 = scalar_select %p141, %s140, 15
        %s143 = smul.addr %s142, 4
        %s144 = scalar_lea.vmem %s1, %s143
        %s145 = smul.u32 16, %s19
      $region16: #{generator_forward.14} parent=11 // pred_fallthru
        _
      // Predicated region
      $region17: #{generator_forward.14} parent=11 // pred_check
        %p146 = pneg %p96
      $region18: #{generator_forward.14} parent=11 // pred_check_branch
        %148 = sbr.rel (%p146) target = $region20
      $region19: #{generator_forward.14} parent=11 // pred_region
        _
      $region20: #{generator_forward.14} parent=11 // pred_fallthru
        _
    $region12: #{generator_forward.14} parent=5 // pred_fallthru
      _
    %p149 = scmp.lt.s32.totalorder %s9, 2
    // Predicated region
    $region21: #{generator_forward.14} parent=5 // pred_check
      %p150 = pneg %p149
    $region22: #{generator_forward.14} parent=5 // pred_check_branch
      %152 = sbr.rel (%p150) target = $region24
    $region23: #{generator_forward.14} parent=5 // pred_region
      // Predicated region
      $region25: #{generator_forward.14} parent=23 // pred_check
        %p153 = pneg %p43
      $region26: #{generator_forward.14} parent=23 // pred_check_branch
        %155 = sbr.rel (%p153) target = $region28
      $region27: #{generator_forward.14} parent=23 // pred_region
        %s156 = smul.u32 4, %s16
        %p157 = scmp.lt.s32.totalorder %s156, 7
        %s158 = scalar_select %p157, %s156, 7
        %p159 = scmp.lt.s32.totalorder %s17, 0
        %s160 = scalar_select %p159, %s17, 0
        %s161 = sadd.s32 %s160, %s158
        %s162 = smul.addr %s161, 4
        %s163 = scalar_lea.vmem %s0, %s162
        %s164 = smul.u32 4, %s16
      $region28: #{generator_forward.14} parent=23 // pred_fallthru
        _
    $region24: #{generator_forward.14} parent=5 // pred_fallthru
      _
    %p165 = scmp.le.s32.totalorder 1, %s9
    %p166 = scmp.lt.s32.totalorder %s9, 3
    %p167 = pnand %p165, %p166
    %p168 = pneg %p167
    // Predicated region
    $region29: #{generator_forward.14} parent=5 // pred_check
      _
    $region30: #{generator_forward.14} parent=5 // pred_check_branch
      %170 = sbr.rel (%p167) target = $region32
    $region31: #{generator_forward.14} parent=5 // pred_region
      %s171 = ssub.s32 %s9, 1
      %s172 = smul.u32 4, %s18
      %p173 = scmp.lt.s32.totalorder %s172, 7
      %s174 = scalar_select %p173, %s172, 7
      %p175 = scmp.lt.s32.totalorder %s19, 0
      %s176 = scalar_select %p175, %s19, 0
      %s177 = sadd.s32 %s176, %s174
      %s178 = smul.addr %s177, 4
      %s179 = scalar_lea.vmem %s0, %s178
      %p180 = pneg %p49
      %p181 = pneg %p46
      %s182 = smul.u32 16, %s19
      %p183 = scmp.lt.s32.totalorder %s182, 15
      %s184 = scalar_select %p183, %s182, 15
      %s185 = smul.addr %s184, 4
      %s186 = scalar_lea.vmem %s1, %s185
      %p187 = pneg %p75
      %p188 = pneg %p72
      %p189 = pneg %p96
      %p190 = pneg %p93
      %p191 = pneg %p122
      %p192 = pneg %p119
      %s193 = smul.u32 4, %s18
      %p194 = scmp.lt.s32.totalorder %s193, 7
      %s195 = scalar_select %p194, %s193, 7
      %s196 = smul.addr %s195, 8
      %s197 = scalar_lea.vmem %s3, %s196
      %s198 = smul.u32 4, %s18
      %p199 = scmp.lt.s32.totalorder %s198, 7
      %s200 = scalar_select %p199, %s198, 7
      %p201 = scmp.lt.s32.totalorder %s19, 0
      %s202 = scalar_select %p201, %s19, 0
      %s203 = sadd.s32 %s202, %s200
      %s204 = smul.addr %s203, 4
      %s205 = scalar_lea.vmem %s0, %s204
      %s206 = smul.u32 4, %s18
      %s207 = smul.u32 16, %s19
      %p208 = scmp.lt.s32.totalorder %s207, 15
      %s209 = scalar_select %p208, %s207, 15
      %s210 = smul.addr %s209, 4
      %s211 = scalar_lea.vmem %s1, %s210
      %s212 = smul.u32 16, %s19
      %s213 = smul.u32 4, %s18
      %p214 = scmp.lt.s32.totalorder %s213, 7
      %s215 = scalar_select %p214, %s213, 7
      %s216 = smul.addr %s215, 8
      %s217 = scalar_lea.vmem %s3, %s216
      %s218 = smul.u32 4, %s18
      %p220 = scmp.eq.s32.totalorder %s19, 0
      // Predicated region
      $region33: #{generator_forward.14} parent=31 // pred_check
        %p221 = pneg %p220
      $region34: #{generator_forward.14} parent=31 // pred_check_branch
        %223 = sbr.rel (%p221) target = $region36
      $region35: #{generator_forward.14} parent=31 // pred_region
        %224 = vst [vmem:[#allocation2] sm:$0xff] 0.0
        %225 = vst [vmem:[#allocation2 + $0x8] sm:$0xff] 0.0
        %226 = vst [vmem:[#allocation2 + $0x10] sm:$0xff] 0.0
        %227 = vst [vmem:[#allocation2 + $0x18] sm:$0xff] 0.0
      $region36: #{generator_forward.14} parent=31 // pred_fallthru
        _
      %v228 = vld [vmem:[#allocation2] sm:$0xff]
      %v229 = vld [vmem:[#allocation2 + $0x8] sm:$0xff]
      %v230 = vld [vmem:[#allocation2 + $0x10] sm:$0xff]
      %v231 = vld [vmem:[#allocation2 + $0x18] sm:$0xff]
      %v232 = vld [vmem:[%s205] sm:$0xf]
      %v233 = vld [vmem:[%s205 + $0x4] sm:$0xf]
      %v234 = vld [vmem:[%s205 + $0x8] sm:$0xf]
      %v235 = vld [vmem:[%s205 + $0xc] sm:$0xf]
      %v236 = vld [vmem:[%s211] sm:$0xf]
      %v237 = vld [vmem:[%s211 + $0x4] sm:$0xf]
      %v238 = vld [vmem:[%s211 + $0x8] sm:$0xf]
      %v239 = vld [vmem:[%s211 + $0xc] sm:$0xf]
      %v240 = vld [vmem:[%s211 + $0x10] sm:$0xf]
      %v241 = vld [vmem:[%s211 + $0x14] sm:$0xf]
      %v242 = vld [vmem:[%s211 + $0x18] sm:$0xf]
      %v243 = vld [vmem:[%s211 + $0x1c] sm:$0xf]
      %v244 = vld [vmem:[%s211 + $0x20] sm:$0xf]
      %v245 = vld [vmem:[%s211 + $0x24] sm:$0xf]
      %v246 = vld [vmem:[%s211 + $0x28] sm:$0xf]
      %v247 = vld [vmem:[%s211 + $0x2c] sm:$0xf]
      %v248 = vld [vmem:[%s211 + $0x30] sm:$0xf]
      %v249 = vld [vmem:[%s211 + $0x34] sm:$0xf]
      %v250 = vld [vmem:[%s211 + $0x38] sm:$0xf]
      %v251 = vld [vmem:[%s211 + $0x3c] sm:$0xf]
      %v256 = vunpack.c.l.b16 %v232
      %v257 = vunpack.c.l.b16 %v233
      %v258 = vunpack.c.l.b16 %v234
      %v259 = vunpack.c.l.b16 %v235
      %v260 = vpack.c.b16 %v257, %v256
      %v261 = vpack.c.b16 %v259, %v258
      %v280 = vunpack.c.l.b16 %v236
      %v281 = vunpack.c.l.b16 %v237
      %v282 = vunpack.c.l.b16 %v238
      %v283 = vunpack.c.l.b16 %v239
      %v284 = vunpack.c.l.b16 %v240
      %v285 = vunpack.c.l.b16 %v241
      %v286 = vunpack.c.l.b16 %v242
      %v287 = vunpack.c.l.b16 %v243
      %v288 = vunpack.c.l.b16 %v244
      %v289 = vunpack.c.l.b16 %v245
      %v290 = vunpack.c.l.b16 %v246
      %v291 = vunpack.c.l.b16 %v247
      %v292 = vunpack.c.l.b16 %v248
      %v293 = vunpack.c.l.b16 %v249
      %v294 = vunpack.c.l.b16 %v250
      %v295 = vunpack.c.l.b16 %v251
      %v296 = vpack.c.b16 %v281, %v280
      %v297 = vpack.c.b16 %v283, %v282
      %v298 = vpack.c.b16 %v285, %v284
      %v299 = vpack.c.b16 %v287, %v286
      %v300 = vpack.c.b16 %v289, %v288
      %v301 = vpack.c.b16 %v291, %v290
      %v302 = vpack.c.b16 %v293, %v292
      %v303 = vpack.c.b16 %v295, %v294
      %312 = vmatprep.subr.bf16.mxu0 0
      %313 = vmatpush1.bf16.msra.mxu0 %v296
      %314 = vmatprep.subr.bf16.mxu0 0
      %315 = vmatpush1.bf16.msra.mxu0 %v297
      %316 = vmatprep.subr.bf16.mxu0 0
      %317 = vmatpush1.bf16.msra.mxu0 %v298
      %318 = vmatprep.subr.bf16.mxu0 0
      %319 = vmatpush1.bf16.msra.mxu0 %v299
      %320 = vmatprep.subr.bf16.mxu0 0
      %321 = vmatpush1.bf16.msra.mxu0 %v300
      %322 = vmatprep.subr.bf16.mxu0 0
      %323 = vmatpush1.bf16.msra.mxu0 %v301
      %324 = vmatprep.subr.bf16.mxu0 0
      %325 = vmatpush1.bf16.msra.mxu0 %v302
      %326 = vmatprep.subr.bf16.mxu0 0
      %327 = vmatpush1.bf16.msra.mxu0 %v303
      %328 = vmatprep.subr.bf16.mxu0 0
      %329 = vmatpush1.bf16.msra.mxu0 0
      %330 = vmatprep.subr.bf16.mxu0 0
      %331 = vmatpush1.bf16.msra.mxu0 0
      %332 = vmatprep.subr.bf16.mxu0 0
      %333 = vmatpush1.bf16.msra.mxu0 0
      %334 = vmatprep.subr.bf16.mxu0 0
      %335 = vmatpush1.bf16.msra.mxu0 0
      %336 = vmatprep.subr.bf16.mxu0 0
      %337 = vmatpush1.bf16.msra.mxu0 0
      %338 = vmatprep.subr.bf16.mxu0 0
      %339 = vmatpush1.bf16.msra.mxu0 0
      %340 = vmatprep.subr.bf16.mxu0 0
      %341 = vmatpush1.bf16.msra.mxu0 0
      %342 = vmatprep.subr.bf16.mxu0 0
      %343 = vmatpush1.bf16.msra.mxu0 0
      %344 = vmatprep.mubr.bf16.mxu0 0
      %345 = vmatmul.mubr.bf16.gmra.mrb[0].mxu0 %v260
      %v346 = vpop.f32.mrb[0].mxu0
      %v347 = vadd.f32 0.0, %v346
      %v348 = vpop.f32.mrb[0].mxu0
      %v349 = vpop.f32.mrb[0].mxu0
      %v350 = vadd.f32 0.0, %v349
      %v351 = vpop.f32.mrb[0].mxu0
      %352 = vmatprep.mubr.bf16.mxu0 0
      %353 = vmatmul.mubr.bf16.gmra.mrb[0].mxu0 %v261
      %v354 = vpop.f32.mrb[0].mxu0
      %v355 = vadd.f32 0.0, %v354
      %v356 = vpop.f32.mrb[0].mxu0
      %v357 = vpop.f32.mrb[0].mxu0
      %v358 = vadd.f32 0.0, %v357
      %v359 = vpop.f32.mrb[0].mxu0
      %360 = vdwg.mxu0
      %v361 = vadd.f32 %v228, %v347
      %v362 = vadd.f32 %v229, %v350
      %v363 = vadd.f32 %v230, %v355
      %v364 = vadd.f32 %v231, %v358
      %365 = vst [vmem:[#allocation2] sm:$0xff] %v361
      %366 = vst [vmem:[#allocation2 + $0x8] sm:$0xff] %v362
      %367 = vst [vmem:[#allocation2 + $0x10] sm:$0xff] %v363
      %368 = vst [vmem:[#allocation2 + $0x18] sm:$0xff] %v364
      // Predicated region
      $region37: #{generator_forward.14} parent=31 // pred_check
        %p369 = pneg %p220
      $region38: #{generator_forward.14} parent=31 // pred_check_branch
        %371 = sbr.rel (%p369) target = $region40
      $region39: #{generator_forward.14} parent=31 // pred_region
        %v372 = vld [vmem:[#allocation2] sm:$0xff]
        %v373 = vld [vmem:[#allocation2 + $0x8] sm:$0xff]
        %v374 = vld [vmem:[#allocation2 + $0x10] sm:$0xff]
        %v375 = vld [vmem:[#allocation2 + $0x18] sm:$0xff]
        %v376 = vld [vmem:[%s2] sm:$0x1]
        %v378 = vlaneseq
        %v379 = vshrl.u32 %v378, 7
        %v380 = vsub.s32 0, %v379
        %v381 = vrot.slane %v376, %v380
        %v383 = vadd.f32 %v372, %v381
        %v384 = vadd.f32 %v373, %v381
        %v385 = vadd.f32 %v374, %v381
        %v386 = vadd.f32 %v375, %v381
        %v387 = vmax.f32 %v383, 0.0
        %v388 = vmax.f32 %v384, 0.0
        %v389 = vmax.f32 %v385, 0.0
        %v390 = vmax.f32 %v386, 0.0
        %391 = vst [vmem:[%s217] sm:$0xff] %v387
        %392 = vst [vmem:[%s217 + $0x8] sm:$0xff] %v388
        %393 = vst [vmem:[%s217 + $0x10] sm:$0xff] %v389
        %394 = vst [vmem:[%s217 + $0x18] sm:$0xff] %v390
      $region40: #{generator_forward.14} parent=31 // pred_fallthru
        _
      %s395 = smul.u32 4, %s18
      %p396 = scmp.lt.s32.totalorder %s395, 7
      %s397 = scalar_select %p396, %s395, 7
      %s398 = smul.addr %s397, 8
      %s399 = scalar_lea.vmem %s3, %s398
      // Predicated region
      $region41: #{generator_forward.14} parent=31 // pred_check
        %p400 = pneg %p119
      $region42: #{generator_forward.14} parent=31 // pred_check_branch
        %402 = sbr.rel (%p400) target = $region44
      $region43: #{generator_forward.14} parent=31 // pred_region
        %s403 = smul.u32 4, %s18
      $region44: #{generator_forward.14} parent=31 // pred_fallthru
        _
    $region32: #{generator_forward.14} parent=5 // pred_fallthru
      _
    %p404 = scmp.le.s32.totalorder 2, %s9
    // Predicated region
    $region45: #{generator_forward.14} parent=5 // pred_check
      %p405 = pneg %p404
    $region46: #{generator_forward.14} parent=5 // pred_check_branch
      %407 = sbr.rel (%p405) target = $region48
    $region47: #{generator_forward.14} parent=5 // pred_region
      %s408 = ssub.s32 %s9, 2
      // Predicated region
      $region49: #{generator_forward.14} parent=47 // pred_check
        %p409 = pneg %p125
      $region50: #{generator_forward.14} parent=47 // pred_check_branch
        %411 = sbr.rel (%p409) target = $region52
      $region51: #{generator_forward.14} parent=47 // pred_region
        %s412 = smul.u32 4, %s20
        %p413 = scmp.lt.s32.totalorder %s412, 7
        %s414 = scalar_select %p413, %s412, 7
        %s415 = smul.addr %s414, 8
        %s416 = scalar_lea.vmem %s3, %s415
      $region52: #{generator_forward.14} parent=47 // pred_fallthru
        _
    $region48: #{generator_forward.14} parent=5 // pred_fallthru
      _
  $region6: #{generator_forward.14} parent=0 // loop_footer
    %s13 = sadd.s32 1, %s9
  $region7: #{generator_forward.14} parent=0 // loop_footer_branch
    %8 = sbr.rel target = $region3
  $region8: #{generator_forward.14} parent=0 // loop_exit
    _

// kernel: tile.73
$region0: #{tile.73}
  #allocation0 [shape = 's32[1]{0}', space=sflag, size = 0x4, scoped, tag = 'scoped memory for tile.73']
  %s0 = inlined_call_operand.vmem [shape: f32[3], index: 0, kind: input, shape index: {}]
  %s1 = inlined_call_operand.vmem [shape: f32[4,3], index: 1, kind: output, shape index: {}]
  // Predicated region
  $region2: #{tile.73} parent=0 // pred_check
    _
  $region3: #{tile.73} parent=0 // pred_check_branch
    %3 = sbr.rel (0) target = $region5
  $region4: #{tile.73} parent=0 // pred_region
    _
  $region5: #{tile.73} parent=0 // pred_fallthru
    _
  %v4 = vld [vmem:[%s0] ss:$0 sm:$0xff]
  %5 = vst [vmem:[%s1] sm:$0xf] %v4

// kernel: mul.61
$region0: #{mul.61}
  %s0 = inlined_call_operand.vmem [shape: f32[4,3], index: 0, kind: input, shape index: {}]
  %s1 = inlined_call_operand.vmem [shape: f32[12], index: 1, kind: output, shape index: {}]
  $region1: #{mul.61} parent=0
    #allocation0 [shape = 'u8[4096]{0}', space=vmem, size = 0x1000, scoped, tag = 'scoped mem for output reshape']
    #allocation1 [shape = 'u8[4096]{0}', space=vmem, size = 0x1000, scoped, tag = 'scoped mem for input reshape']
    %s3 = sshllo.u32 0, 4
    %v4 = vld [vmem:[%s0] sm:%s3]
    %5 = vst [vmem:[#allocation1] sm:%s3] %v4
    %v6 = vld [vmem:[#allocation1] sm:$0x1]
    %vm7 = vcmask 23552
    %8 = vst.msk [vmem:[#allocation0] sm:$0x1] %vm7, %v6
    %s9 = scalar_lea.vmem [#allocation1], 3
    %v10 = vld [vmem:[%s9] sm:$0x1]
    %11 = vrot.lane.b32.xlu0 %v10, 9
    %v12 = vpop.permute.xlu0 %11
    %vm13 = vcmask 97352
    %14 = vst.msk [vmem:[#allocation0] sm:$0x1] %vm13, %v12
    %s15 = scalar_lea.vmem [#allocation1], 2
    %v16 = vld [vmem:[%s15] sm:$0x1]
    %17 = vrot.lane.b32.xlu0 %v16, 6
    %v18 = vpop.permute.xlu0 %17
    %vm19 = vcmask 72752
    %20 = vst.msk [vmem:[#allocation0] sm:$0x1] %vm19, %v18
    %s21 = scalar_lea.vmem [#allocation1], 1
    %v22 = vld [vmem:[%s21] sm:$0x1]
    %23 = vrot.lane.b32.xlu0 %v22, 3
    %v24 = vpop.permute.xlu0 %23
    %vm25 = vcmask 48152
    %26 = vst.msk [vmem:[#allocation0] sm:$0x1] %vm25, %v24
    %s28 = sshllo.u32 0, 1
    %v30 = vld [vmem:[#allocation0] sm:%s28]
    %s31 = sshllo.u32 0, 1
    %32 = vst [vmem:[%s1] sm:%s31] %v30

// kernel: generator_forward.15
$region0: #{generator_forward.15}
  #allocation0 [shape = 'u32[]', space=smem, size = 0x4, offset = 0x4, fixed_abs, tag = 'smem constant byte address 0x4 - core index']
  #allocation1 [shape = 'u32[144,128]{1,0:T(1,128)}', space=vmem, size = 0x12000, scoped, tag = 'internal scratch']
  #allocation2 [shape = 'f32[96,128]{1,0:T(8,128)}', space=vmem, size = 0xc000, scoped, tag = 'scratch operand']
  %s0 = inlined_call_operand.vmem [shape: bf16[192,64], index: 0, kind: input, shape index: {}]
  %s1 = inlined_call_operand.vmem [shape: bf16[64,128], index: 1, kind: input, shape index: {}]
  %s2 = inlined_call_operand.vmem [shape: f32[1,128], index: 2, kind: input, shape index: {}]
  %s3 = inlined_call_operand.vmem [shape: f32[192,128], index: 3, kind: output, shape index: {}]
  %s4 = sld [smem:[#allocation0]]
  $region53: #{generator_forward.15} parent=0
    _
  %s6 = ssub.s32 1, %s4
  %s7 = scalar_select 0, %s6, %s4
  loop: start=0, step=1, limit=4
  $region2: #{generator_forward.15} parent=0 // loop_pre_header
    _
  $region3: #{generator_forward.15} parent=0 // loop_header
    %s9 = sphi 0, %s13
    %p10 = scmp.ge.s32.totalorder %s9, 4
    %s16 = sphi 0, %s28
    %s17 = sphi 0, %s24
    %s18 = sphi 0, %s16
    %s19 = sphi 0, %s17
    %s20 = sphi 0, %s18
    %s21 = sphi 0, %s19
    %s33 = sphi 0, %s35
    %s36 = sphi 0, %s33
    %s37 = sphi 0, %s36
    %s53 = sphi 0, %s37
    %s59 = sphi 0, %s61
    %s62 = sphi 0, %s59
    %s63 = sphi 0, %s62
    %s79 = sphi 0, %s63
    %s83 = sphi 0, %s83
    %s85 = sphi 0, %s83
    %s86 = sphi 0, %s85
    %s100 = sphi 0, %s86
    %s106 = sphi 0, %s108
    %s109 = sphi 0, %s106
    %s110 = sphi 0, %s109
    %s126 = sphi 0, %s110
  $region4: #{generator_forward.15} parent=0 // loop_header_branch
    %12 = sbr.rel (%p10) target = $region8
  $region5: #{generator_forward.15} parent=0 // loop_body
    %s14 = ssub.s32 %s9, 1
    %s15 = ssub.s32 %s9, 2
    %s22 = sadd.s32 1, %s17
    %p23 = scmp.ge.s32.totalorder %s22, 1
    %s24 = scalar_select %p23, 0, %s22
    %s25 = sadd.s32 1, %s16
    %s26 = scalar_select %p23, %s25, %s16
    %p27 = scmp.ge.s32.totalorder %s26, 2
    %s28 = scalar_select %p27, 0, %s26
    %s29 = ssub.s32 %s16, %s28
    %s30 = ssub.s32 %s17, %s24
    %s31 = sor.u32 %s29, %s30
    %p32 = scmp.eq.s32.totalorder %s31, 0
    %s34 = sadd.s32 %s33, 1
    %s35 = scalar_select %p32, %s33, %s34
    %p38 = pneg %p32
    %p39 = scmp.eq.s32.totalorder %s9, 1
    %p40 = por %p38, %p39
    %p41 = scmp.ne.s32.totalorder %s33, %s36
    %p42 = scmp.eq.s32.totalorder %s9, 0
    %p43 = por %p41, %p42
    %p44 = scmp.ne.s32.totalorder %s33, %s36
    %p45 = scmp.eq.s32.totalorder %s14, 1
    %p46 = por %p44, %p45
    %p47 = scmp.ne.s32.totalorder %s36, %s37
    %p48 = scmp.eq.s32.totalorder %s14, 0
    %p49 = por %p47, %p48
    %p50 = scmp.ne.s32.totalorder %s36, %s37
    %p51 = scmp.eq.s32.totalorder %s15, 1
    %p52 = por %p50, %p51
    %p54 = scmp.ne.s32.totalorder %s37, %s53
    %p55 = scmp.eq.s32.totalorder %s15, 0
    %p56 = por %p54, %p55
    %s57 = ssub.s32 %s17, %s24
    %p58 = scmp.eq.s32.totalorder %s57, 0
    %s60 = sadd.s32 %s59, 1
    %s61 = scalar_select %p58, %s59, %s60
    %p64 = pneg %p58
    %p65 = scmp.eq.s32.totalorder %s9, 1
    %p66 = por %p64, %p65
    %p67 = scmp.ne.s32.totalorder %s59, %s62
    %p68 = scmp.eq.s32.totalorder %s9, 0
    %p69 = por %p67, %p68
    %p70 = scmp.ne.s32.totalorder %s59, %s62
    %p71 = scmp.eq.s32.totalorder %s14, 1
    %p72 = por %p70, %p71
    %p73 = scmp.ne.s32.totalorder %s62, %s63
    %p74 = scmp.eq.s32.totalorder %s14, 0
    %p75 = por %p73, %p74
    %p76 = scmp.ne.s32.totalorder %s62, %s63
    %p77 = scmp.eq.s32.totalorder %s15, 1
    %p78 = por %p76, %p77
    %p80 = scmp.ne.s32.totalorder %s63, %s79
    %p81 = scmp.eq.s32.totalorder %s15, 0
    %p82 = por %p80, %p81
    %s84 = sadd.s32 %s83, 1
    %p87 = scmp.eq.s32.totalorder %s9, 1
    %p88 = scmp.ne.s32.totalorder %s83, %s85
    %p89 = scmp.eq.s32.totalorder %s9, 0
    %p90 = por %p88, %p89
    %p91 = scmp.ne.s32.totalorder %s83, %s85
    %p92 = scmp.eq.s32.totalorder %s14, 1
    %p93 = por %p91, %p92
    %p94 = scmp.ne.s32.totalorder %s85, %s86
    %p95 = scmp.eq.s32.totalorder %s14, 0
    %p96 = por %p94, %p95
    %p97 = scmp.ne.s32.totalorder %s85, %s86
    %p98 = scmp.eq.s32.totalorder %s15, 1
    %p99 = por %p97, %p98
    %p101 = scmp.ne.s32.totalorder %s86, %s100
    %p102 = scmp.eq.s32.totalorder %s15, 0
    %p103 = por %p101, %p102
    %s104 = ssub.s32 %s16, %s28
    %p105 = scmp.eq.s32.totalorder %s104, 0
    %s107 = sadd.s32 %s106, 1
    %s108 = scalar_select %p105, %s106, %s107
    %p111 = pneg %p105
    %p112 = scmp.eq.s32.totalorder %s9, 1
    %p113 = por %p111, %p112
    %p114 = scmp.ne.s32.totalorder %s106, %s109
    %p115 = scmp.eq.s32.totalorder %s9, 0
    %p116 = por %p114, %p115
    %p117 = scmp.ne.s32.totalorder %s106, %s109
    %p118 = scmp.eq.s32.totalorder %s14, 1
    %p119 = por %p117, %p118
    %p120 = scmp.ne.s32.totalorder %s109, %s110
    %p121 = scmp.eq.s32.totalorder %s14, 0
    %p122 = por %p120, %p121
    %p123 = scmp.ne.s32.totalorder %s109, %s110
    %p124 = scmp.eq.s32.totalorder %s15, 1
    %p125 = por %p123, %p124
    %p127 = scmp.ne.s32.totalorder %s110, %s126
    %p128 = scmp.eq.s32.totalorder %s15, 0
    %p129 = por %p127, %p128
    %p130 = scmp.le.s32.totalorder 1, %s9
    %p131 = scmp.lt.s32.totalorder %s9, 3
    %p132 = pnand %p130, %p131
    %p133 = pneg %p132
    // Predicated region
    $region9: #{generator_forward.15} parent=5 // pred_check
      _
    $region10: #{generator_forward.15} parent=5 // pred_check_branch
      %135 = sbr.rel (%p132) target = $region12
    $region11: #{generator_forward.15} parent=5 // pred_region
      %s136 = ssub.s32 %s9, 1
      // Predicated region
      $region13: #{generator_forward.15} parent=11 // pred_check
        %p137 = pneg %p75
      $region14: #{generator_forward.15} parent=11 // pred_check_branch
        %139 = sbr.rel (%p137) target = $region16
      $region15: #{generator_forward.15} parent=11 // pred_region
        %s140 = smul.u32 8, %s19
        %p141 = scmp.lt.s32.totalorder %s140, 7
        %s142 = scalar_select %p141, %s140, 7
        %s143 = smul.addr %s142, 4
        %s144 = scalar_lea.vmem %s1, %s143
        %s145 = smul.u32 8, %s19
      $region16: #{generator_forward.15} parent=11 // pred_fallthru
        _
      // Predicated region
      $region17: #{generator_forward.15} parent=11 // pred_check
        %p146 = pneg %p96
      $region18: #{generator_forward.15} parent=11 // pred_check_branch
        %148 = sbr.rel (%p146) target = $region20
      $region19: #{generator_forward.15} parent=11 // pred_region
        _
      $region20: #{generator_forward.15} parent=11 // pred_fallthru
        _
    $region12: #{generator_forward.15} parent=5 // pred_fallthru
      _
    %p149 = scmp.lt.s32.totalorder %s9, 2
    // Predicated region
    $region21: #{generator_forward.15} parent=5 // pred_check
      %p150 = pneg %p149
    $region22: #{generator_forward.15} parent=5 // pred_check_branch
      %152 = sbr.rel (%p150) target = $region24
    $region23: #{generator_forward.15} parent=5 // pred_region
      // Predicated region
      $region25: #{generator_forward.15} parent=23 // pred_check
        %p153 = pneg %p43
      $region26: #{generator_forward.15} parent=23 // pred_check_branch
        %155 = sbr.rel (%p153) target = $region28
      $region27: #{generator_forward.15} parent=23 // pred_region
        %s156 = smul.u32 12, %s16
        %p157 = scmp.lt.s32.totalorder %s156, 23
        %s158 = scalar_select %p157, %s156, 23
        %p159 = scmp.lt.s32.totalorder %s17, 0
        %s160 = scalar_select %p159, %s17, 0
        %s161 = sadd.s32 %s160, %s158
        %s162 = smul.addr %s161, 4
        %s163 = scalar_lea.vmem %s0, %s162
        %s164 = smul.u32 12, %s16
      $region28: #{generator_forward.15} parent=23 // pred_fallthru
        _
    $region24: #{generator_forward.15} parent=5 // pred_fallthru
      _
    %p165 = scmp.le.s32.totalorder 1, %s9
    %p166 = scmp.lt.s32.totalorder %s9, 3
    %p167 = pnand %p165, %p166
    %p168 = pneg %p167
    // Predicated region
    $region29: #{generator_forward.15} parent=5 // pred_check
      _
    $region30: #{generator_forward.15} parent=5 // pred_check_branch
      %170 = sbr.rel (%p167) target = $region32
    $region31: #{generator_forward.15} parent=5 // pred_region
      %s171 = ssub.s32 %s9, 1
      %s172 = smul.u32 12, %s18
      %p173 = scmp.lt.s32.totalorder %s172, 23
      %s174 = scalar_select %p173, %s172, 23
      %p175 = scmp.lt.s32.totalorder %s19, 0
      %s176 = scalar_select %p175, %s19, 0
      %s177 = sadd.s32 %s176, %s174
      %s178 = smul.addr %s177, 4
      %s179 = scalar_lea.vmem %s0, %s178
      %p180 = pneg %p49
      %p181 = pneg %p46
      %s182 = smul.u32 8, %s19
      %p183 = scmp.lt.s32.totalorder %s182, 7
      %s184 = scalar_select %p183, %s182, 7
      %s185 = smul.addr %s184, 4
      %s186 = scalar_lea.vmem %s1, %s185
      %p187 = pneg %p75
      %p188 = pneg %p72
      %p189 = pneg %p96
      %p190 = pneg %p93
      %p191 = pneg %p122
      %p192 = pneg %p119
      %s193 = smul.u32 12, %s18
      %p194 = scmp.lt.s32.totalorder %s193, 23
      %s195 = scalar_select %p194, %s193, 23
      %s196 = smul.addr %s195, 8
      %s197 = scalar_lea.vmem %s3, %s196
      %s198 = smul.u32 12, %s18
      %p199 = scmp.lt.s32.totalorder %s198, 23
      %s200 = scalar_select %p199, %s198, 23
      %p201 = scmp.lt.s32.totalorder %s19, 0
      %s202 = scalar_select %p201, %s19, 0
      %s203 = sadd.s32 %s202, %s200
      %s204 = smul.addr %s203, 4
      %s205 = scalar_lea.vmem %s0, %s204
      %s206 = smul.u32 12, %s18
      %s207 = smul.u32 8, %s19
      %p208 = scmp.lt.s32.totalorder %s207, 7
      %s209 = scalar_select %p208, %s207, 7
      %s210 = smul.addr %s209, 4
      %s211 = scalar_lea.vmem %s1, %s210
      %s212 = smul.u32 8, %s19
      %s213 = smul.u32 12, %s18
      %p214 = scmp.lt.s32.totalorder %s213, 23
      %s215 = scalar_select %p214, %s213, 23
      %s216 = smul.addr %s215, 8
      %s217 = scalar_lea.vmem %s3, %s216
      %s218 = smul.u32 12, %s18
      %p220 = scmp.eq.s32.totalorder %s19, 0
      // Predicated region
      $region33: #{generator_forward.15} parent=31 // pred_check
        %p221 = pneg %p220
      $region34: #{generator_forward.15} parent=31 // pred_check_branch
        %223 = sbr.rel (%p221) target = $region36
      $region35: #{generator_forward.15} parent=31 // pred_region
        %224 = vst [vmem:[#allocation2] sm:$0xff] 0.0
        %225 = vst [vmem:[#allocation2 + $0x8] sm:$0xff] 0.0
        %226 = vst [vmem:[#allocation2 + $0x10] sm:$0xff] 0.0
        %227 = vst [vmem:[#allocation2 + $0x18] sm:$0xff] 0.0
        %228 = vst [vmem:[#allocation2 + $0x20] sm:$0xff] 0.0
        %229 = vst [vmem:[#allocation2 + $0x28] sm:$0xff] 0.0
        %230 = vst [vmem:[#allocation2 + $0x30] sm:$0xff] 0.0
        %231 = vst [vmem:[#allocation2 + $0x38] sm:$0xff] 0.0
        %232 = vst [vmem:[#allocation2 + $0x40] sm:$0xff] 0.0
        %233 = vst [vmem:[#allocation2 + $0x48] sm:$0xff] 0.0
        %234 = vst [vmem:[#allocation2 + $0x50] sm:$0xff] 0.0
        %235 = vst [vmem:[#allocation2 + $0x58] sm:$0xff] 0.0
      $region36: #{generator_forward.15} parent=31 // pred_fallthru
        _
      %v236 = vld [vmem:[#allocation2] sm:$0xff]
      %v237 = vld [vmem:[#allocation2 + $0x8] sm:$0xff]
      %v238 = vld [vmem:[#allocation2 + $0x10] sm:$0xff]
      %v239 = vld [vmem:[#allocation2 + $0x18] sm:$0xff]
      %v240 = vld [vmem:[#allocation2 + $0x20] sm:$0xff]
      %v241 = vld [vmem:[#allocation2 + $0x28] sm:$0xff]
      %v242 = vld [vmem:[#allocation2 + $0x30] sm:$0xff]
      %v243 = vld [vmem:[#allocation2 + $0x38] sm:$0xff]
      %v244 = vld [vmem:[#allocation2 + $0x40] sm:$0xff]
      %v245 = vld [vmem:[#allocation2 + $0x48] sm:$0xff]
      %v246 = vld [vmem:[#allocation2 + $0x50] sm:$0xff]
      %v247 = vld [vmem:[#allocation2 + $0x58] sm:$0xff]
      %v248 = vld [vmem:[%s205] sm:$0xf]
      %v249 = vld [vmem:[%s205 + $0x4] sm:$0xf]
      %v250 = vld [vmem:[%s205 + $0x8] sm:$0xf]
      %v251 = vld [vmem:[%s205 + $0xc] sm:$0xf]
      %v252 = vld [vmem:[%s205 + $0x10] sm:$0xf]
      %v253 = vld [vmem:[%s205 + $0x14] sm:$0xf]
      %v254 = vld [vmem:[%s205 + $0x18] sm:$0xf]
      %v255 = vld [vmem:[%s205 + $0x1c] sm:$0xf]
      %v256 = vld [vmem:[%s205 + $0x20] sm:$0xf]
      %v257 = vld [vmem:[%s205 + $0x24] sm:$0xf]
      %v258 = vld [vmem:[%s205 + $0x28] sm:$0xf]
      %v259 = vld [vmem:[%s205 + $0x2c] sm:$0xf]
      %v260 = vld [vmem:[%s211] sm:$0xf]
      %v261 = vld [vmem:[%s211 + $0x4] sm:$0xf]
      %v262 = vld [vmem:[%s211 + $0x8] sm:$0xf]
      %v263 = vld [vmem:[%s211 + $0xc] sm:$0xf]
      %v264 = vld [vmem:[%s211 + $0x10] sm:$0xf]
      %v265 = vld [vmem:[%s211 + $0x14] sm:$0xf]
      %v266 = vld [vmem:[%s211 + $0x18] sm:$0xf]
      %v267 = vld [vmem:[%s211 + $0x1c] sm:$0xf]
      %v280 = vunpack.c.l.b16 %v248
      %v281 = vunpack.c.l.b16 %v249
      %v282 = vunpack.c.l.b16 %v250
      %v283 = vunpack.c.l.b16 %v251
      %v284 = vunpack.c.l.b16 %v252
      %v285 = vunpack.c.l.b16 %v253
      %v286 = vunpack.c.l.b16 %v254
      %v287 = vunpack.c.l.b16 %v255
      %v288 = vunpack.c.l.b16 %v256
      %v289 = vunpack.c.l.b16 %v257
      %v290 = vunpack.c.l.b16 %v258
      %v291 = vunpack.c.l.b16 %v259
      %v292 = vpack.c.b16 %v281, %v280
      %v293 = vpack.c.b16 %v283, %v282
      %v294 = vpack.c.b16 %v285, %v284
      %v295 = vpack.c.b16 %v287, %v286
      %v296 = vpack.c.b16 %v289, %v288
      %v297 = vpack.c.b16 %v291, %v290
      %v306 = vunpack.c.l.b16 %v260
      %v307 = vunpack.c.l.b16 %v261
      %v308 = vunpack.c.l.b16 %v262
      %v309 = vunpack.c.l.b16 %v263
      %v310 = vunpack.c.l.b16 %v264
      %v311 = vunpack.c.l.b16 %v265
      %v312 = vunpack.c.l.b16 %v266
      %v313 = vunpack.c.l.b16 %v267
      %v314 = vpack.c.b16 %v307, %v306
      %v315 = vpack.c.b16 %v309, %v308
      %v316 = vpack.c.b16 %v311, %v310
      %v317 = vpack.c.b16 %v313, %v312
      %vm322 = vcmask 523264
      %v324 = vsel %vm322, %v292, 0
      %v327 = vsel %vm322, %v293, 0
      %v330 = vsel %vm322, %v294, 0
      %v333 = vsel %vm322, %v295, 0
      %v336 = vsel %vm322, %v296, 0
      %v339 = vsel %vm322, %v297, 0
      %341 = vmatprep.subr.bf16.mxu0 0
      %342 = vmatpush1.bf16.msra.mxu0 %v314
      %343 = vmatprep.subr.bf16.mxu0 0
      %344 = vmatpush1.bf16.msra.mxu0 %v315
      %345 = vmatprep.subr.bf16.mxu0 0
      %346 = vmatpush1.bf16.msra.mxu0 %v316
      %347 = vmatprep.subr.bf16.mxu0 0
      %348 = vmatpush1.bf16.msra.mxu0 %v317
      %349 = vmatprep.subr.bf16.mxu0 0
      %350 = vmatpush1.bf16.msra.mxu0 0
      %351 = vmatprep.subr.bf16.mxu0 0
      %352 = vmatpush1.bf16.msra.mxu0 0
      %353 = vmatprep.subr.bf16.mxu0 0
      %354 = vmatpush1.bf16.msra.mxu0 0
      %355 = vmatprep.subr.bf16.mxu0 0
      %356 = vmatpush1.bf16.msra.mxu0 0
      %357 = vmatprep.subr.bf16.mxu0 0
      %358 = vmatpush1.bf16.msra.mxu0 0
      %359 = vmatprep.subr.bf16.mxu0 0
      %360 = vmatpush1.bf16.msra.mxu0 0
      %361 = vmatprep.subr.bf16.mxu0 0
      %362 = vmatpush1.bf16.msra.mxu0 0
      %363 = vmatprep.subr.bf16.mxu0 0
      %364 = vmatpush1.bf16.msra.mxu0 0
      %365 = vmatprep.subr.bf16.mxu0 0
      %366 = vmatpush1.bf16.msra.mxu0 0
      %367 = vmatprep.subr.bf16.mxu0 0
      %368 = vmatpush1.bf16.msra.mxu0 0
      %369 = vmatprep.subr.bf16.mxu0 0
      %370 = vmatpush1.bf16.msra.mxu0 0
      %371 = vmatprep.subr.bf16.mxu0 0
      %372 = vmatpush1.bf16.msra.mxu0 0
      %373 = vmatprep.mubr.bf16.mxu0 0
      %374 = vmatmul.mubr.bf16.gmra.mrb[0].mxu0 %v324
      %v375 = vpop.f32.mrb[0].mxu0
      %v376 = vadd.f32 0.0, %v375
      %v377 = vpop.f32.mrb[0].mxu0
      %v378 = vpop.f32.mrb[0].mxu0
      %v379 = vadd.f32 0.0, %v378
      %v380 = vpop.f32.mrb[0].mxu0
      %381 = vmatprep.mubr.bf16.mxu0 0
      %382 = vmatmul.mubr.bf16.gmra.mrb[0].mxu0 %v327
      %v383 = vpop.f32.mrb[0].mxu0
      %v384 = vadd.f32 0.0, %v383
      %v385 = vpop.f32.mrb[0].mxu0
      %v386 = vpop.f32.mrb[0].mxu0
      %v387 = vadd.f32 0.0, %v386
      %v388 = vpop.f32.mrb[0].mxu0
      %389 = vmatprep.mubr.bf16.mxu0 0
      %390 = vmatmul.mubr.bf16.gmra.mrb[0].mxu0 %v330
      %v391 = vpop.f32.mrb[0].mxu0
      %v392 = vadd.f32 0.0, %v391
      %v393 = vpop.f32.mrb[0].mxu0
      %v394 = vpop.f32.mrb[0].mxu0
      %v395 = vadd.f32 0.0, %v394
      %v396 = vpop.f32.mrb[0].mxu0
      %397 = vmatprep.mubr.bf16.mxu0 0
      %398 = vmatmul.mubr.bf16.gmra.mrb[0].mxu0 %v333
      %v399 = vpop.f32.mrb[0].mxu0
      %v400 = vadd.f32 0.0, %v399
      %v401 = vpop.f32.mrb[0].mxu0
      %v402 = vpop.f32.mrb[0].mxu0
      %v403 = vadd.f32 0.0, %v402
      %v404 = vpop.f32.mrb[0].mxu0
      %405 = vmatprep.mubr.bf16.mxu0 0
      %406 = vmatmul.mubr.bf16.gmra.mrb[0].mxu0 %v336
      %v407 = vpop.f32.mrb[0].mxu0
      %v408 = vadd.f32 0.0, %v407
      %v409 = vpop.f32.mrb[0].mxu0
      %v410 = vpop.f32.mrb[0].mxu0
      %v411 = vadd.f32 0.0, %v410
      %v412 = vpop.f32.mrb[0].mxu0
      %413 = vmatprep.mubr.bf16.mxu0 0
      %414 = vmatmul.mubr.bf16.gmra.mrb[0].mxu0 %v339
      %v415 = vpop.f32.mrb[0].mxu0
      %v416 = vadd.f32 0.0, %v415
      %v417 = vpop.f32.mrb[0].mxu0
      %v418 = vpop.f32.mrb[0].mxu0
      %v419 = vadd.f32 0.0, %v418
      %v420 = vpop.f32.mrb[0].mxu0
      %421 = vdwg.mxu0
      %v422 = vadd.f32 %v236, %v376
      %v423 = vadd.f32 %v237, %v379
      %v424 = vadd.f32 %v238, %v384
      %v425 = vadd.f32 %v239, %v387
      %v426 = vadd.f32 %v240, %v392
      %v427 = vadd.f32 %v241, %v395
      %v428 = vadd.f32 %v242, %v400
      %v429 = vadd.f32 %v243, %v403
      %v430 = vadd.f32 %v244, %v408
      %v431 = vadd.f32 %v245, %v411
      %v432 = vadd.f32 %v246, %v416
      %v433 = vadd.f32 %v247, %v419
      %434 = vst [vmem:[#allocation2] sm:$0xff] %v422
      %435 = vst [vmem:[#allocation2 + $0x8] sm:$0xff] %v423
      %436 = vst [vmem:[#allocation2 + $0x10] sm:$0xff] %v424
      %437 = vst [vmem:[#allocation2 + $0x18] sm:$0xff] %v425
      %438 = vst [vmem:[#allocation2 + $0x20] sm:$0xff] %v426
      %439 = vst [vmem:[#allocation2 + $0x28] sm:$0xff] %v427
      %440 = vst [vmem:[#allocation2 + $0x30] sm:$0xff] %v428
      %441 = vst [vmem:[#allocation2 + $0x38] sm:$0xff] %v429
      %442 = vst [vmem:[#allocation2 + $0x40] sm:$0xff] %v430
      %443 = vst [vmem:[#allocation2 + $0x48] sm:$0xff] %v431
      %444 = vst [vmem:[#allocation2 + $0x50] sm:$0xff] %v432
      %445 = vst [vmem:[#allocation2 + $0x58] sm:$0xff] %v433
      // Predicated region
      $region37: #{generator_forward.15} parent=31 // pred_check
        %p446 = pneg %p220
      $region38: #{generator_forward.15} parent=31 // pred_check_branch
        %448 = sbr.rel (%p446) target = $region40
      $region39: #{generator_forward.15} parent=31 // pred_region
        %v449 = vld [vmem:[#allocation2] sm:$0xff]
        %v450 = vld [vmem:[#allocation2 + $0x8] sm:$0xff]
        %v451 = vld [vmem:[#allocation2 + $0x10] sm:$0xff]
        %v452 = vld [vmem:[#allocation2 + $0x18] sm:$0xff]
        %v453 = vld [vmem:[#allocation2 + $0x20] sm:$0xff]
        %v454 = vld [vmem:[#allocation2 + $0x28] sm:$0xff]
        %v455 = vld [vmem:[#allocation2 + $0x30] sm:$0xff]
        %v456 = vld [vmem:[#allocation2 + $0x38] sm:$0xff]
        %v457 = vld [vmem:[#allocation2 + $0x40] sm:$0xff]
        %v458 = vld [vmem:[#allocation2 + $0x48] sm:$0xff]
        %v459 = vld [vmem:[#allocation2 + $0x50] sm:$0xff]
        %v460 = vld [vmem:[#allocation2 + $0x58] sm:$0xff]
        %v461 = vld [vmem:[%s2] sm:$0x1]
        %v463 = vlaneseq
        %v464 = vshrl.u32 %v463, 7
        %v465 = vsub.s32 0, %v464
        %v466 = vrot.slane %v461, %v465
        %v468 = vadd.f32 %v449, %v466
        %v469 = vadd.f32 %v450, %v466
        %v470 = vadd.f32 %v451, %v466
        %v471 = vadd.f32 %v452, %v466
        %v472 = vadd.f32 %v453, %v466
        %v473 = vadd.f32 %v454, %v466
        %v474 = vadd.f32 %v455, %v466
        %v475 = vadd.f32 %v456, %v466
        %v476 = vadd.f32 %v457, %v466
        %v477 = vadd.f32 %v458, %v466
        %v478 = vadd.f32 %v459, %v466
        %v479 = vadd.f32 %v460, %v466
        %v480 = vtanh.pop %v468
        %v481 = vtanh.pop %v469
        %v482 = vtanh.pop %v470
        %v483 = vtanh.pop %v471
        %v484 = vtanh.pop %v472
        %v485 = vtanh.pop %v473
        %v486 = vtanh.pop %v474
        %v487 = vtanh.pop %v475
        %v488 = vtanh.pop %v476
        %v489 = vtanh.pop %v477
        %v490 = vtanh.pop %v478
        %v491 = vtanh.pop %v479
        %492 = vst [vmem:[%s217] sm:$0xff] %v480
        %493 = vst [vmem:[%s217 + $0x8] sm:$0xff] %v481
        %494 = vst [vmem:[%s217 + $0x10] sm:$0xff] %v482
        %495 = vst [vmem:[%s217 + $0x18] sm:$0xff] %v483
        %496 = vst [vmem:[%s217 + $0x20] sm:$0xff] %v484
        %497 = vst [vmem:[%s217 + $0x28] sm:$0xff] %v485
        %498 = vst [vmem:[%s217 + $0x30] sm:$0xff] %v486
        %499 = vst [vmem:[%s217 + $0x38] sm:$0xff] %v487
        %500 = vst [vmem:[%s217 + $0x40] sm:$0xff] %v488
        %501 = vst [vmem:[%s217 + $0x48] sm:$0xff] %v489
        %502 = vst [vmem:[%s217 + $0x50] sm:$0xff] %v490
        %503 = vst [vmem:[%s217 + $0x58] sm:$0xff] %v491
      $region40: #{generator_forward.15} parent=31 // pred_fallthru
        _
      %s504 = smul.u32 12, %s18
      %p505 = scmp.lt.s32.totalorder %s504, 23
      %s506 = scalar_select %p505, %s504, 23
      %s507 = smul.addr %s506, 8
      %s508 = scalar_lea.vmem %s3, %s507
      // Predicated region
      $region41: #{generator_forward.15} parent=31 // pred_check
        %p509 = pneg %p119
      $region42: #{generator_forward.15} parent=31 // pred_check_branch
        %511 = sbr.rel (%p509) target = $region44
      $region43: #{generator_forward.15} parent=31 // pred_region
        %s512 = smul.u32 12, %s18
      $region44: #{generator_forward.15} parent=31 // pred_fallthru
        _
    $region32: #{generator_forward.15} parent=5 // pred_fallthru
      _
    %p513 = scmp.le.s32.totalorder 2, %s9
    // Predicated region
    $region45: #{generator_forward.15} parent=5 // pred_check
      %p514 = pneg %p513
    $region46: #{generator_forward.15} parent=5 // pred_check_branch
      %516 = sbr.rel (%p514) target = $region48
    $region47: #{generator_forward.15} parent=5 // pred_region
      %s517 = ssub.s32 %s9, 2
      // Predicated region
      $region49: #{generator_forward.15} parent=47 // pred_check
        %p518 = pneg %p125
      $region50: #{generator_forward.15} parent=47 // pred_check_branch
        %520 = sbr.rel (%p518) target = $region52
      $region51: #{generator_forward.15} parent=47 // pred_region
        %s521 = smul.u32 12, %s20
        %p522 = scmp.lt.s32.totalorder %s521, 23
        %s523 = scalar_select %p522, %s521, 23
        %s524 = smul.addr %s523, 8
        %s525 = scalar_lea.vmem %s3, %s524
      $region52: #{generator_forward.15} parent=47 // pred_fallthru
        _
    $region48: #{generator_forward.15} parent=5 // pred_fallthru
      _
  $region6: #{generator_forward.15} parent=0 // loop_footer
    %s13 = sadd.s32 1, %s9
  $region7: #{generator_forward.15} parent=0 // loop_footer_branch
    %8 = sbr.rel target = $region3
  $region8: #{generator_forward.15} parent=0 // loop_exit
    _

</llo_original>
